<compile_context>
chip_gen: v7x
topology: tpu7x:2x2x1
jax: 0.10.0
libtpu: 0.0.40
codegen_flags: <defaults>
</compile_context>

<pallas_src>
import numpy as np
import jax
import jax.numpy as jnp
from jax import lax
from jax.experimental import pallas as pl
from jax.experimental.pallas import tpu as pltpu

# ---- small synthetic config (consistent with the module's __init__) -------------
HIDDEN      = 32     # MODEL.ROI_RELATION_HEAD.CONTEXT_HIDDEN_DIM
POOLING     = 64     # MODEL.ROI_RELATION_HEAD.CONTEXT_POOLING_DIM == MLP_HEAD_DIM
NUM_REL_CLS = 16     # MODEL.ROI_RELATION_HEAD.NUM_CLASSES
NUM_OBJ_CLS = 10     # MODEL.ROI_BOX_HEAD.NUM_CLASSES
USE_VISION  = True   # MODEL.ROI_RELATION_HEAD.USE_UNION_FEATURES
USE_BIAS    = True   # GLOBAL_SETTING.USE_BIAS
# union_single_not_match = False  (POOLING == MLP_HEAD_DIM, so no up_dim layer)

REL_TILE = 256       # relation rows per grid step
LANE     = 128       # TPU lane width; output / gather contractions padded to this


def _round_up(x, m):
    return ((x + m - 1) // m) * m


# ================================ fused Pallas kernel =============================

def fused_rel_kernel(gidx0_ref, gidx1_ref, fidx_ref, union_ref, ctx_ref,
                     wpeh_ref, wpet_ref, bpeh_ref, bpet_ref,
                     wcath_ref, wcatt_ref, bcat_ref,
                     wrel_ref, brel_ref, freq_ref, o_ref):
    t = gidx0_ref.shape[0]
    n_obj_pad = ctx_ref.shape[0]
    n_pair_pad = freq_ref.shape[0]

    # ---- exact in-VMEM gather of head/tail object context rows (one-hot matmul) --
    obj_iota = lax.broadcasted_iota(jnp.int32, (t, n_obj_pad), 1)
    oh_head = (obj_iota == gidx0_ref[...]).astype(jnp.float32)   # (T, n_obj_pad)
    oh_tail = (obj_iota == gidx1_ref[...]).astype(jnp.float32)
    ctx = ctx_ref[...]                                           # resident in VMEM
    head_ctx = jnp.dot(oh_head, ctx, preferred_element_type=jnp.float32)  # (T, H)
    tail_ctx = jnp.dot(oh_tail, ctx, preferred_element_type=jnp.float32)

    # ---- post_emb, split into the head / tail halves of the (H, 2H) weight -------
    head_rep = (jnp.dot(head_ctx, wpeh_ref[...], preferred_element_type=jnp.float32)
                + bpeh_ref[...])
    tail_rep = (jnp.dot(tail_ctx, wpet_ref[...], preferred_element_type=jnp.float32)
                + bpet_ref[...])

    # ---- post_cat: cat(head, tail) @ W  ==  head @ W_top + tail @ W_bot ----------
    prod = (jnp.dot(head_rep, wcath_ref[...], preferred_element_type=jnp.float32)
            + jnp.dot(tail_rep, wcatt_ref[...], preferred_element_type=jnp.float32)
            + bcat_ref[...])

    if USE_VISION:
        prod = prod * union_ref[...]            # union gating (f32 VPU, v5e-safe)

    # ---- rel_compress into the lane-dense (128-wide padded) output ---------------
    rel = jnp.dot(prod, wrel_ref[...], preferred_element_type=jnp.float32) + brel_ref[...]

    if USE_BIAS:
        # frequency-bias rows gathered from the VMEM-resident padded table
        pair_iota = lax.broadcasted_iota(jnp.int32, (t, n_pair_pad), 1)
        oh_pair = (pair_iota == fidx_ref[...]).astype(jnp.float32)
        rel = rel + jnp.dot(oh_pair, freq_ref[...], preferred_element_type=jnp.float32)

    o_ref[...] = rel


def fused_rel_dists(params, edge_ctx, gidx0, gidx1, fidx, union_features):
    """Full relation-logit hot path in a single pallas_call.  Returns (NR, R)."""
    n_obj, h = edge_ctx.shape
    p = params["w_post_cat"].shape[1]
    r = params["w_rel"].shape[1]
    nr = union_features.shape[0]

    r_pad = _round_up(r, LANE)                       # lane-dense output columns
    n_obj_pad = _round_up(max(n_obj, 8), LANE)       # lane-aligned one-hot gather
    n_pair = params["freq_table"].shape[0]
    n_pair_pad = _round_up(n_pair, LANE)
    n_tiles = pl.cdiv(nr, REL_TILE)
    nr_pad = n_tiles * REL_TILE                      # remainder handled by padding

    def pad_rows(x, rows):
        return jnp.pad(x, ((0, rows - x.shape[0]),) + ((0, 0),) * (x.ndim - 1))

    gidx0_p = pad_rows(gidx0.astype(jnp.int32)[:, None], nr_pad)
    gidx1_p = pad_rows(gidx1.astype(jnp.int32)[:, None], nr_pad)
    fidx_p  = pad_rows(fidx.astype(jnp.int32)[:, None], nr_pad)
    union_p = pad_rows(union_features, nr_pad)
    ctx_p   = pad_rows(edge_ctx, n_obj_pad)

    # one-time static weight splits / zero-pads (mathematically identical)
    w_pe, b_pe = params["w_post_emb"], params["b_post_emb"]
    w_cat, b_cat = params["w_post_cat"], params["b_post_cat"]
    w_pe_h, w_pe_t = w_pe[:, :h], w_pe[:, h:]
    b_pe_h, b_pe_t = b_pe[:, :h], b_pe[:, h:]
    w_cat_h, w_cat_t = w_cat[:h, :], w_cat[h:, :]
    w_rel_p = jnp.pad(params["w_rel"], ((0, 0), (0, r_pad - r)))
    b_rel_p = jnp.pad(params["b_rel"], ((0, 0), (0, r_pad - r)))
    freq_p = jnp.pad(params["freq_table"],
                     ((0, n_pair_pad - n_pair), (0, r_pad - r)))

    rowblk = lambda i: (i, 0)
    const = lambda i: (0, 0)

    rel_pad_out = pl.pallas_call(
        fused_rel_kernel,
        out_shape=jax.ShapeDtypeStruct((nr_pad, r_pad), jnp.float32),
        grid_spec=pltpu.PrefetchScalarGridSpec(
            num_scalar_prefetch=0,
            grid=(n_tiles,),
            in_specs=[
                pl.BlockSpec((REL_TILE, 1), rowblk),        # gidx0
                pl.BlockSpec((REL_TILE, 1), rowblk),        # gidx1
                pl.BlockSpec((REL_TILE, 1), rowblk),        # freq idx
                pl.BlockSpec((REL_TILE, p), rowblk),        # union features tile
                pl.BlockSpec((n_obj_pad, h), const),        # edge_ctx (resident)
                pl.BlockSpec((h, h), const),                # w_post_emb head half
                pl.BlockSpec((h, h), const),                # w_post_emb tail half
                pl.BlockSpec((1, h), const),                # b_post_emb head half
                pl.BlockSpec((1, h), const),                # b_post_emb tail half
                pl.BlockSpec((h, p), const),                # w_post_cat top half
                pl.BlockSpec((h, p), const),                # w_post_cat bottom half
                pl.BlockSpec((1, p), const),                # b_post_cat
                pl.BlockSpec((p, r_pad), const),            # w_rel (lane padded)
                pl.BlockSpec((1, r_pad), const),            # b_rel (lane padded)
                pl.BlockSpec((n_pair_pad, r_pad), const),   # freq table (resident)
            ],
            out_specs=pl.BlockSpec((REL_TILE, r_pad), rowblk),
        ),
        compiler_params=pltpu.CompilerParams(
            dimension_semantics=("parallel",),              # megacore split on v7x
        ),
    )(gidx0_p, gidx1_p, fidx_p, union_p, ctx_p,
      w_pe_h, w_pe_t, b_pe_h, b_pe_t, w_cat_h, w_cat_t, b_cat,
      w_rel_p, b_rel_p, freq_p)

    return rel_pad_out[:nr, :r]


# ============================ parameter construction ==============================

def init_params(key):
    k = jax.random.split(key, 4)
    # post_emb: layer_init(normal, std = 10 * sqrt(1/hidden_dim))
    std_pe = 10.0 * (1.0 / HIDDEN) ** 0.5
    w_post_emb = std_pe * jax.random.normal(k[0], (HIDDEN, 2 * HIDDEN), jnp.float32)
    b_post_emb = jnp.zeros((1, 2 * HIDDEN), jnp.float32)
    # post_cat: xavier
    std_pc = (2.0 / (2 * HIDDEN + POOLING)) ** 0.5
    w_post_cat = std_pc * jax.random.normal(k[1], (2 * HIDDEN, POOLING), jnp.float32)
    b_post_cat = jnp.zeros((1, POOLING), jnp.float32)
    # rel_compress: xavier
    std_rc = (2.0 / (POOLING + NUM_REL_CLS)) ** 0.5
    w_rel = std_rc * jax.random.normal(k[2], (POOLING, NUM_REL_CLS), jnp.float32)
    b_rel = jnp.zeros((1, NUM_REL_CLS), jnp.float32)
    # FrequencyBias: embedding table (num_obj_cls^2, num_rel_cls)
    freq_table = 0.1 * jax.random.normal(
        k[3], (NUM_OBJ_CLS * NUM_OBJ_CLS, NUM_REL_CLS), jnp.float32)
    return dict(w_post_emb=w_post_emb, b_post_emb=b_post_emb,
                w_post_cat=w_post_cat, b_post_cat=b_post_cat,
                w_rel=w_rel, b_rel=b_rel, freq_table=freq_table)


# ================================= forward (glue) =================================

def motifs_like_forward(params, obj_dists, obj_preds, edge_ctx,
                        rel_pair_idxs, union_features, num_objs, num_rels):
    """Eval-mode forward of MotifsLikePredictor given context_layer outputs."""
    # per-image pair indices -> global indices (cheap 1-D glue, ordering preserved)
    offsets = np.concatenate([[0], np.cumsum(num_objs)[:-1]]).astype(np.int32)
    gidx0 = jnp.concatenate(
        [idx[:, 0] + int(off) for idx, off in zip(rel_pair_idxs, offsets)], axis=0)
    gidx1 = jnp.concatenate(
        [idx[:, 1] + int(off) for idx, off in zip(rel_pair_idxs, offsets)], axis=0)
    # frequency-bias row index = pred_head * num_obj_cls + pred_tail
    fidx = jnp.take(obj_preds, gidx0) * NUM_OBJ_CLS + jnp.take(obj_preds, gidx1)

    # fused hot path: post_emb -> gather -> post_cat -> * union -> rel_compress -> + bias
    rel_dists = fused_rel_dists(params, edge_ctx, gidx0, gidx1, fidx, union_features)

    # eval-mode return: split per image
    obj_splits = np.cumsum(num_objs)[:-1].tolist()
    rel_splits = np.cumsum(num_rels)[:-1].tolist()
    obj_dists_out = jnp.split(obj_dists, obj_splits, axis=0)
    rel_dists_out = jnp.split(rel_dists, rel_splits, axis=0)
    return obj_dists_out, rel_dists_out, {}


def reference_forward(params, obj_preds, edge_ctx, rel_pair_idxs,
                      union_features, num_objs):
    edge_rep = edge_ctx @ params["w_post_emb"] + params["b_post_emb"]
    head_rep = edge_rep[:, :HIDDEN]
    tail_rep = edge_rep[:, HIDDEN:]
    offsets = np.concatenate([[0], np.cumsum(num_objs)[:-1]])
    gidx0 = jnp.concatenate(
        [idx[:, 0] + int(off) for idx, off in zip(rel_pair_idxs, offsets)], axis=0)
    gidx1 = jnp.concatenate(
        [idx[:, 1] + int(off) for idx, off in zip(rel_pair_idxs, offsets)], axis=0)
    prod_rep = jnp.concatenate(
        [jnp.take(head_rep, gidx0, axis=0), jnp.take(tail_rep, gidx1, axis=0)],
        axis=-1)
    prod_rep = prod_rep @ params["w_post_cat"] + params["b_post_cat"]
    if USE_VISION:
        prod_rep = prod_rep * union_features
    rel = prod_rep @ params["w_rel"] + params["b_rel"]
    if USE_BIAS:
        f = jnp.take(obj_preds, gidx0) * NUM_OBJ_CLS + jnp.take(obj_preds, gidx1)
        rel = rel + jnp.take(params["freq_table"], f, axis=0)
    return rel


# ===================================== main ======================================

if __name__ == "__main__":
    key = jax.random.PRNGKey(0)
    kp, k1, k2, k3, k4, k5, k6 = jax.random.split(key, 7)
    params = init_params(kp)

    num_objs = [24, 28]        # objects per image
    num_rels = [300, 220]      # relation pairs per image (520: exercises tail padding)
    n_obj = sum(num_objs)
    n_rel = sum(num_rels)

    # synthetic context_layer outputs
    edge_ctx  = jax.random.normal(k1, (n_obj, HIDDEN), jnp.float32)
    obj_dists = jax.random.normal(k2, (n_obj, NUM_OBJ_CLS), jnp.float32)
    obj_preds = jax.random.randint(k3, (n_obj,), 0, NUM_OBJ_CLS, jnp.int32)

    # per-image relation pair indices (local indices within each image)
    rel_pair_idxs = [
        jax.random.randint(k4, (num_rels[0], 2), 0, num_objs[0], jnp.int32),
        jax.random.randint(k5, (num_rels[1], 2), 0, num_objs[1], jnp.int32),
    ]
    union_features = jax.random.normal(k6, (n_rel, POOLING), jnp.float32)

    obj_out, rel_out, add_losses = motifs_like_forward(
        params, obj_dists, obj_preds, edge_ctx,
        rel_pair_idxs, union_features, num_objs, num_rels)
    rel_out = [jax.block_until_ready(r) for r in rel_out]

    rel_ref = reference_forward(params, obj_preds, edge_ctx, rel_pair_idxs,
                                union_features, num_objs)
    rel_all = jnp.concatenate(rel_out, axis=0)
    np.testing.assert_allclose(np.asarray(rel_all), np.asarray(rel_ref),
                               rtol=2e-2, atol=2e-2)

    assert rel_all.shape == (n_rel, NUM_REL_CLS)
    assert rel_out[0].shape == (num_rels[0], NUM_REL_CLS)
    assert rel_out[1].shape == (num_rels[1], NUM_REL_CLS)
    assert len(obj_out) == 2 and obj_out[0].shape == (num_objs[0], NUM_OBJ_CLS)
    print("KERNEL_OK")
</pallas_src>

<mosaic_0001>
module attributes {stable_mosaic.version = 11 : i64} {
  func.func @fused_rel_kernel(%arg0: i32, %arg1: memref<256x1xi32, #tpu.memory_space<vmem>>, %arg2: memref<256x1xi32, #tpu.memory_space<vmem>>, %arg3: memref<256x1xi32, #tpu.memory_space<vmem>>, %arg4: memref<256x64xf32, #tpu.memory_space<vmem>>, %arg5: memref<128x32xf32, #tpu.memory_space<vmem>>, %arg6: memref<32x32xf32, #tpu.memory_space<vmem>>, %arg7: memref<32x32xf32, #tpu.memory_space<vmem>>, %arg8: memref<1x32xf32, #tpu.memory_space<vmem>>, %arg9: memref<1x32xf32, #tpu.memory_space<vmem>>, %arg10: memref<32x64xf32, #tpu.memory_space<vmem>>, %arg11: memref<32x64xf32, #tpu.memory_space<vmem>>, %arg12: memref<1x64xf32, #tpu.memory_space<vmem>>, %arg13: memref<64x128xf32, #tpu.memory_space<vmem>>, %arg14: memref<1x128xf32, #tpu.memory_space<vmem>>, %arg15: memref<128x128xf32, #tpu.memory_space<vmem>>, %arg16: memref<256x128xf32, #tpu.memory_space<vmem>>) attributes {dimension_semantics = [#tpu.dimension_semantics<parallel>], iteration_bounds = array<i64: 3>, scalar_prefetch = 0 : i64, scratch_operands = 0 : i64, tpu.core_type = #tpu.core_type<tc>, window_params = [{transform_indices = @transform_0, window_bounds = array<i64: 256, 1>}, {transform_indices = @transform_1, window_bounds = array<i64: 256, 1>}, {transform_indices = @transform_2, window_bounds = array<i64: 256, 1>}, {transform_indices = @transform_3, window_bounds = array<i64: 256, 64>}, {pipeline_mode = #tpu.pipeline_mode<synchronous>, transform_indices = @transform_4, window_bounds = array<i64: 128, 32>}, {pipeline_mode = #tpu.pipeline_mode<synchronous>, transform_indices = @transform_5, window_bounds = array<i64: 32, 32>}, {pipeline_mode = #tpu.pipeline_mode<synchronous>, transform_indices = @transform_6, window_bounds = array<i64: 32, 32>}, {pipeline_mode = #tpu.pipeline_mode<synchronous>, transform_indices = @transform_7, window_bounds = array<i64: 1, 32>}, {pipeline_mode = #tpu.pipeline_mode<synchronous>, transform_indices = @transform_8, window_bounds = array<i64: 1, 32>}, {pipeline_mode = #tpu.pipeline_mode<synchronous>, transform_indices = @transform_9, window_bounds = array<i64: 32, 64>}, {pipeline_mode = #tpu.pipeline_mode<synchronous>, transform_indices = @transform_10, window_bounds = array<i64: 32, 64>}, {pipeline_mode = #tpu.pipeline_mode<synchronous>, transform_indices = @transform_11, window_bounds = array<i64: 1, 64>}, {pipeline_mode = #tpu.pipeline_mode<synchronous>, transform_indices = @transform_12, window_bounds = array<i64: 64, 128>}, {pipeline_mode = #tpu.pipeline_mode<synchronous>, transform_indices = @transform_13, window_bounds = array<i64: 1, 128>}, {pipeline_mode = #tpu.pipeline_mode<synchronous>, transform_indices = @transform_14, window_bounds = array<i64: 128, 128>}, {transform_indices = @transform_15, window_bounds = array<i64: 256, 128>}]} {
    %0 = tpu.iota {dimensions = array<i32: 1>} : vector<256x128xi32>
    %c0 = arith.constant 0 : index
    %c0_0 = arith.constant 0 : index
    %1 = vector.load %arg1[%c0, %c0_0] : memref<256x1xi32, #tpu.memory_space<vmem>>, vector<256x1xi32>
    %2 = vector.broadcast %1 : vector<256x1xi32> to vector<256x128xi32>
    %3 = arith.cmpi eq, %0, %2 : vector<256x128xi32>
    %4 = arith.extui %3 : vector<256x128xi1> to vector<256x128xi32>
    %5 = arith.sitofp %4 : vector<256x128xi32> to vector<256x128xf32>
    %c0_1 = arith.constant 0 : index
    %c0_2 = arith.constant 0 : index
    %6 = vector.load %arg2[%c0_1, %c0_2] : memref<256x1xi32, #tpu.memory_space<vmem>>, vector<256x1xi32>
    %7 = vector.broadcast %6 : vector<256x1xi32> to vector<256x128xi32>
    %8 = arith.cmpi eq, %0, %7 : vector<256x128xi32>
    %9 = arith.extui %8 : vector<256x128xi1> to vector<256x128xi32>
    %10 = arith.sitofp %9 : vector<256x128xi32> to vector<256x128xf32>
    %c0_3 = arith.constant 0 : index
    %c0_4 = arith.constant 0 : index
    %11 = vector.load %arg5[%c0_3, %c0_4] : memref<128x32xf32, #tpu.memory_space<vmem>>, vector<128x32xf32>
    %cst = arith.constant dense<0.000000e+00> : vector<256x32xf32>
    %12 = tpu.matmul %5, %11, %cst {dimension_numbers = #tpu.dot_dimension_numbers<[1], [0], [0], [1], [0, 0, 1, 1], [], []>} : vector<256x128xf32>, vector<128x32xf32>, vector<256x32xf32> -> vector<256x32xf32>
    %cst_5 = arith.constant dense<0.000000e+00> : vector<256x32xf32>
    %13 = tpu.matmul %10, %11, %cst_5 {dimension_numbers = #tpu.dot_dimension_numbers<[1], [0], [0], [1], [0, 0, 1, 1], [], []>} : vector<256x128xf32>, vector<128x32xf32>, vector<256x32xf32> -> vector<256x32xf32>
    %c0_6 = arith.constant 0 : index
    %c0_7 = arith.constant 0 : index
    %14 = vector.load %arg6[%c0_6, %c0_7] : memref<32x32xf32, #tpu.memory_space<vmem>>, vector<32x32xf32>
    %cst_8 = arith.constant dense<0.000000e+00> : vector<256x32xf32>
    %15 = tpu.matmul %12, %14, %cst_8 {dimension_numbers = #tpu.dot_dimension_numbers<[1], [0], [0], [1], [0, 0, 1, 1], [], []>} : vector<256x32xf32>, vector<32x32xf32>, vector<256x32xf32> -> vector<256x32xf32>
    %c0_9 = arith.constant 0 : index
    %c0_10 = arith.constant 0 : index
    %16 = vector.load %arg8[%c0_9, %c0_10] : memref<1x32xf32, #tpu.memory_space<vmem>>, vector<1x32xf32>
    %17 = vector.broadcast %16 : vector<1x32xf32> to vector<256x32xf32>
    %18 = arith.addf %15, %17 : vector<256x32xf32>
    %c0_11 = arith.constant 0 : index
    %c0_12 = arith.constant 0 : index
    %19 = vector.load %arg7[%c0_11, %c0_12] : memref<32x32xf32, #tpu.memory_space<vmem>>, vector<32x32xf32>
    %cst_13 = arith.constant dense<0.000000e+00> : vector<256x32xf32>
    %20 = tpu.matmul %13, %19, %cst_13 {dimension_numbers = #tpu.dot_dimension_numbers<[1], [0], [0], [1], [0, 0, 1, 1], [], []>} : vector<256x32xf32>, vector<32x32xf32>, vector<256x32xf32> -> vector<256x32xf32>
    %c0_14 = arith.constant 0 : index
    %c0_15 = arith.constant 0 : index
    %21 = vector.load %arg9[%c0_14, %c0_15] : memref<1x32xf32, #tpu.memory_space<vmem>>, vector<1x32xf32>
    %22 = vector.broadcast %21 : vector<1x32xf32> to vector<256x32xf32>
    %23 = arith.addf %20, %22 : vector<256x32xf32>
    %c0_16 = arith.constant 0 : index
    %c0_17 = arith.constant 0 : index
    %24 = vector.load %arg10[%c0_16, %c0_17] : memref<32x64xf32, #tpu.memory_space<vmem>>, vector<32x64xf32>
    %cst_18 = arith.constant dense<0.000000e+00> : vector<256x64xf32>
    %25 = tpu.matmul %18, %24, %cst_18 {dimension_numbers = #tpu.dot_dimension_numbers<[1], [0], [0], [1], [0, 0, 1, 1], [], []>} : vector<256x32xf32>, vector<32x64xf32>, vector<256x64xf32> -> vector<256x64xf32>
    %c0_19 = arith.constant 0 : index
    %c0_20 = arith.constant 0 : index
    %26 = vector.load %arg11[%c0_19, %c0_20] : memref<32x64xf32, #tpu.memory_space<vmem>>, vector<32x64xf32>
    %cst_21 = arith.constant dense<0.000000e+00> : vector<256x64xf32>
    %27 = tpu.matmul %23, %26, %cst_21 {dimension_numbers = #tpu.dot_dimension_numbers<[1], [0], [0], [1], [0, 0, 1, 1], [], []>} : vector<256x32xf32>, vector<32x64xf32>, vector<256x64xf32> -> vector<256x64xf32>
    %28 = arith.addf %25, %27 : vector<256x64xf32>
    %c0_22 = arith.constant 0 : index
    %c0_23 = arith.constant 0 : index
    %29 = vector.load %arg12[%c0_22, %c0_23] : memref<1x64xf32, #tpu.memory_space<vmem>>, vector<1x64xf32>
    %30 = vector.broadcast %29 : vector<1x64xf32> to vector<256x64xf32>
    %31 = arith.addf %28, %30 : vector<256x64xf32>
    %c0_24 = arith.constant 0 : index
    %c0_25 = arith.constant 0 : index
    %32 = vector.load %arg4[%c0_24, %c0_25] : memref<256x64xf32, #tpu.memory_space<vmem>>, vector<256x64xf32>
    %33 = arith.mulf %31, %32 : vector<256x64xf32>
    %c0_26 = arith.constant 0 : index
    %c0_27 = arith.constant 0 : index
    %34 = vector.load %arg13[%c0_26, %c0_27] : memref<64x128xf32, #tpu.memory_space<vmem>>, vector<64x128xf32>
    %cst_28 = arith.constant dense<0.000000e+00> : vector<256x128xf32>
    %35 = tpu.matmul %33, %34, %cst_28 {dimension_numbers = #tpu.dot_dimension_numbers<[1], [0], [0], [1], [0, 0, 1, 1], [], []>} : vector<256x64xf32>, vector<64x128xf32>, vector<256x128xf32> -> vector<256x128xf32>
    %c0_29 = arith.constant 0 : index
    %c0_30 = arith.constant 0 : index
    %36 = vector.load %arg14[%c0_29, %c0_30] : memref<1x128xf32, #tpu.memory_space<vmem>>, vector<1x128xf32>
    %37 = vector.broadcast %36 : vector<1x128xf32> to vector<256x128xf32>
    %38 = arith.addf %35, %37 : vector<256x128xf32>
    %39 = tpu.iota {dimensions = array<i32: 1>} : vector<256x128xi32>
    %c0_31 = arith.constant 0 : index
    %c0_32 = arith.constant 0 : index
    %40 = vector.load %arg3[%c0_31, %c0_32] : memref<256x1xi32, #tpu.memory_space<vmem>>, vector<256x1xi32>
    %41 = vector.broadcast %40 : vector<256x1xi32> to vector<256x128xi32>
    %42 = arith.cmpi eq, %39, %41 : vector<256x128xi32>
    %43 = arith.extui %42 : vector<256x128xi1> to vector<256x128xi32>
    %44 = arith.sitofp %43 : vector<256x128xi32> to vector<256x128xf32>
    %c0_33 = arith.constant 0 : index
    %c0_34 = arith.constant 0 : index
    %45 = vector.load %arg15[%c0_33, %c0_34] : memref<128x128xf32, #tpu.memory_space<vmem>>, vector<128x128xf32>
    %cst_35 = arith.constant dense<0.000000e+00> : vector<256x128xf32>
    %46 = tpu.matmul %44, %45, %cst_35 {dimension_numbers = #tpu.dot_dimension_numbers<[1], [0], [0], [1], [0, 0, 1, 1], [], []>} : vector<256x128xf32>, vector<128x128xf32>, vector<256x128xf32> -> vector<256x128xf32>
    %47 = arith.addf %38, %46 : vector<256x128xf32>
    %c0_36 = arith.constant 0 : index
    %c0_37 = arith.constant 0 : index
    %48 = vector.load %arg16[%c0_36, %c0_37] : memref<256x128xf32, #tpu.memory_space<vmem>>, vector<256x128xf32>
    tpu.vector_store %arg16[%c0_36, %c0_37], %47 {strides = array<i32>} : memref<256x128xf32, #tpu.memory_space<vmem>>, vector<256x128xf32>,
    return
  }
  func.func @transform_0(%arg0: i32) -> (i32, i32) {
    %c0_i32 = arith.constant 0 : i32
    %c0_i32_0 = arith.constant 0 : i32
    return %arg0, %c0_i32 : i32, i32
  }
  func.func @transform_1(%arg0: i32) -> (i32, i32) {
    %c0_i32 = arith.constant 0 : i32
    %c0_i32_0 = arith.constant 0 : i32
    return %arg0, %c0_i32 : i32, i32
  }
  func.func @transform_2(%arg0: i32) -> (i32, i32) {
    %c0_i32 = arith.constant 0 : i32
    %c0_i32_0 = arith.constant 0 : i32
    return %arg0, %c0_i32 : i32, i32
  }
  func.func @transform_3(%arg0: i32) -> (i32, i32) {
    %c0_i32 = arith.constant 0 : i32
    %c0_i32_0 = arith.constant 0 : i32
    return %arg0, %c0_i32 : i32, i32
  }
  func.func @transform_4(%arg0: i32) -> (i32, i32) {
    %c0_i32 = arith.constant 0 : i32
    %c0_i32_0 = arith.constant 0 : i32
    %c0_i32_1 = arith.constant 0 : i32
    return %c0_i32, %c0_i32_0 : i32, i32
  }
  func.func @transform_5(%arg0: i32) -> (i32, i32) {
    %c0_i32 = arith.constant 0 : i32
    %c0_i32_0 = arith.constant 0 : i32
    %c0_i32_1 = arith.constant 0 : i32
    return %c0_i32, %c0_i32_0 : i32, i32
  }
  func.func @transform_6(%arg0: i32) -> (i32, i32) {
    %c0_i32 = arith.constant 0 : i32
    %c0_i32_0 = arith.constant 0 : i32
    %c0_i32_1 = arith.constant 0 : i32
    return %c0_i32, %c0_i32_0 : i32, i32
  }
  func.func @transform_7(%arg0: i32) -> (i32, i32) {
    %c0_i32 = arith.constant 0 : i32
    %c0_i32_0 = arith.constant 0 : i32
    %c0_i32_1 = arith.constant 0 : i32
    return %c0_i32, %c0_i32_0 : i32, i32
  }
  func.func @transform_8(%arg0: i32) -> (i32, i32) {
    %c0_i32 = arith.constant 0 : i32
    %c0_i32_0 = arith.constant 0 : i32
    %c0_i32_1 = arith.constant 0 : i32
    return %c0_i32, %c0_i32_0 : i32, i32
  }
  func.func @transform_9(%arg0: i32) -> (i32, i32) {
    %c0_i32 = arith.constant 0 : i32
    %c0_i32_0 = arith.constant 0 : i32
    %c0_i32_1 = arith.constant 0 : i32
    return %c0_i32, %c0_i32_0 : i32, i32
  }
  func.func @transform_10(%arg0: i32) -> (i32, i32) {
    %c0_i32 = arith.constant 0 : i32
    %c0_i32_0 = arith.constant 0 : i32
    %c0_i32_1 = arith.constant 0 : i32
    return %c0_i32, %c0_i32_0 : i32, i32
  }
  func.func @transform_11(%arg0: i32) -> (i32, i32) {
    %c0_i32 = arith.constant 0 : i32
    %c0_i32_0 = arith.constant 0 : i32
    %c0_i32_1 = arith.constant 0 : i32
    return %c0_i32, %c0_i32_0 : i32, i32
  }
  func.func @transform_12(%arg0: i32) -> (i32, i32) {
    %c0_i32 = arith.constant 0 : i32
    %c0_i32_0 = arith.constant 0 : i32
    %c0_i32_1 = arith.constant 0 : i32
    return %c0_i32, %c0_i32_0 : i32, i32
  }
  func.func @transform_13(%arg0: i32) -> (i32, i32) {
    %c0_i32 = arith.constant 0 : i32
    %c0_i32_0 = arith.constant 0 : i32
    %c0_i32_1 = arith.constant 0 : i32
    return %c0_i32, %c0_i32_0 : i32, i32
  }
  func.func @transform_14(%arg0: i32) -> (i32, i32) {
    %c0_i32 = arith.constant 0 : i32
    %c0_i32_0 = arith.constant 0 : i32
    %c0_i32_1 = arith.constant 0 : i32
    return %c0_i32, %c0_i32_0 : i32, i32
  }
  func.func @transform_15(%arg0: i32) -> (i32, i32) {
    %c0_i32 = arith.constant 0 : i32
    %c0_i32_0 = arith.constant 0 : i32
    return %arg0, %c0_i32 : i32, i32
  }
}

</mosaic_0001>

<llo_original>
// kernel: tpu_custom_call.1
$region0: #{tpu_custom_call.1}
  #allocation0 [shape = 'u32[]', space=smem, size = 0x4, offset = 0x4, fixed_abs, tag = 'smem constant byte address 0x4 - core index']
  #allocation1 [shape = 'u32[144,128]{1,0:T(1,128)}', space=vmem, size = 0x12000, scoped, tag = 'internal scratch']
  %s0 = inlined_call_operand.vmem [shape: s32[768,1], index: 0, kind: input, shape index: {}]
  %s1 = inlined_call_operand.vmem [shape: s32[768,1], index: 1, kind: input, shape index: {}]
  %s2 = inlined_call_operand.vmem [shape: s32[768,1], index: 2, kind: input, shape index: {}]
  %s3 = inlined_call_operand.vmem [shape: f32[768,64], index: 3, kind: input, shape index: {}]
  %s4 = inlined_call_operand.vmem [shape: f32[128,32], index: 4, kind: input, shape index: {}]
  %s5 = inlined_call_operand.vmem [shape: f32[32,32], index: 5, kind: input, shape index: {}]
  %s6 = inlined_call_operand.vmem [shape: f32[32,32], index: 6, kind: input, shape index: {}]
  %s7 = inlined_call_operand.vmem [shape: f32[1,32], index: 7, kind: input, shape index: {}]
  %s8 = inlined_call_operand.vmem [shape: f32[1,32], index: 8, kind: input, shape index: {}]
  %s9 = inlined_call_operand.vmem [shape: f32[32,64], index: 9, kind: input, shape index: {}]
  %s10 = inlined_call_operand.vmem [shape: f32[32,64], index: 10, kind: input, shape index: {}]
  %s11 = inlined_call_operand.vmem [shape: f32[1,64], index: 11, kind: input, shape index: {}]
  %s12 = inlined_call_operand.vmem [shape: f32[64,128], index: 12, kind: input, shape index: {}]
  %s13 = inlined_call_operand.vmem [shape: f32[1,128], index: 13, kind: input, shape index: {}]
  %s14 = inlined_call_operand.vmem [shape: f32[128,128], index: 14, kind: input, shape index: {}]
  %s15 = inlined_call_operand.hbm [shape: f32[768,128], index: 15, kind: output, shape index: {}]
  %s16 = sld [smem:[#allocation0]]
  $region93: #{tpu_custom_call.1} parent=0
    _
  %s18 = ssub.s32 1, %s16
  %s19 = scalar_select 0, %s18, %s16
  $region1: #{tpu_custom_call.1} parent=0
    #allocation2 [shape = 'u8[262144]{0}', space=vmem, size = 0x40000, scoped, tag = 'output window, operand 0']
    #allocation3 [shape = 's32[2]{0}', space=sflag, size = 0x8, scoped, tag = 'scoped memory for tpu_custom_call.1']
    %20 = vsyncpa [#allocation3], 0
    %s21 = scalar_lea.sflag [#allocation3], 1
    %22 = vsyncpa %s21, 0
    loop: start=0, step=1, limit=5
    $region2: #{tpu_custom_call.1} parent=1 // loop_pre_header
      _
    $region3: #{tpu_custom_call.1} parent=1 // loop_header
      %s24 = sphi 0, %s28
      %p25 = scmp.ge.s32.totalorder %s24, 5
      %s34 = sphi 0, %s36
      %s37 = sphi 0, %s34
      %s38 = sphi 0, %s37
      %s54 = sphi 0, %s38
      %s60 = sphi 0, %s62
      %s63 = sphi 0, %s60
      %s64 = sphi 0, %s63
      %s80 = sphi 0, %s64
      %s86 = sphi 0, %s88
      %s89 = sphi 0, %s86
      %s90 = sphi 0, %s89
      %s106 = sphi 0, %s90
      %s112 = sphi 0, %s114
      %s115 = sphi 0, %s112
      %s116 = sphi 0, %s115
      %s132 = sphi 0, %s116
      %s136 = sphi 0, %s136
      %s138 = sphi 0, %s136
      %s139 = sphi 0, %s138
      %s153 = sphi 0, %s139
      %s157 = sphi 0, %s157
      %s159 = sphi 0, %s157
      %s160 = sphi 0, %s159
      %s174 = sphi 0, %s160
      %s178 = sphi 0, %s178
      %s180 = sphi 0, %s178
      %s181 = sphi 0, %s180
      %s195 = sphi 0, %s181
      %s199 = sphi 0, %s199
      %s201 = sphi 0, %s199
      %s202 = sphi 0, %s201
      %s216 = sphi 0, %s202
      %s220 = sphi 0, %s220
      %s222 = sphi 0, %s220
      %s223 = sphi 0, %s222
      %s237 = sphi 0, %s223
      %s241 = sphi 0, %s241
      %s243 = sphi 0, %s241
      %s244 = sphi 0, %s243
      %s258 = sphi 0, %s244
      %s262 = sphi 0, %s262
      %s264 = sphi 0, %s262
      %s265 = sphi 0, %s264
      %s279 = sphi 0, %s265
      %s283 = sphi 0, %s283
      %s285 = sphi 0, %s283
      %s286 = sphi 0, %s285
      %s300 = sphi 0, %s286
      %s304 = sphi 0, %s304
      %s306 = sphi 0, %s304
      %s307 = sphi 0, %s306
      %s321 = sphi 0, %s307
      %s325 = sphi 0, %s325
      %s327 = sphi 0, %s325
      %s328 = sphi 0, %s327
      %s342 = sphi 0, %s328
      %s346 = sphi 0, %s346
      %s348 = sphi 0, %s346
      %s349 = sphi 0, %s348
      %s363 = sphi 0, %s349
      %s369 = sphi 0, %s371
      %s372 = sphi 0, %s369
      %s373 = sphi 0, %s372
      %s389 = sphi 0, %s373
    $region4: #{tpu_custom_call.1} parent=1 // loop_header_branch
      %27 = sbr.rel (%p25) target = $region8
    $region5: #{tpu_custom_call.1} parent=1 // loop_body
      %s29 = ssub.s32 %s24, 1
      %s30 = ssub.s32 %s24, 2
      %s31 = sadd.s32 %s24, 1
      %s32 = ssub.s32 %s24, %s31
      %p33 = scmp.eq.s32.totalorder %s32, 0
      %s35 = sadd.s32 %s34, 1
      %s36 = scalar_select %p33, %s34, %s35
      %p39 = pneg %p33
      %p40 = scmp.eq.s32.totalorder %s24, 2
      %p41 = por %p39, %p40
      %p42 = scmp.ne.s32.totalorder %s34, %s37
      %p43 = scmp.eq.s32.totalorder %s24, 0
      %p44 = por %p42, %p43
      %p45 = scmp.ne.s32.totalorder %s34, %s37
      %p46 = scmp.eq.s32.totalorder %s29, 2
      %p47 = por %p45, %p46
      %p48 = scmp.ne.s32.totalorder %s37, %s38
      %p49 = scmp.eq.s32.totalorder %s29, 0
      %p50 = por %p48, %p49
      %p51 = scmp.ne.s32.totalorder %s37, %s38
      %p52 = scmp.eq.s32.totalorder %s30, 2
      %p53 = por %p51, %p52
      %p55 = scmp.ne.s32.totalorder %s38, %s54
      %p56 = scmp.eq.s32.totalorder %s30, 0
      %p57 = por %p55, %p56
      %s58 = ssub.s32 %s24, %s31
      %p59 = scmp.eq.s32.totalorder %s58, 0
      %s61 = sadd.s32 %s60, 1
      %s62 = scalar_select %p59, %s60, %s61
      %p65 = pneg %p59
      %p66 = scmp.eq.s32.totalorder %s24, 2
      %p67 = por %p65, %p66
      %p68 = scmp.ne.s32.totalorder %s60, %s63
      %p69 = scmp.eq.s32.totalorder %s24, 0
      %p70 = por %p68, %p69
      %p71 = scmp.ne.s32.totalorder %s60, %s63
      %p72 = scmp.eq.s32.totalorder %s29, 2
      %p73 = por %p71, %p72
      %p74 = scmp.ne.s32.totalorder %s63, %s64
      %p75 = scmp.eq.s32.totalorder %s29, 0
      %p76 = por %p74, %p75
      %p77 = scmp.ne.s32.totalorder %s63, %s64
      %p78 = scmp.eq.s32.totalorder %s30, 2
      %p79 = por %p77, %p78
      %p81 = scmp.ne.s32.totalorder %s64, %s80
      %p82 = scmp.eq.s32.totalorder %s30, 0
      %p83 = por %p81, %p82
      %s84 = ssub.s32 %s24, %s31
      %p85 = scmp.eq.s32.totalorder %s84, 0
      %s87 = sadd.s32 %s86, 1
      %s88 = scalar_select %p85, %s86, %s87
      %p91 = pneg %p85
      %p92 = scmp.eq.s32.totalorder %s24, 2
      %p93 = por %p91, %p92
      %p94 = scmp.ne.s32.totalorder %s86, %s89
      %p95 = scmp.eq.s32.totalorder %s24, 0
      %p96 = por %p94, %p95
      %p97 = scmp.ne.s32.totalorder %s86, %s89
      %p98 = scmp.eq.s32.totalorder %s29, 2
      %p99 = por %p97, %p98
      %p100 = scmp.ne.s32.totalorder %s89, %s90
      %p101 = scmp.eq.s32.totalorder %s29, 0
      %p102 = por %p100, %p101
      %p103 = scmp.ne.s32.totalorder %s89, %s90
      %p104 = scmp.eq.s32.totalorder %s30, 2
      %p105 = por %p103, %p104
      %p107 = scmp.ne.s32.totalorder %s90, %s106
      %p108 = scmp.eq.s32.totalorder %s30, 0
      %p109 = por %p107, %p108
      %s110 = ssub.s32 %s24, %s31
      %p111 = scmp.eq.s32.totalorder %s110, 0
      %s113 = sadd.s32 %s112, 1
      %s114 = scalar_select %p111, %s112, %s113
      %p117 = pneg %p111
      %p118 = scmp.eq.s32.totalorder %s24, 2
      %p119 = por %p117, %p118
      %p120 = scmp.ne.s32.totalorder %s112, %s115
      %p121 = scmp.eq.s32.totalorder %s24, 0
      %p122 = por %p120, %p121
      %p123 = scmp.ne.s32.totalorder %s112, %s115
      %p124 = scmp.eq.s32.totalorder %s29, 2
      %p125 = por %p123, %p124
      %p126 = scmp.ne.s32.totalorder %s115, %s116
      %p127 = scmp.eq.s32.totalorder %s29, 0
      %p128 = por %p126, %p127
      %p129 = scmp.ne.s32.totalorder %s115, %s116
      %p130 = scmp.eq.s32.totalorder %s30, 2
      %p131 = por %p129, %p130
      %p133 = scmp.ne.s32.totalorder %s116, %s132
      %p134 = scmp.eq.s32.totalorder %s30, 0
      %p135 = por %p133, %p134
      %s137 = sadd.s32 %s136, 1
      %p140 = scmp.eq.s32.totalorder %s24, 2
      %p141 = scmp.ne.s32.totalorder %s136, %s138
      %p142 = scmp.eq.s32.totalorder %s24, 0
      %p143 = por %p141, %p142
      %p144 = scmp.ne.s32.totalorder %s136, %s138
      %p145 = scmp.eq.s32.totalorder %s29, 2
      %p146 = por %p144, %p145
      %p147 = scmp.ne.s32.totalorder %s138, %s139
      %p148 = scmp.eq.s32.totalorder %s29, 0
      %p149 = por %p147, %p148
      %p150 = scmp.ne.s32.totalorder %s138, %s139
      %p151 = scmp.eq.s32.totalorder %s30, 2
      %p152 = por %p150, %p151
      %p154 = scmp.ne.s32.totalorder %s139, %s153
      %p155 = scmp.eq.s32.totalorder %s30, 0
      %p156 = por %p154, %p155
      %s158 = sadd.s32 %s157, 1
      %p161 = scmp.eq.s32.totalorder %s24, 2
      %p162 = scmp.ne.s32.totalorder %s157, %s159
      %p163 = scmp.eq.s32.totalorder %s24, 0
      %p164 = por %p162, %p163
      %p165 = scmp.ne.s32.totalorder %s157, %s159
      %p166 = scmp.eq.s32.totalorder %s29, 2
      %p167 = por %p165, %p166
      %p168 = scmp.ne.s32.totalorder %s159, %s160
      %p169 = scmp.eq.s32.totalorder %s29, 0
      %p170 = por %p168, %p169
      %p171 = scmp.ne.s32.totalorder %s159, %s160
      %p172 = scmp.eq.s32.totalorder %s30, 2
      %p173 = por %p171, %p172
      %p175 = scmp.ne.s32.totalorder %s160, %s174
      %p176 = scmp.eq.s32.totalorder %s30, 0
      %p177 = por %p175, %p176
      %s179 = sadd.s32 %s178, 1
      %p182 = scmp.eq.s32.totalorder %s24, 2
      %p183 = scmp.ne.s32.totalorder %s178, %s180
      %p184 = scmp.eq.s32.totalorder %s24, 0
      %p185 = por %p183, %p184
      %p186 = scmp.ne.s32.totalorder %s178, %s180
      %p187 = scmp.eq.s32.totalorder %s29, 2
      %p188 = por %p186, %p187
      %p189 = scmp.ne.s32.totalorder %s180, %s181
      %p190 = scmp.eq.s32.totalorder %s29, 0
      %p191 = por %p189, %p190
      %p192 = scmp.ne.s32.totalorder %s180, %s181
      %p193 = scmp.eq.s32.totalorder %s30, 2
      %p194 = por %p192, %p193
      %p196 = scmp.ne.s32.totalorder %s181, %s195
      %p197 = scmp.eq.s32.totalorder %s30, 0
      %p198 = por %p196, %p197
      %s200 = sadd.s32 %s199, 1
      %p203 = scmp.eq.s32.totalorder %s24, 2
      %p204 = scmp.ne.s32.totalorder %s199, %s201
      %p205 = scmp.eq.s32.totalorder %s24, 0
      %p206 = por %p204, %p205
      %p207 = scmp.ne.s32.totalorder %s199, %s201
      %p208 = scmp.eq.s32.totalorder %s29, 2
      %p209 = por %p207, %p208
      %p210 = scmp.ne.s32.totalorder %s201, %s202
      %p211 = scmp.eq.s32.totalorder %s29, 0
      %p212 = por %p210, %p211
      %p213 = scmp.ne.s32.totalorder %s201, %s202
      %p214 = scmp.eq.s32.totalorder %s30, 2
      %p215 = por %p213, %p214
      %p217 = scmp.ne.s32.totalorder %s202, %s216
      %p218 = scmp.eq.s32.totalorder %s30, 0
      %p219 = por %p217, %p218
      %s221 = sadd.s32 %s220, 1
      %p224 = scmp.eq.s32.totalorder %s24, 2
      %p225 = scmp.ne.s32.totalorder %s220, %s222
      %p226 = scmp.eq.s32.totalorder %s24, 0
      %p227 = por %p225, %p226
      %p228 = scmp.ne.s32.totalorder %s220, %s222
      %p229 = scmp.eq.s32.totalorder %s29, 2
      %p230 = por %p228, %p229
      %p231 = scmp.ne.s32.totalorder %s222, %s223
      %p232 = scmp.eq.s32.totalorder %s29, 0
      %p233 = por %p231, %p232
      %p234 = scmp.ne.s32.totalorder %s222, %s223
      %p235 = scmp.eq.s32.totalorder %s30, 2
      %p236 = por %p234, %p235
      %p238 = scmp.ne.s32.totalorder %s223, %s237
      %p239 = scmp.eq.s32.totalorder %s30, 0
      %p240 = por %p238, %p239
      %s242 = sadd.s32 %s241, 1
      %p245 = scmp.eq.s32.totalorder %s24, 2
      %p246 = scmp.ne.s32.totalorder %s241, %s243
      %p247 = scmp.eq.s32.totalorder %s24, 0
      %p248 = por %p246, %p247
      %p249 = scmp.ne.s32.totalorder %s241, %s243
      %p250 = scmp.eq.s32.totalorder %s29, 2
      %p251 = por %p249, %p250
      %p252 = scmp.ne.s32.totalorder %s243, %s244
      %p253 = scmp.eq.s32.totalorder %s29, 0
      %p254 = por %p252, %p253
      %p255 = scmp.ne.s32.totalorder %s243, %s244
      %p256 = scmp.eq.s32.totalorder %s30, 2
      %p257 = por %p255, %p256
      %p259 = scmp.ne.s32.totalorder %s244, %s258
      %p260 = scmp.eq.s32.totalorder %s30, 0
      %p261 = por %p259, %p260
      %s263 = sadd.s32 %s262, 1
      %p266 = scmp.eq.s32.totalorder %s24, 2
      %p267 = scmp.ne.s32.totalorder %s262, %s264
      %p268 = scmp.eq.s32.totalorder %s24, 0
      %p269 = por %p267, %p268
      %p270 = scmp.ne.s32.totalorder %s262, %s264
      %p271 = scmp.eq.s32.totalorder %s29, 2
      %p272 = por %p270, %p271
      %p273 = scmp.ne.s32.totalorder %s264, %s265
      %p274 = scmp.eq.s32.totalorder %s29, 0
      %p275 = por %p273, %p274
      %p276 = scmp.ne.s32.totalorder %s264, %s265
      %p277 = scmp.eq.s32.totalorder %s30, 2
      %p278 = por %p276, %p277
      %p280 = scmp.ne.s32.totalorder %s265, %s279
      %p281 = scmp.eq.s32.totalorder %s30, 0
      %p282 = por %p280, %p281
      %s284 = sadd.s32 %s283, 1
      %p287 = scmp.eq.s32.totalorder %s24, 2
      %p288 = scmp.ne.s32.totalorder %s283, %s285
      %p289 = scmp.eq.s32.totalorder %s24, 0
      %p290 = por %p288, %p289
      %p291 = scmp.ne.s32.totalorder %s283, %s285
      %p292 = scmp.eq.s32.totalorder %s29, 2
      %p293 = por %p291, %p292
      %p294 = scmp.ne.s32.totalorder %s285, %s286
      %p295 = scmp.eq.s32.totalorder %s29, 0
      %p296 = por %p294, %p295
      %p297 = scmp.ne.s32.totalorder %s285, %s286
      %p298 = scmp.eq.s32.totalorder %s30, 2
      %p299 = por %p297, %p298
      %p301 = scmp.ne.s32.totalorder %s286, %s300
      %p302 = scmp.eq.s32.totalorder %s30, 0
      %p303 = por %p301, %p302
      %s305 = sadd.s32 %s304, 1
      %p308 = scmp.eq.s32.totalorder %s24, 2
      %p309 = scmp.ne.s32.totalorder %s304, %s306
      %p310 = scmp.eq.s32.totalorder %s24, 0
      %p311 = por %p309, %p310
      %p312 = scmp.ne.s32.totalorder %s304, %s306
      %p313 = scmp.eq.s32.totalorder %s29, 2
      %p314 = por %p312, %p313
      %p315 = scmp.ne.s32.totalorder %s306, %s307
      %p316 = scmp.eq.s32.totalorder %s29, 0
      %p317 = por %p315, %p316
      %p318 = scmp.ne.s32.totalorder %s306, %s307
      %p319 = scmp.eq.s32.totalorder %s30, 2
      %p320 = por %p318, %p319
      %p322 = scmp.ne.s32.totalorder %s307, %s321
      %p323 = scmp.eq.s32.totalorder %s30, 0
      %p324 = por %p322, %p323
      %s326 = sadd.s32 %s325, 1
      %p329 = scmp.eq.s32.totalorder %s24, 2
      %p330 = scmp.ne.s32.totalorder %s325, %s327
      %p331 = scmp.eq.s32.totalorder %s24, 0
      %p332 = por %p330, %p331
      %p333 = scmp.ne.s32.totalorder %s325, %s327
      %p334 = scmp.eq.s32.totalorder %s29, 2
      %p335 = por %p333, %p334
      %p336 = scmp.ne.s32.totalorder %s327, %s328
      %p337 = scmp.eq.s32.totalorder %s29, 0
      %p338 = por %p336, %p337
      %p339 = scmp.ne.s32.totalorder %s327, %s328
      %p340 = scmp.eq.s32.totalorder %s30, 2
      %p341 = por %p339, %p340
      %p343 = scmp.ne.s32.totalorder %s328, %s342
      %p344 = scmp.eq.s32.totalorder %s30, 0
      %p345 = por %p343, %p344
      %s347 = sadd.s32 %s346, 1
      %p350 = scmp.eq.s32.totalorder %s24, 2
      %p351 = scmp.ne.s32.totalorder %s346, %s348
      %p352 = scmp.eq.s32.totalorder %s24, 0
      %p353 = por %p351, %p352
      %p354 = scmp.ne.s32.totalorder %s346, %s348
      %p355 = scmp.eq.s32.totalorder %s29, 2
      %p356 = por %p354, %p355
      %p357 = scmp.ne.s32.totalorder %s348, %s349
      %p358 = scmp.eq.s32.totalorder %s29, 0
      %p359 = por %p357, %p358
      %p360 = scmp.ne.s32.totalorder %s348, %s349
      %p361 = scmp.eq.s32.totalorder %s30, 2
      %p362 = por %p360, %p361
      %p364 = scmp.ne.s32.totalorder %s349, %s363
      %p365 = scmp.eq.s32.totalorder %s30, 0
      %p366 = por %p364, %p365
      %s367 = ssub.s32 %s24, %s31
      %p368 = scmp.eq.s32.totalorder %s367, 0
      %s370 = sadd.s32 %s369, 1
      %s371 = scalar_select %p368, %s369, %s370
      %p374 = pneg %p368
      %p375 = scmp.eq.s32.totalorder %s24, 2
      %p376 = por %p374, %p375
      %p377 = scmp.ne.s32.totalorder %s369, %s372
      %p378 = scmp.eq.s32.totalorder %s24, 0
      %p379 = por %p377, %p378
      %p380 = scmp.ne.s32.totalorder %s369, %s372
      %p381 = scmp.eq.s32.totalorder %s29, 2
      %p382 = por %p380, %p381
      %p383 = scmp.ne.s32.totalorder %s372, %s373
      %p384 = scmp.eq.s32.totalorder %s29, 0
      %p385 = por %p383, %p384
      %p386 = scmp.ne.s32.totalorder %s372, %s373
      %p387 = scmp.eq.s32.totalorder %s30, 2
      %p388 = por %p386, %p387
      %p390 = scmp.ne.s32.totalorder %s373, %s389
      %p391 = scmp.eq.s32.totalorder %s30, 0
      %p392 = por %p390, %p391
      %p393 = scmp.le.s32.totalorder 1, %s24
      %p394 = scmp.lt.s32.totalorder %s24, 4
      %p395 = pnand %p393, %p394
      %p396 = pneg %p395
      // Predicated region
      $region9: #{tpu_custom_call.1} parent=5 // pred_check
        _
      $region10: #{tpu_custom_call.1} parent=5 // pred_check_branch
        %398 = sbr.rel (%p395) target = $region12
      $region11: #{tpu_custom_call.1} parent=5 // pred_region
        %s399 = ssub.s32 %s24, 1
        // Predicated region
        $region13: #{tpu_custom_call.1} parent=11 // pred_check
          %p400 = pneg %p149
        $region14: #{tpu_custom_call.1} parent=11 // pred_check_branch
          %402 = sbr.rel (%p400) target = $region16
        $region15: #{tpu_custom_call.1} parent=11 // pred_region
          _
        $region16: #{tpu_custom_call.1} parent=11 // pred_fallthru
          _
        // Predicated region
        $region17: #{tpu_custom_call.1} parent=11 // pred_check
          %p403 = pneg %p170
        $region18: #{tpu_custom_call.1} parent=11 // pred_check_branch
          %405 = sbr.rel (%p403) target = $region20
        $region19: #{tpu_custom_call.1} parent=11 // pred_region
          _
        $region20: #{tpu_custom_call.1} parent=11 // pred_fallthru
          _
        // Predicated region
        $region21: #{tpu_custom_call.1} parent=11 // pred_check
          %p406 = pneg %p191
        $region22: #{tpu_custom_call.1} parent=11 // pred_check_branch
          %408 = sbr.rel (%p406) target = $region24
        $region23: #{tpu_custom_call.1} parent=11 // pred_region
          _
        $region24: #{tpu_custom_call.1} parent=11 // pred_fallthru
          _
        // Predicated region
        $region25: #{tpu_custom_call.1} parent=11 // pred_check
          %p409 = pneg %p212
        $region26: #{tpu_custom_call.1} parent=11 // pred_check_branch
          %411 = sbr.rel (%p409) target = $region28
        $region27: #{tpu_custom_call.1} parent=11 // pred_region
          _
        $region28: #{tpu_custom_call.1} parent=11 // pred_fallthru
          _
        // Predicated region
        $region29: #{tpu_custom_call.1} parent=11 // pred_check
          %p412 = pneg %p233
        $region30: #{tpu_custom_call.1} parent=11 // pred_check_branch
          %414 = sbr.rel (%p412) target = $region32
        $region31: #{tpu_custom_call.1} parent=11 // pred_region
          _
        $region32: #{tpu_custom_call.1} parent=11 // pred_fallthru
          _
        // Predicated region
        $region33: #{tpu_custom_call.1} parent=11 // pred_check
          %p415 = pneg %p254
        $region34: #{tpu_custom_call.1} parent=11 // pred_check_branch
          %417 = sbr.rel (%p415) target = $region36
        $region35: #{tpu_custom_call.1} parent=11 // pred_region
          _
        $region36: #{tpu_custom_call.1} parent=11 // pred_fallthru
          _
        // Predicated region
        $region37: #{tpu_custom_call.1} parent=11 // pred_check
          %p418 = pneg %p275
        $region38: #{tpu_custom_call.1} parent=11 // pred_check_branch
          %420 = sbr.rel (%p418) target = $region40
        $region39: #{tpu_custom_call.1} parent=11 // pred_region
          _
        $region40: #{tpu_custom_call.1} parent=11 // pred_fallthru
          _
        // Predicated region
        $region41: #{tpu_custom_call.1} parent=11 // pred_check
          %p421 = pneg %p296
        $region42: #{tpu_custom_call.1} parent=11 // pred_check_branch
          %423 = sbr.rel (%p421) target = $region44
        $region43: #{tpu_custom_call.1} parent=11 // pred_region
          _
        $region44: #{tpu_custom_call.1} parent=11 // pred_fallthru
          _
        // Predicated region
        $region45: #{tpu_custom_call.1} parent=11 // pred_check
          %p424 = pneg %p317
        $region46: #{tpu_custom_call.1} parent=11 // pred_check_branch
          %426 = sbr.rel (%p424) target = $region48
        $region47: #{tpu_custom_call.1} parent=11 // pred_region
          _
        $region48: #{tpu_custom_call.1} parent=11 // pred_fallthru
          _
        // Predicated region
        $region49: #{tpu_custom_call.1} parent=11 // pred_check
          %p427 = pneg %p338
        $region50: #{tpu_custom_call.1} parent=11 // pred_check_branch
          %429 = sbr.rel (%p427) target = $region52
        $region51: #{tpu_custom_call.1} parent=11 // pred_region
          _
        $region52: #{tpu_custom_call.1} parent=11 // pred_fallthru
          _
        // Predicated region
        $region53: #{tpu_custom_call.1} parent=11 // pred_check
          %p430 = pneg %p359
        $region54: #{tpu_custom_call.1} parent=11 // pred_check_branch
          %432 = sbr.rel (%p430) target = $region56
        $region55: #{tpu_custom_call.1} parent=11 // pred_region
          _
        $region56: #{tpu_custom_call.1} parent=11 // pred_fallthru
          _
      $region12: #{tpu_custom_call.1} parent=5 // pred_fallthru
        _
      %p433 = scmp.lt.s32.totalorder %s24, 3
      // Predicated region
      $region57: #{tpu_custom_call.1} parent=5 // pred_check
        %p434 = pneg %p433
      $region58: #{tpu_custom_call.1} parent=5 // pred_check_branch
        %436 = sbr.rel (%p434) target = $region60
      $region59: #{tpu_custom_call.1} parent=5 // pred_region
        // Predicated region
        $region61: #{tpu_custom_call.1} parent=59 // pred_check
          %p437 = pneg %p44
        $region62: #{tpu_custom_call.1} parent=59 // pred_check_branch
          %439 = sbr.rel (%p437) target = $region64
        $region63: #{tpu_custom_call.1} parent=59 // pred_region
          %s440 = smul.u32 32, %s24
          %p441 = scmp.lt.s32.totalorder %s440, 95
          %s442 = scalar_select %p441, %s440, 95
          %s443 = smul.addr %s442, 8
          %s444 = scalar_lea.vmem %s0, %s443
          %s445 = smul.u32 32, %s24
        $region64: #{tpu_custom_call.1} parent=59 // pred_fallthru
          _
        // Predicated region
        $region65: #{tpu_custom_call.1} parent=59 // pred_check
          %p446 = pneg %p70
        $region66: #{tpu_custom_call.1} parent=59 // pred_check_branch
          %448 = sbr.rel (%p446) target = $region68
        $region67: #{tpu_custom_call.1} parent=59 // pred_region
          %s449 = smul.u32 32, %s24
          %p450 = scmp.lt.s32.totalorder %s449, 95
          %s451 = scalar_select %p450, %s449, 95
          %s452 = smul.addr %s451, 8
          %s453 = scalar_lea.vmem %s1, %s452
          %s454 = smul.u32 32, %s24
        $region68: #{tpu_custom_call.1} parent=59 // pred_fallthru
          _
        // Predicated region
        $region69: #{tpu_custom_call.1} parent=59 // pred_check
          %p455 = pneg %p96
        $region70: #{tpu_custom_call.1} parent=59 // pred_check_branch
          %457 = sbr.rel (%p455) target = $region72
        $region71: #{tpu_custom_call.1} parent=59 // pred_region
          %s458 = smul.u32 32, %s24
          %p459 = scmp.lt.s32.totalorder %s458, 95
          %s460 = scalar_select %p459, %s458, 95
          %s461 = smul.addr %s460, 8
          %s462 = scalar_lea.vmem %s2, %s461
          %s463 = smul.u32 32, %s24
        $region72: #{tpu_custom_call.1} parent=59 // pred_fallthru
          _
        // Predicated region
        $region73: #{tpu_custom_call.1} parent=59 // pred_check
          %p464 = pneg %p122
        $region74: #{tpu_custom_call.1} parent=59 // pred_check_branch
          %466 = sbr.rel (%p464) target = $region76
        $region75: #{tpu_custom_call.1} parent=59 // pred_region
          %s467 = smul.u32 32, %s24
          %p468 = scmp.lt.s32.totalorder %s467, 95
          %s469 = scalar_select %p468, %s467, 95
          %s470 = smul.addr %s469, 8
          %s471 = scalar_lea.vmem %s3, %s470
          %s472 = smul.u32 32, %s24
        $region76: #{tpu_custom_call.1} parent=59 // pred_fallthru
          _
      $region60: #{tpu_custom_call.1} parent=5 // pred_fallthru
        _
      %p473 = scmp.le.s32.totalorder 1, %s24
      %p474 = scmp.lt.s32.totalorder %s24, 4
      %p475 = pnand %p473, %p474
      %p476 = pneg %p475
      // Predicated region
      $region77: #{tpu_custom_call.1} parent=5 // pred_check
        _
      $region78: #{tpu_custom_call.1} parent=5 // pred_check_branch
        %478 = sbr.rel (%p475) target = $region80
      $region79: #{tpu_custom_call.1} parent=5 // pred_region
        %s479 = ssub.s32 %s24, 1
        %s480 = smul.u32 32, %s29
        %p481 = scmp.lt.s32.totalorder %s480, 95
        %s482 = scalar_select %p481, %s480, 95
        %s483 = smul.addr %s482, 8
        %s484 = scalar_lea.vmem %s0, %s483
        %p485 = pneg %p50
        %p486 = pneg %p47
        %s487 = smul.u32 32, %s29
        %p488 = scmp.lt.s32.totalorder %s487, 95
        %s489 = scalar_select %p488, %s487, 95
        %s490 = smul.addr %s489, 8
        %s491 = scalar_lea.vmem %s1, %s490
        %p492 = pneg %p76
        %p493 = pneg %p73
        %s494 = smul.u32 32, %s29
        %p495 = scmp.lt.s32.totalorder %s494, 95
        %s496 = scalar_select %p495, %s494, 95
        %s497 = smul.addr %s496, 8
        %s498 = scalar_lea.vmem %s2, %s497
        %p499 = pneg %p102
        %p500 = pneg %p99
        %s501 = smul.u32 32, %s29
        %p502 = scmp.lt.s32.totalorder %s501, 95
        %s503 = scalar_select %p502, %s501, 95
        %s504 = smul.addr %s503, 8
        %s505 = scalar_lea.vmem %s3, %s504
        %p506 = pneg %p128
        %p507 = pneg %p125
        %p508 = pneg %p149
        %p509 = pneg %p146
        %p510 = pneg %p170
        %p511 = pneg %p167
        %p512 = pneg %p191
        %p513 = pneg %p188
        %p514 = pneg %p212
        %p515 = pneg %p209
        %p516 = pneg %p233
        %p517 = pneg %p230
        %p518 = pneg %p254
        %p519 = pneg %p251
        %p520 = pneg %p275
        %p521 = pneg %p272
        %p522 = pneg %p296
        %p523 = pneg %p293
        %p524 = pneg %p317
        %p525 = pneg %p314
        %p526 = pneg %p338
        %p527 = pneg %p335
        %p528 = pneg %p359
        %p529 = pneg %p356
        %p530 = pneg %p385
        %p531 = pneg %p382
        %s532 = sand.u32 %s372, 1
        %s533 = scalar_lea.sflag [#allocation3], %s532
        %s534 = sand.u32 %s372, 1
        %s535 = smul.addr %s534, 256
        %s536 = scalar_lea.vmem [#allocation2], %s535
        %s537 = smul.u32 32, %s29
        %p538 = scmp.lt.s32.totalorder %s537, 95
        %s539 = scalar_select %p538, %s537, 95
        %s540 = smul.addr %s539, 8
        %s541 = scalar_lea.vmem %s0, %s540
        %s542 = smul.u32 32, %s29
        %s543 = smul.u32 32, %s29
        %p544 = scmp.lt.s32.totalorder %s543, 95
        %s545 = scalar_select %p544, %s543, 95
        %s546 = smul.addr %s545, 8
        %s547 = scalar_lea.vmem %s1, %s546
        %s548 = smul.u32 32, %s29
        %s549 = smul.u32 32, %s29
        %p550 = scmp.lt.s32.totalorder %s549, 95
        %s551 = scalar_select %p550, %s549, 95
        %s552 = smul.addr %s551, 8
        %s553 = scalar_lea.vmem %s2, %s552
        %s554 = smul.u32 32, %s29
        %s555 = smul.u32 32, %s29
        %p556 = scmp.lt.s32.totalorder %s555, 95
        %s557 = scalar_select %p556, %s555, 95
        %s558 = smul.addr %s557, 8
        %s559 = scalar_lea.vmem %s3, %s558
        %s560 = smul.u32 32, %s29
        %s561 = smul.u32 32, %s29
        %v562 = vlaneseq
        %v563 = vand.u32 %v562, 127
        %v564 = vld [vmem:[%s541] sm:$0xff]
        %v565 = vld [vmem:[%s541 + $0x8] sm:$0xff]
        %v566 = vld [vmem:[%s541 + $0x10] sm:$0xff]
        %v567 = vld [vmem:[%s541 + $0x18] sm:$0xff]
        %v568 = vld [vmem:[%s541 + $0x20] sm:$0xff]
        %v569 = vld [vmem:[%s541 + $0x28] sm:$0xff]
        %v570 = vld [vmem:[%s541 + $0x30] sm:$0xff]
        %v571 = vld [vmem:[%s541 + $0x38] sm:$0xff]
        %v572 = vld [vmem:[%s541 + $0x40] sm:$0xff]
        %v573 = vld [vmem:[%s541 + $0x48] sm:$0xff]
        %v574 = vld [vmem:[%s541 + $0x50] sm:$0xff]
        %v575 = vld [vmem:[%s541 + $0x58] sm:$0xff]
        %v576 = vld [vmem:[%s541 + $0x60] sm:$0xff]
        %v577 = vld [vmem:[%s541 + $0x68] sm:$0xff]
        %v578 = vld [vmem:[%s541 + $0x70] sm:$0xff]
        %v579 = vld [vmem:[%s541 + $0x78] sm:$0xff]
        %v580 = vld [vmem:[%s541 + $0x80] sm:$0xff]
        %v581 = vld [vmem:[%s541 + $0x88] sm:$0xff]
        %v582 = vld [vmem:[%s541 + $0x90] sm:$0xff]
        %v583 = vld [vmem:[%s541 + $0x98] sm:$0xff]
        %v584 = vld [vmem:[%s541 + $0xa0] sm:$0xff]
        %v585 = vld [vmem:[%s541 + $0xa8] sm:$0xff]
        %v586 = vld [vmem:[%s541 + $0xb0] sm:$0xff]
        %v587 = vld [vmem:[%s541 + $0xb8] sm:$0xff]
        %v588 = vld [vmem:[%s541 + $0xc0] sm:$0xff]
        %v589 = vld [vmem:[%s541 + $0xc8] sm:$0xff]
        %v590 = vld [vmem:[%s541 + $0xd0] sm:$0xff]
        %v591 = vld [vmem:[%s541 + $0xd8] sm:$0xff]
        %v592 = vld [vmem:[%s541 + $0xe0] sm:$0xff]
        %v593 = vld [vmem:[%s541 + $0xe8] sm:$0xff]
        %v594 = vld [vmem:[%s541 + $0xf0] sm:$0xff]
        %v595 = vld [vmem:[%s541 + $0xf8] sm:$0xff]
        %596 = vset.pattern.permute.xlu0 0
        %597 = vperm.xlu0 %596, %v564
        %v598 = vpop.permute.xlu0 %597
        %599 = vset.pattern.permute.xlu0 0
        %600 = vperm.xlu0 %599, %v565
        %v601 = vpop.permute.xlu0 %600
        %602 = vset.pattern.permute.xlu0 0
        %603 = vperm.xlu0 %602, %v566
        %v604 = vpop.permute.xlu0 %603
        %605 = vset.pattern.permute.xlu0 0
        %606 = vperm.xlu0 %605, %v567
        %v607 = vpop.permute.xlu0 %606
        %608 = vset.pattern.permute.xlu0 0
        %609 = vperm.xlu0 %608, %v568
        %v610 = vpop.permute.xlu0 %609
        %611 = vset.pattern.permute.xlu0 0
        %612 = vperm.xlu0 %611, %v569
        %v613 = vpop.permute.xlu0 %612
        %614 = vset.pattern.permute.xlu0 0
        %615 = vperm.xlu0 %614, %v570
        %v616 = vpop.permute.xlu0 %615
        %617 = vset.pattern.permute.xlu0 0
        %618 = vperm.xlu0 %617, %v571
        %v619 = vpop.permute.xlu0 %618
        %620 = vset.pattern.permute.xlu0 0
        %621 = vperm.xlu0 %620, %v572
        %v622 = vpop.permute.xlu0 %621
        %623 = vset.pattern.permute.xlu0 0
        %624 = vperm.xlu0 %623, %v573
        %v625 = vpop.permute.xlu0 %624
        %626 = vset.pattern.permute.xlu0 0
        %627 = vperm.xlu0 %626, %v574
        %v628 = vpop.permute.xlu0 %627
        %629 = vset.pattern.permute.xlu0 0
        %630 = vperm.xlu0 %629, %v575
        %v631 = vpop.permute.xlu0 %630
        %632 = vset.pattern.permute.xlu0 0
        %633 = vperm.xlu0 %632, %v576
        %v634 = vpop.permute.xlu0 %633
        %635 = vset.pattern.permute.xlu0 0
        %636 = vperm.xlu0 %635, %v577
        %v637 = vpop.permute.xlu0 %636
        %638 = vset.pattern.permute.xlu0 0
        %639 = vperm.xlu0 %638, %v578
        %v640 = vpop.permute.xlu0 %639
        %641 = vset.pattern.permute.xlu0 0
        %642 = vperm.xlu0 %641, %v579
        %v643 = vpop.permute.xlu0 %642
        %644 = vset.pattern.permute.xlu0 0
        %645 = vperm.xlu0 %644, %v580
        %v646 = vpop.permute.xlu0 %645
        %647 = vset.pattern.permute.xlu0 0
        %648 = vperm.xlu0 %647, %v581
        %v649 = vpop.permute.xlu0 %648
        %650 = vset.pattern.permute.xlu0 0
        %651 = vperm.xlu0 %650, %v582
        %v652 = vpop.permute.xlu0 %651
        %653 = vset.pattern.permute.xlu0 0
        %654 = vperm.xlu0 %653, %v583
        %v655 = vpop.permute.xlu0 %654
        %656 = vset.pattern.permute.xlu0 0
        %657 = vperm.xlu0 %656, %v584
        %v658 = vpop.permute.xlu0 %657
        %659 = vset.pattern.permute.xlu0 0
        %660 = vperm.xlu0 %659, %v585
        %v661 = vpop.permute.xlu0 %660
        %662 = vset.pattern.permute.xlu0 0
        %663 = vperm.xlu0 %662, %v586
        %v664 = vpop.permute.xlu0 %663
        %665 = vset.pattern.permute.xlu0 0
        %666 = vperm.xlu0 %665, %v587
        %v667 = vpop.permute.xlu0 %666
        %668 = vset.pattern.permute.xlu0 0
        %669 = vperm.xlu0 %668, %v588
        %v670 = vpop.permute.xlu0 %669
        %671 = vset.pattern.permute.xlu0 0
        %672 = vperm.xlu0 %671, %v589
        %v673 = vpop.permute.xlu0 %672
        %674 = vset.pattern.permute.xlu0 0
        %675 = vperm.xlu0 %674, %v590
        %v676 = vpop.permute.xlu0 %675
        %677 = vset.pattern.permute.xlu0 0
        %678 = vperm.xlu0 %677, %v591
        %v679 = vpop.permute.xlu0 %678
        %680 = vset.pattern.permute.xlu0 0
        %681 = vperm.xlu0 %680, %v592
        %v682 = vpop.permute.xlu0 %681
        %683 = vset.pattern.permute.xlu0 0
        %684 = vperm.xlu0 %683, %v593
        %v685 = vpop.permute.xlu0 %684
        %686 = vset.pattern.permute.xlu0 0
        %687 = vperm.xlu0 %686, %v594
        %v688 = vpop.permute.xlu0 %687
        %689 = vset.pattern.permute.xlu0 0
        %690 = vperm.xlu0 %689, %v595
        %v691 = vpop.permute.xlu0 %690
        %vm692 = vcmp.eq.s32.totalorder %v563, %v598
        %vm693 = vcmp.eq.s32.totalorder %v563, %v601
        %vm694 = vcmp.eq.s32.totalorder %v563, %v604
        %vm695 = vcmp.eq.s32.totalorder %v563, %v607
        %vm696 = vcmp.eq.s32.totalorder %v563, %v610
        %vm697 = vcmp.eq.s32.totalorder %v563, %v613
        %vm698 = vcmp.eq.s32.totalorder %v563, %v616
        %vm699 = vcmp.eq.s32.totalorder %v563, %v619
        %vm700 = vcmp.eq.s32.totalorder %v563, %v622
        %vm701 = vcmp.eq.s32.totalorder %v563, %v625
        %vm702 = vcmp.eq.s32.totalorder %v563, %v628
        %vm703 = vcmp.eq.s32.totalorder %v563, %v631
        %vm704 = vcmp.eq.s32.totalorder %v563, %v634
        %vm705 = vcmp.eq.s32.totalorder %v563, %v637
        %vm706 = vcmp.eq.s32.totalorder %v563, %v640
        %vm707 = vcmp.eq.s32.totalorder %v563, %v643
        %vm708 = vcmp.eq.s32.totalorder %v563, %v646
        %vm709 = vcmp.eq.s32.totalorder %v563, %v649
        %vm710 = vcmp.eq.s32.totalorder %v563, %v652
        %vm711 = vcmp.eq.s32.totalorder %v563, %v655
        %vm712 = vcmp.eq.s32.totalorder %v563, %v658
        %vm713 = vcmp.eq.s32.totalorder %v563, %v661
        %vm714 = vcmp.eq.s32.totalorder %v563, %v664
        %vm715 = vcmp.eq.s32.totalorder %v563, %v667
        %vm716 = vcmp.eq.s32.totalorder %v563, %v670
        %vm717 = vcmp.eq.s32.totalorder %v563, %v673
        %vm718 = vcmp.eq.s32.totalorder %v563, %v676
        %vm719 = vcmp.eq.s32.totalorder %v563, %v679
        %vm720 = vcmp.eq.s32.totalorder %v563, %v682
        %vm721 = vcmp.eq.s32.totalorder %v563, %v685
        %vm722 = vcmp.eq.s32.totalorder %v563, %v688
        %vm723 = vcmp.eq.s32.totalorder %v563, %v691
        %v724 = vsel %vm692, 1, 0
        %v725 = vsel %vm693, 1, 0
        %v726 = vsel %vm694, 1, 0
        %v727 = vsel %vm695, 1, 0
        %v728 = vsel %vm696, 1, 0
        %v729 = vsel %vm697, 1, 0
        %v730 = vsel %vm698, 1, 0
        %v731 = vsel %vm699, 1, 0
        %v732 = vsel %vm700, 1, 0
        %v733 = vsel %vm701, 1, 0
        %v734 = vsel %vm702, 1, 0
        %v735 = vsel %vm703, 1, 0
        %v736 = vsel %vm704, 1, 0
        %v737 = vsel %vm705, 1, 0
        %v738 = vsel %vm706, 1, 0
        %v739 = vsel %vm707, 1, 0
        %v740 = vsel %vm708, 1, 0
        %v741 = vsel %vm709, 1, 0
        %v742 = vsel %vm710, 1, 0
        %v743 = vsel %vm711, 1, 0
        %v744 = vsel %vm712, 1, 0
        %v745 = vsel %vm713, 1, 0
        %v746 = vsel %vm714, 1, 0
        %v747 = vsel %vm715, 1, 0
        %v748 = vsel %vm716, 1, 0
        %v749 = vsel %vm717, 1, 0
        %v750 = vsel %vm718, 1, 0
        %v751 = vsel %vm719, 1, 0
        %v752 = vsel %vm720, 1, 0
        %v753 = vsel %vm721, 1, 0
        %v754 = vsel %vm722, 1, 0
        %v755 = vsel %vm723, 1, 0
        %v756 = vcvt.s32.f32 %v724
        %v757 = vcvt.s32.f32 %v725
        %v758 = vcvt.s32.f32 %v726
        %v759 = vcvt.s32.f32 %v727
        %v760 = vcvt.s32.f32 %v728
        %v761 = vcvt.s32.f32 %v729
        %v762 = vcvt.s32.f32 %v730
        %v763 = vcvt.s32.f32 %v731
        %v764 = vcvt.s32.f32 %v732
        %v765 = vcvt.s32.f32 %v733
        %v766 = vcvt.s32.f32 %v734
        %v767 = vcvt.s32.f32 %v735
        %v768 = vcvt.s32.f32 %v736
        %v769 = vcvt.s32.f32 %v737
        %v770 = vcvt.s32.f32 %v738
        %v771 = vcvt.s32.f32 %v739
        %v772 = vcvt.s32.f32 %v740
        %v773 = vcvt.s32.f32 %v741
        %v774 = vcvt.s32.f32 %v742
        %v775 = vcvt.s32.f32 %v743
        %v776 = vcvt.s32.f32 %v744
        %v777 = vcvt.s32.f32 %v745
        %v778 = vcvt.s32.f32 %v746
        %v779 = vcvt.s32.f32 %v747
        %v780 = vcvt.s32.f32 %v748
        %v781 = vcvt.s32.f32 %v749
        %v782 = vcvt.s32.f32 %v750
        %v783 = vcvt.s32.f32 %v751
        %v784 = vcvt.s32.f32 %v752
        %v785 = vcvt.s32.f32 %v753
        %v786 = vcvt.s32.f32 %v754
        %v787 = vcvt.s32.f32 %v755
        %v788 = vld [vmem:[%s547] sm:$0xff]
        %v789 = vld [vmem:[%s547 + $0x8] sm:$0xff]
        %v790 = vld [vmem:[%s547 + $0x10] sm:$0xff]
        %v791 = vld [vmem:[%s547 + $0x18] sm:$0xff]
        %v792 = vld [vmem:[%s547 + $0x20] sm:$0xff]
        %v793 = vld [vmem:[%s547 + $0x28] sm:$0xff]
        %v794 = vld [vmem:[%s547 + $0x30] sm:$0xff]
        %v795 = vld [vmem:[%s547 + $0x38] sm:$0xff]
        %v796 = vld [vmem:[%s547 + $0x40] sm:$0xff]
        %v797 = vld [vmem:[%s547 + $0x48] sm:$0xff]
        %v798 = vld [vmem:[%s547 + $0x50] sm:$0xff]
        %v799 = vld [vmem:[%s547 + $0x58] sm:$0xff]
        %v800 = vld [vmem:[%s547 + $0x60] sm:$0xff]
        %v801 = vld [vmem:[%s547 + $0x68] sm:$0xff]
        %v802 = vld [vmem:[%s547 + $0x70] sm:$0xff]
        %v803 = vld [vmem:[%s547 + $0x78] sm:$0xff]
        %v804 = vld [vmem:[%s547 + $0x80] sm:$0xff]
        %v805 = vld [vmem:[%s547 + $0x88] sm:$0xff]
        %v806 = vld [vmem:[%s547 + $0x90] sm:$0xff]
        %v807 = vld [vmem:[%s547 + $0x98] sm:$0xff]
        %v808 = vld [vmem:[%s547 + $0xa0] sm:$0xff]
        %v809 = vld [vmem:[%s547 + $0xa8] sm:$0xff]
        %v810 = vld [vmem:[%s547 + $0xb0] sm:$0xff]
        %v811 = vld [vmem:[%s547 + $0xb8] sm:$0xff]
        %v812 = vld [vmem:[%s547 + $0xc0] sm:$0xff]
        %v813 = vld [vmem:[%s547 + $0xc8] sm:$0xff]
        %v814 = vld [vmem:[%s547 + $0xd0] sm:$0xff]
        %v815 = vld [vmem:[%s547 + $0xd8] sm:$0xff]
        %v816 = vld [vmem:[%s547 + $0xe0] sm:$0xff]
        %v817 = vld [vmem:[%s547 + $0xe8] sm:$0xff]
        %v818 = vld [vmem:[%s547 + $0xf0] sm:$0xff]
        %v819 = vld [vmem:[%s547 + $0xf8] sm:$0xff]
        %820 = vset.pattern.permute.xlu0 0
        %821 = vperm.xlu0 %820, %v788
        %v822 = vpop.permute.xlu0 %821
        %823 = vset.pattern.permute.xlu0 0
        %824 = vperm.xlu0 %823, %v789
        %v825 = vpop.permute.xlu0 %824
        %826 = vset.pattern.permute.xlu0 0
        %827 = vperm.xlu0 %826, %v790
        %v828 = vpop.permute.xlu0 %827
        %829 = vset.pattern.permute.xlu0 0
        %830 = vperm.xlu0 %829, %v791
        %v831 = vpop.permute.xlu0 %830
        %832 = vset.pattern.permute.xlu0 0
        %833 = vperm.xlu0 %832, %v792
        %v834 = vpop.permute.xlu0 %833
        %835 = vset.pattern.permute.xlu0 0
        %836 = vperm.xlu0 %835, %v793
        %v837 = vpop.permute.xlu0 %836
        %838 = vset.pattern.permute.xlu0 0
        %839 = vperm.xlu0 %838, %v794
        %v840 = vpop.permute.xlu0 %839
        %841 = vset.pattern.permute.xlu0 0
        %842 = vperm.xlu0 %841, %v795
        %v843 = vpop.permute.xlu0 %842
        %844 = vset.pattern.permute.xlu0 0
        %845 = vperm.xlu0 %844, %v796
        %v846 = vpop.permute.xlu0 %845
        %847 = vset.pattern.permute.xlu0 0
        %848 = vperm.xlu0 %847, %v797
        %v849 = vpop.permute.xlu0 %848
        %850 = vset.pattern.permute.xlu0 0
        %851 = vperm.xlu0 %850, %v798
        %v852 = vpop.permute.xlu0 %851
        %853 = vset.pattern.permute.xlu0 0
        %854 = vperm.xlu0 %853, %v799
        %v855 = vpop.permute.xlu0 %854
        %856 = vset.pattern.permute.xlu0 0
        %857 = vperm.xlu0 %856, %v800
        %v858 = vpop.permute.xlu0 %857
        %859 = vset.pattern.permute.xlu0 0
        %860 = vperm.xlu0 %859, %v801
        %v861 = vpop.permute.xlu0 %860
        %862 = vset.pattern.permute.xlu0 0
        %863 = vperm.xlu0 %862, %v802
        %v864 = vpop.permute.xlu0 %863
        %865 = vset.pattern.permute.xlu0 0
        %866 = vperm.xlu0 %865, %v803
        %v867 = vpop.permute.xlu0 %866
        %868 = vset.pattern.permute.xlu0 0
        %869 = vperm.xlu0 %868, %v804
        %v870 = vpop.permute.xlu0 %869
        %871 = vset.pattern.permute.xlu0 0
        %872 = vperm.xlu0 %871, %v805
        %v873 = vpop.permute.xlu0 %872
        %874 = vset.pattern.permute.xlu0 0
        %875 = vperm.xlu0 %874, %v806
        %v876 = vpop.permute.xlu0 %875
        %877 = vset.pattern.permute.xlu0 0
        %878 = vperm.xlu0 %877, %v807
        %v879 = vpop.permute.xlu0 %878
        %880 = vset.pattern.permute.xlu0 0
        %881 = vperm.xlu0 %880, %v808
        %v882 = vpop.permute.xlu0 %881
        %883 = vset.pattern.permute.xlu0 0
        %884 = vperm.xlu0 %883, %v809
        %v885 = vpop.permute.xlu0 %884
        %886 = vset.pattern.permute.xlu0 0
        %887 = vperm.xlu0 %886, %v810
        %v888 = vpop.permute.xlu0 %887
        %889 = vset.pattern.permute.xlu0 0
        %890 = vperm.xlu0 %889, %v811
        %v891 = vpop.permute.xlu0 %890
        %892 = vset.pattern.permute.xlu0 0
        %893 = vperm.xlu0 %892, %v812
        %v894 = vpop.permute.xlu0 %893
        %895 = vset.pattern.permute.xlu0 0
        %896 = vperm.xlu0 %895, %v813
        %v897 = vpop.permute.xlu0 %896
        %898 = vset.pattern.permute.xlu0 0
        %899 = vperm.xlu0 %898, %v814
        %v900 = vpop.permute.xlu0 %899
        %901 = vset.pattern.permute.xlu0 0
        %902 = vperm.xlu0 %901, %v815
        %v903 = vpop.permute.xlu0 %902
        %904 = vset.pattern.permute.xlu0 0
        %905 = vperm.xlu0 %904, %v816
        %v906 = vpop.permute.xlu0 %905
        %907 = vset.pattern.permute.xlu0 0
        %908 = vperm.xlu0 %907, %v817
        %v909 = vpop.permute.xlu0 %908
        %910 = vset.pattern.permute.xlu0 0
        %911 = vperm.xlu0 %910, %v818
        %v912 = vpop.permute.xlu0 %911
        %913 = vset.pattern.permute.xlu0 0
        %914 = vperm.xlu0 %913, %v819
        %v915 = vpop.permute.xlu0 %914
        %vm916 = vcmp.eq.s32.totalorder %v563, %v822
        %vm917 = vcmp.eq.s32.totalorder %v563, %v825
        %vm918 = vcmp.eq.s32.totalorder %v563, %v828
        %vm919 = vcmp.eq.s32.totalorder %v563, %v831
        %vm920 = vcmp.eq.s32.totalorder %v563, %v834
        %vm921 = vcmp.eq.s32.totalorder %v563, %v837
        %vm922 = vcmp.eq.s32.totalorder %v563, %v840
        %vm923 = vcmp.eq.s32.totalorder %v563, %v843
        %vm924 = vcmp.eq.s32.totalorder %v563, %v846
        %vm925 = vcmp.eq.s32.totalorder %v563, %v849
        %vm926 = vcmp.eq.s32.totalorder %v563, %v852
        %vm927 = vcmp.eq.s32.totalorder %v563, %v855
        %vm928 = vcmp.eq.s32.totalorder %v563, %v858
        %vm929 = vcmp.eq.s32.totalorder %v563, %v861
        %vm930 = vcmp.eq.s32.totalorder %v563, %v864
        %vm931 = vcmp.eq.s32.totalorder %v563, %v867
        %vm932 = vcmp.eq.s32.totalorder %v563, %v870
        %vm933 = vcmp.eq.s32.totalorder %v563, %v873
        %vm934 = vcmp.eq.s32.totalorder %v563, %v876
        %vm935 = vcmp.eq.s32.totalorder %v563, %v879
        %vm936 = vcmp.eq.s32.totalorder %v563, %v882
        %vm937 = vcmp.eq.s32.totalorder %v563, %v885
        %vm938 = vcmp.eq.s32.totalorder %v563, %v888
        %vm939 = vcmp.eq.s32.totalorder %v563, %v891
        %vm940 = vcmp.eq.s32.totalorder %v563, %v894
        %vm941 = vcmp.eq.s32.totalorder %v563, %v897
        %vm942 = vcmp.eq.s32.totalorder %v563, %v900
        %vm943 = vcmp.eq.s32.totalorder %v563, %v903
        %vm944 = vcmp.eq.s32.totalorder %v563, %v906
        %vm945 = vcmp.eq.s32.totalorder %v563, %v909
        %vm946 = vcmp.eq.s32.totalorder %v563, %v912
        %vm947 = vcmp.eq.s32.totalorder %v563, %v915
        %v948 = vsel %vm916, 1, 0
        %v949 = vsel %vm917, 1, 0
        %v950 = vsel %vm918, 1, 0
        %v951 = vsel %vm919, 1, 0
        %v952 = vsel %vm920, 1, 0
        %v953 = vsel %vm921, 1, 0
        %v954 = vsel %vm922, 1, 0
        %v955 = vsel %vm923, 1, 0
        %v956 = vsel %vm924, 1, 0
        %v957 = vsel %vm925, 1, 0
        %v958 = vsel %vm926, 1, 0
        %v959 = vsel %vm927, 1, 0
        %v960 = vsel %vm928, 1, 0
        %v961 = vsel %vm929, 1, 0
        %v962 = vsel %vm930, 1, 0
        %v963 = vsel %vm931, 1, 0
        %v964 = vsel %vm932, 1, 0
        %v965 = vsel %vm933, 1, 0
        %v966 = vsel %vm934, 1, 0
        %v967 = vsel %vm935, 1, 0
        %v968 = vsel %vm936, 1, 0
        %v969 = vsel %vm937, 1, 0
        %v970 = vsel %vm938, 1, 0
        %v971 = vsel %vm939, 1, 0
        %v972 = vsel %vm940, 1, 0
        %v973 = vsel %vm941, 1, 0
        %v974 = vsel %vm942, 1, 0
        %v975 = vsel %vm943, 1, 0
        %v976 = vsel %vm944, 1, 0
        %v977 = vsel %vm945, 1, 0
        %v978 = vsel %vm946, 1, 0
        %v979 = vsel %vm947, 1, 0
        %v980 = vcvt.s32.f32 %v948
        %v981 = vcvt.s32.f32 %v949
        %v982 = vcvt.s32.f32 %v950
        %v983 = vcvt.s32.f32 %v951
        %v984 = vcvt.s32.f32 %v952
        %v985 = vcvt.s32.f32 %v953
        %v986 = vcvt.s32.f32 %v954
        %v987 = vcvt.s32.f32 %v955
        %v988 = vcvt.s32.f32 %v956
        %v989 = vcvt.s32.f32 %v957
        %v990 = vcvt.s32.f32 %v958
        %v991 = vcvt.s32.f32 %v959
        %v992 = vcvt.s32.f32 %v960
        %v993 = vcvt.s32.f32 %v961
        %v994 = vcvt.s32.f32 %v962
        %v995 = vcvt.s32.f32 %v963
        %v996 = vcvt.s32.f32 %v964
        %v997 = vcvt.s32.f32 %v965
        %v998 = vcvt.s32.f32 %v966
        %v999 = vcvt.s32.f32 %v967
        %v1000 = vcvt.s32.f32 %v968
        %v1001 = vcvt.s32.f32 %v969
        %v1002 = vcvt.s32.f32 %v970
        %v1003 = vcvt.s32.f32 %v971
        %v1004 = vcvt.s32.f32 %v972
        %v1005 = vcvt.s32.f32 %v973
        %v1006 = vcvt.s32.f32 %v974
        %v1007 = vcvt.s32.f32 %v975
        %v1008 = vcvt.s32.f32 %v976
        %v1009 = vcvt.s32.f32 %v977
        %v1010 = vcvt.s32.f32 %v978
        %v1011 = vcvt.s32.f32 %v979
        %v1012 = vld [vmem:[%s4] sm:$0xff]
        %v1013 = vld [vmem:[%s4 + $0x8] sm:$0xff]
        %v1014 = vld [vmem:[%s4 + $0x10] sm:$0xff]
        %v1015 = vld [vmem:[%s4 + $0x18] sm:$0xff]
        %v1016 = vld [vmem:[%s4 + $0x20] sm:$0xff]
        %v1017 = vld [vmem:[%s4 + $0x28] sm:$0xff]
        %v1018 = vld [vmem:[%s4 + $0x30] sm:$0xff]
        %v1019 = vld [vmem:[%s4 + $0x38] sm:$0xff]
        %v1020 = vld [vmem:[%s4 + $0x40] sm:$0xff]
        %v1021 = vld [vmem:[%s4 + $0x48] sm:$0xff]
        %v1022 = vld [vmem:[%s4 + $0x50] sm:$0xff]
        %v1023 = vld [vmem:[%s4 + $0x58] sm:$0xff]
        %v1024 = vld [vmem:[%s4 + $0x60] sm:$0xff]
        %v1025 = vld [vmem:[%s4 + $0x68] sm:$0xff]
        %v1026 = vld [vmem:[%s4 + $0x70] sm:$0xff]
        %v1027 = vld [vmem:[%s4 + $0x78] sm:$0xff]
        %1028 = vmatprep.subr.mxu0 0.0
        %1029 = vmatpush1.msra.mxu0 %v1012
        %1030 = vmatprep.subr.mxu0 0.0
        %1031 = vmatpush1.msra.mxu0 %v1013
        %1032 = vmatprep.subr.mxu0 0.0
        %1033 = vmatpush1.msra.mxu0 %v1014
        %1034 = vmatprep.subr.mxu0 0.0
        %1035 = vmatpush1.msra.mxu0 %v1015
        %1036 = vmatprep.subr.mxu0 0.0
        %1037 = vmatpush1.msra.mxu0 %v1016
        %1038 = vmatprep.subr.mxu0 0.0
        %1039 = vmatpush1.msra.mxu0 %v1017
        %1040 = vmatprep.subr.mxu0 0.0
        %1041 = vmatpush1.msra.mxu0 %v1018
        %1042 = vmatprep.subr.mxu0 0.0
        %1043 = vmatpush1.msra.mxu0 %v1019
        %1044 = vmatprep.subr.mxu0 0.0
        %1045 = vmatpush1.msra.mxu0 %v1020
        %1046 = vmatprep.subr.mxu0 0.0
        %1047 = vmatpush1.msra.mxu0 %v1021
        %1048 = vmatprep.subr.mxu0 0.0
        %1049 = vmatpush1.msra.mxu0 %v1022
        %1050 = vmatprep.subr.mxu0 0.0
        %1051 = vmatpush1.msra.mxu0 %v1023
        %1052 = vmatprep.subr.mxu0 0.0
        %1053 = vmatpush1.msra.mxu0 %v1024
        %1054 = vmatprep.subr.mxu0 0.0
        %1055 = vmatpush1.msra.mxu0 %v1025
        %1056 = vmatprep.subr.mxu0 0.0
        %1057 = vmatpush1.msra.mxu0 %v1026
        %1058 = vmatprep.subr.mxu0 0.0
        %1059 = vmatpush1.msra.mxu0 %v1027
        %1060 = vmatprep.subr.mxu0 0.0
        %1061 = vmatpush1.msra.mxu0 0.0
        %1062 = vmatprep.subr.mxu0 0.0
        %1063 = vmatpush1.msra.mxu0 0.0
        %1064 = vmatprep.subr.mxu0 0.0
        %1065 = vmatpush1.msra.mxu0 0.0
        %1066 = vmatprep.subr.mxu0 0.0
        %1067 = vmatpush1.msra.mxu0 0.0
        %1068 = vmatprep.subr.mxu0 0.0
        %1069 = vmatpush1.msra.mxu0 0.0
        %1070 = vmatprep.subr.mxu0 0.0
        %1071 = vmatpush1.msra.mxu0 0.0
        %1072 = vmatprep.subr.mxu0 0.0
        %1073 = vmatpush1.msra.mxu0 0.0
        %1074 = vmatprep.subr.mxu0 0.0
        %1075 = vmatpush1.msra.mxu0 0.0
        %1076 = vmatprep.subr.mxu0 0.0
        %1077 = vmatpush1.msra.mxu0 0.0
        %1078 = vmatprep.subr.mxu0 0.0
        %1079 = vmatpush1.msra.mxu0 0.0
        %1080 = vmatprep.subr.mxu0 0.0
        %1081 = vmatpush1.msra.mxu0 0.0
        %1082 = vmatprep.subr.mxu0 0.0
        %1083 = vmatpush1.msra.mxu0 0.0
        %1084 = vmatprep.subr.mxu0 0.0
        %1085 = vmatpush1.msra.mxu0 0.0
        %1086 = vmatprep.subr.mxu0 0.0
        %1087 = vmatpush1.msra.mxu0 0.0
        %1088 = vmatprep.subr.mxu0 0.0
        %1089 = vmatpush1.msra.mxu0 0.0
        %1090 = vmatprep.subr.mxu0 0.0
        %1091 = vmatpush1.msra.mxu0 0.0
        %1092 = vmatprep.mubr.f32.mxu0 0.0
        %1093 = vmatmul.mubr.f32.gmra.mrb[0].mxu0 %v756
        %v1094 = vpop.f32.mrb[0].mxu0
        %v1095 = vadd.f32 0.0, %v1094
        %v1096 = vpop.f32.mrb[0].mxu0
        %1097 = vmatprep.mubr.f32.mxu0 0.0
        %1098 = vmatmul.mubr.f32.gmra.mrb[0].mxu0 %v757
        %v1099 = vpop.f32.mrb[0].mxu0
        %v1100 = vadd.f32 0.0, %v1099
        %v1101 = vpop.f32.mrb[0].mxu0
        %1102 = vmatprep.mubr.f32.mxu0 0.0
        %1103 = vmatmul.mubr.f32.gmra.mrb[0].mxu0 %v758
        %v1104 = vpop.f32.mrb[0].mxu0
        %v1105 = vadd.f32 0.0, %v1104
        %v1106 = vpop.f32.mrb[0].mxu0
        %1107 = vmatprep.mubr.f32.mxu0 0.0
        %1108 = vmatmul.mubr.f32.gmra.mrb[0].mxu0 %v759
        %v1109 = vpop.f32.mrb[0].mxu0
        %v1110 = vadd.f32 0.0, %v1109
        %v1111 = vpop.f32.mrb[0].mxu0
        %1112 = vmatprep.mubr.f32.mxu0 0.0
        %1113 = vmatmul.mubr.f32.gmra.mrb[0].mxu0 %v760
        %v1114 = vpop.f32.mrb[0].mxu0
        %v1115 = vadd.f32 0.0, %v1114
        %v1116 = vpop.f32.mrb[0].mxu0
        %1117 = vmatprep.mubr.f32.mxu0 0.0
        %1118 = vmatmul.mubr.f32.gmra.mrb[0].mxu0 %v761
        %v1119 = vpop.f32.mrb[0].mxu0
        %v1120 = vadd.f32 0.0, %v1119
        %v1121 = vpop.f32.mrb[0].mxu0
        %1122 = vmatprep.mubr.f32.mxu0 0.0
        %1123 = vmatmul.mubr.f32.gmra.mrb[0].mxu0 %v762
        %v1124 = vpop.f32.mrb[0].mxu0
        %v1125 = vadd.f32 0.0, %v1124
        %v1126 = vpop.f32.mrb[0].mxu0
        %1127 = vmatprep.mubr.f32.mxu0 0.0
        %1128 = vmatmul.mubr.f32.gmra.mrb[0].mxu0 %v763
        %v1129 = vpop.f32.mrb[0].mxu0
        %v1130 = vadd.f32 0.0, %v1129
        %v1131 = vpop.f32.mrb[0].mxu0
        %1132 = vmatprep.mubr.f32.mxu0 0.0
        %1133 = vmatmul.mubr.f32.gmra.mrb[0].mxu0 %v764
        %v1134 = vpop.f32.mrb[0].mxu0
        %v1135 = vadd.f32 0.0, %v1134
        %v1136 = vpop.f32.mrb[0].mxu0
        %1137 = vmatprep.mubr.f32.mxu0 0.0
        %1138 = vmatmul.mubr.f32.gmra.mrb[0].mxu0 %v765
        %v1139 = vpop.f32.mrb[0].mxu0
        %v1140 = vadd.f32 0.0, %v1139
        %v1141 = vpop.f32.mrb[0].mxu0
        %1142 = vmatprep.mubr.f32.mxu0 0.0
        %1143 = vmatmul.mubr.f32.gmra.mrb[0].mxu0 %v766
        %v1144 = vpop.f32.mrb[0].mxu0
        %v1145 = vadd.f32 0.0, %v1144
        %v1146 = vpop.f32.mrb[0].mxu0
        %1147 = vmatprep.mubr.f32.mxu0 0.0
        %1148 = vmatmul.mubr.f32.gmra.mrb[0].mxu0 %v767
        %v1149 = vpop.f32.mrb[0].mxu0
        %v1150 = vadd.f32 0.0, %v1149
        %v1151 = vpop.f32.mrb[0].mxu0
        %1152 = vmatprep.mubr.f32.mxu0 0.0
        %1153 = vmatmul.mubr.f32.gmra.mrb[0].mxu0 %v768
        %v1154 = vpop.f32.mrb[0].mxu0
        %v1155 = vadd.f32 0.0, %v1154
        %v1156 = vpop.f32.mrb[0].mxu0
        %1157 = vmatprep.mubr.f32.mxu0 0.0
        %1158 = vmatmul.mubr.f32.gmra.mrb[0].mxu0 %v769
        %v1159 = vpop.f32.mrb[0].mxu0
        %v1160 = vadd.f32 0.0, %v1159
        %v1161 = vpop.f32.mrb[0].mxu0
        %1162 = vmatprep.mubr.f32.mxu0 0.0
        %1163 = vmatmul.mubr.f32.gmra.mrb[0].mxu0 %v770
        %v1164 = vpop.f32.mrb[0].mxu0
        %v1165 = vadd.f32 0.0, %v1164
        %v1166 = vpop.f32.mrb[0].mxu0
        %1167 = vmatprep.mubr.f32.mxu0 0.0
        %1168 = vmatmul.mubr.f32.gmra.mrb[0].mxu0 %v771
        %v1169 = vpop.f32.mrb[0].mxu0
        %v1170 = vadd.f32 0.0, %v1169
        %v1171 = vpop.f32.mrb[0].mxu0
        %1172 = vmatprep.mubr.f32.mxu0 0.0
        %1173 = vmatmul.mubr.f32.gmra.mrb[0].mxu0 %v772
        %v1174 = vpop.f32.mrb[0].mxu0
        %v1175 = vadd.f32 0.0, %v1174
        %v1176 = vpop.f32.mrb[0].mxu0
        %1177 = vmatprep.mubr.f32.mxu0 0.0
        %1178 = vmatmul.mubr.f32.gmra.mrb[0].mxu0 %v773
        %v1179 = vpop.f32.mrb[0].mxu0
        %v1180 = vadd.f32 0.0, %v1179
        %v1181 = vpop.f32.mrb[0].mxu0
        %1182 = vmatprep.mubr.f32.mxu0 0.0
        %1183 = vmatmul.mubr.f32.gmra.mrb[0].mxu0 %v774
        %v1184 = vpop.f32.mrb[0].mxu0
        %v1185 = vadd.f32 0.0, %v1184
        %v1186 = vpop.f32.mrb[0].mxu0
        %1187 = vmatprep.mubr.f32.mxu0 0.0
        %1188 = vmatmul.mubr.f32.gmra.mrb[0].mxu0 %v775
        %v1189 = vpop.f32.mrb[0].mxu0
        %v1190 = vadd.f32 0.0, %v1189
        %v1191 = vpop.f32.mrb[0].mxu0
        %1192 = vmatprep.mubr.f32.mxu0 0.0
        %1193 = vmatmul.mubr.f32.gmra.mrb[0].mxu0 %v776
        %v1194 = vpop.f32.mrb[0].mxu0
        %v1195 = vadd.f32 0.0, %v1194
        %v1196 = vpop.f32.mrb[0].mxu0
        %1197 = vmatprep.mubr.f32.mxu0 0.0
        %1198 = vmatmul.mubr.f32.gmra.mrb[0].mxu0 %v777
        %v1199 = vpop.f32.mrb[0].mxu0
        %v1200 = vadd.f32 0.0, %v1199
        %v1201 = vpop.f32.mrb[0].mxu0
        %1202 = vmatprep.mubr.f32.mxu0 0.0
        %1203 = vmatmul.mubr.f32.gmra.mrb[0].mxu0 %v778
        %v1204 = vpop.f32.mrb[0].mxu0
        %v1205 = vadd.f32 0.0, %v1204
        %v1206 = vpop.f32.mrb[0].mxu0
        %1207 = vmatprep.mubr.f32.mxu0 0.0
        %1208 = vmatmul.mubr.f32.gmra.mrb[0].mxu0 %v779
        %v1209 = vpop.f32.mrb[0].mxu0
        %v1210 = vadd.f32 0.0, %v1209
        %v1211 = vpop.f32.mrb[0].mxu0
        %1212 = vmatprep.mubr.f32.mxu0 0.0
        %1213 = vmatmul.mubr.f32.gmra.mrb[0].mxu0 %v780
        %v1214 = vpop.f32.mrb[0].mxu0
        %v1215 = vadd.f32 0.0, %v1214
        %v1216 = vpop.f32.mrb[0].mxu0
        %1217 = vmatprep.mubr.f32.mxu0 0.0
        %1218 = vmatmul.mubr.f32.gmra.mrb[0].mxu0 %v781
        %v1219 = vpop.f32.mrb[0].mxu0
        %v1220 = vadd.f32 0.0, %v1219
        %v1221 = vpop.f32.mrb[0].mxu0
        %1222 = vmatprep.mubr.f32.mxu0 0.0
        %1223 = vmatmul.mubr.f32.gmra.mrb[0].mxu0 %v782
        %v1224 = vpop.f32.mrb[0].mxu0
        %v1225 = vadd.f32 0.0, %v1224
        %v1226 = vpop.f32.mrb[0].mxu0
        %1227 = vmatprep.mubr.f32.mxu0 0.0
        %1228 = vmatmul.mubr.f32.gmra.mrb[0].mxu0 %v783
        %v1229 = vpop.f32.mrb[0].mxu0
        %v1230 = vadd.f32 0.0, %v1229
        %v1231 = vpop.f32.mrb[0].mxu0
        %1232 = vmatprep.mubr.f32.mxu0 0.0
        %1233 = vmatmul.mubr.f32.gmra.mrb[0].mxu0 %v784
        %v1234 = vpop.f32.mrb[0].mxu0
        %v1235 = vadd.f32 0.0, %v1234
        %v1236 = vpop.f32.mrb[0].mxu0
        %1237 = vmatprep.mubr.f32.mxu0 0.0
        %1238 = vmatmul.mubr.f32.gmra.mrb[0].mxu0 %v785
        %v1239 = vpop.f32.mrb[0].mxu0
        %v1240 = vadd.f32 0.0, %v1239
        %v1241 = vpop.f32.mrb[0].mxu0
        %1242 = vmatprep.mubr.f32.mxu0 0.0
        %1243 = vmatmul.mubr.f32.gmra.mrb[0].mxu0 %v786
        %v1244 = vpop.f32.mrb[0].mxu0
        %v1245 = vadd.f32 0.0, %v1244
        %v1246 = vpop.f32.mrb[0].mxu0
        %1247 = vmatprep.mubr.f32.mxu0 0.0
        %1248 = vmatmul.mubr.f32.gmra.mrb[0].mxu0 %v787
        %v1249 = vpop.f32.mrb[0].mxu0
        %v1250 = vadd.f32 0.0, %v1249
        %v1251 = vpop.f32.mrb[0].mxu0
        %1252 = vdwg.mxu0
        %1253 = vmatprep.subr.mxu0 0.0
        %1254 = vmatpush1.msra.mxu0 %v1012
        %1255 = vmatprep.subr.mxu0 0.0
        %1256 = vmatpush1.msra.mxu0 %v1013
        %1257 = vmatprep.subr.mxu0 0.0
        %1258 = vmatpush1.msra.mxu0 %v1014
        %1259 = vmatprep.subr.mxu0 0.0
        %1260 = vmatpush1.msra.mxu0 %v1015
        %1261 = vmatprep.subr.mxu0 0.0
        %1262 = vmatpush1.msra.mxu0 %v1016
        %1263 = vmatprep.subr.mxu0 0.0
        %1264 = vmatpush1.msra.mxu0 %v1017
        %1265 = vmatprep.subr.mxu0 0.0
        %1266 = vmatpush1.msra.mxu0 %v1018
        %1267 = vmatprep.subr.mxu0 0.0
        %1268 = vmatpush1.msra.mxu0 %v1019
        %1269 = vmatprep.subr.mxu0 0.0
        %1270 = vmatpush1.msra.mxu0 %v1020
        %1271 = vmatprep.subr.mxu0 0.0
        %1272 = vmatpush1.msra.mxu0 %v1021
        %1273 = vmatprep.subr.mxu0 0.0
        %1274 = vmatpush1.msra.mxu0 %v1022
        %1275 = vmatprep.subr.mxu0 0.0
        %1276 = vmatpush1.msra.mxu0 %v1023
        %1277 = vmatprep.subr.mxu0 0.0
        %1278 = vmatpush1.msra.mxu0 %v1024
        %1279 = vmatprep.subr.mxu0 0.0
        %1280 = vmatpush1.msra.mxu0 %v1025
        %1281 = vmatprep.subr.mxu0 0.0
        %1282 = vmatpush1.msra.mxu0 %v1026
        %1283 = vmatprep.subr.mxu0 0.0
        %1284 = vmatpush1.msra.mxu0 %v1027
        %1285 = vmatprep.subr.mxu0 0.0
        %1286 = vmatpush1.msra.mxu0 0.0
        %1287 = vmatprep.subr.mxu0 0.0
        %1288 = vmatpush1.msra.mxu0 0.0
        %1289 = vmatprep.subr.mxu0 0.0
        %1290 = vmatpush1.msra.mxu0 0.0
        %1291 = vmatprep.subr.mxu0 0.0
        %1292 = vmatpush1.msra.mxu0 0.0
        %1293 = vmatprep.subr.mxu0 0.0
        %1294 = vmatpush1.msra.mxu0 0.0
        %1295 = vmatprep.subr.mxu0 0.0
        %1296 = vmatpush1.msra.mxu0 0.0
        %1297 = vmatprep.subr.mxu0 0.0
        %1298 = vmatpush1.msra.mxu0 0.0
        %1299 = vmatprep.subr.mxu0 0.0
        %1300 = vmatpush1.msra.mxu0 0.0
        %1301 = vmatprep.subr.mxu0 0.0
        %1302 = vmatpush1.msra.mxu0 0.0
        %1303 = vmatprep.subr.mxu0 0.0
        %1304 = vmatpush1.msra.mxu0 0.0
        %1305 = vmatprep.subr.mxu0 0.0
        %1306 = vmatpush1.msra.mxu0 0.0
        %1307 = vmatprep.subr.mxu0 0.0
        %1308 = vmatpush1.msra.mxu0 0.0
        %1309 = vmatprep.subr.mxu0 0.0
        %1310 = vmatpush1.msra.mxu0 0.0
        %1311 = vmatprep.subr.mxu0 0.0
        %1312 = vmatpush1.msra.mxu0 0.0
        %1313 = vmatprep.subr.mxu0 0.0
        %1314 = vmatpush1.msra.mxu0 0.0
        %1315 = vmatprep.subr.mxu0 0.0
        %1316 = vmatpush1.msra.mxu0 0.0
        %1317 = vmatprep.mubr.f32.mxu0 0.0
        %1318 = vmatmul.mubr.f32.gmra.mrb[0].mxu0 %v980
        %v1319 = vpop.f32.mrb[0].mxu0
        %v1320 = vadd.f32 0.0, %v1319
        %v1321 = vpop.f32.mrb[0].mxu0
        %1322 = vmatprep.mubr.f32.mxu0 0.0
        %1323 = vmatmul.mubr.f32.gmra.mrb[0].mxu0 %v981
        %v1324 = vpop.f32.mrb[0].mxu0
        %v1325 = vadd.f32 0.0, %v1324
        %v1326 = vpop.f32.mrb[0].mxu0
        %1327 = vmatprep.mubr.f32.mxu0 0.0
        %1328 = vmatmul.mubr.f32.gmra.mrb[0].mxu0 %v982
        %v1329 = vpop.f32.mrb[0].mxu0
        %v1330 = vadd.f32 0.0, %v1329
        %v1331 = vpop.f32.mrb[0].mxu0
        %1332 = vmatprep.mubr.f32.mxu0 0.0
        %1333 = vmatmul.mubr.f32.gmra.mrb[0].mxu0 %v983
        %v1334 = vpop.f32.mrb[0].mxu0
        %v1335 = vadd.f32 0.0, %v1334
        %v1336 = vpop.f32.mrb[0].mxu0
        %1337 = vmatprep.mubr.f32.mxu0 0.0
        %1338 = vmatmul.mubr.f32.gmra.mrb[0].mxu0 %v984
        %v1339 = vpop.f32.mrb[0].mxu0
        %v1340 = vadd.f32 0.0, %v1339
        %v1341 = vpop.f32.mrb[0].mxu0
        %1342 = vmatprep.mubr.f32.mxu0 0.0
        %1343 = vmatmul.mubr.f32.gmra.mrb[0].mxu0 %v985
        %v1344 = vpop.f32.mrb[0].mxu0
        %v1345 = vadd.f32 0.0, %v1344
        %v1346 = vpop.f32.mrb[0].mxu0
        %1347 = vmatprep.mubr.f32.mxu0 0.0
        %1348 = vmatmul.mubr.f32.gmra.mrb[0].mxu0 %v986
        %v1349 = vpop.f32.mrb[0].mxu0
        %v1350 = vadd.f32 0.0, %v1349
        %v1351 = vpop.f32.mrb[0].mxu0
        %1352 = vmatprep.mubr.f32.mxu0 0.0
        %1353 = vmatmul.mubr.f32.gmra.mrb[0].mxu0 %v987
        %v1354 = vpop.f32.mrb[0].mxu0
        %v1355 = vadd.f32 0.0, %v1354
        %v1356 = vpop.f32.mrb[0].mxu0
        %1357 = vmatprep.mubr.f32.mxu0 0.0
        %1358 = vmatmul.mubr.f32.gmra.mrb[0].mxu0 %v988
        %v1359 = vpop.f32.mrb[0].mxu0
        %v1360 = vadd.f32 0.0, %v1359
        %v1361 = vpop.f32.mrb[0].mxu0
        %1362 = vmatprep.mubr.f32.mxu0 0.0
        %1363 = vmatmul.mubr.f32.gmra.mrb[0].mxu0 %v989
        %v1364 = vpop.f32.mrb[0].mxu0
        %v1365 = vadd.f32 0.0, %v1364
        %v1366 = vpop.f32.mrb[0].mxu0
        %1367 = vmatprep.mubr.f32.mxu0 0.0
        %1368 = vmatmul.mubr.f32.gmra.mrb[0].mxu0 %v990
        %v1369 = vpop.f32.mrb[0].mxu0
        %v1370 = vadd.f32 0.0, %v1369
        %v1371 = vpop.f32.mrb[0].mxu0
        %1372 = vmatprep.mubr.f32.mxu0 0.0
        %1373 = vmatmul.mubr.f32.gmra.mrb[0].mxu0 %v991
        %v1374 = vpop.f32.mrb[0].mxu0
        %v1375 = vadd.f32 0.0, %v1374
        %v1376 = vpop.f32.mrb[0].mxu0
        %1377 = vmatprep.mubr.f32.mxu0 0.0
        %1378 = vmatmul.mubr.f32.gmra.mrb[0].mxu0 %v992
        %v1379 = vpop.f32.mrb[0].mxu0
        %v1380 = vadd.f32 0.0, %v1379
        %v1381 = vpop.f32.mrb[0].mxu0
        %1382 = vmatprep.mubr.f32.mxu0 0.0
        %1383 = vmatmul.mubr.f32.gmra.mrb[0].mxu0 %v993
        %v1384 = vpop.f32.mrb[0].mxu0
        %v1385 = vadd.f32 0.0, %v1384
        %v1386 = vpop.f32.mrb[0].mxu0
        %1387 = vmatprep.mubr.f32.mxu0 0.0
        %1388 = vmatmul.mubr.f32.gmra.mrb[0].mxu0 %v994
        %v1389 = vpop.f32.mrb[0].mxu0
        %v1390 = vadd.f32 0.0, %v1389
        %v1391 = vpop.f32.mrb[0].mxu0
        %1392 = vmatprep.mubr.f32.mxu0 0.0
        %1393 = vmatmul.mubr.f32.gmra.mrb[0].mxu0 %v995
        %v1394 = vpop.f32.mrb[0].mxu0
        %v1395 = vadd.f32 0.0, %v1394
        %v1396 = vpop.f32.mrb[0].mxu0
        %1397 = vmatprep.mubr.f32.mxu0 0.0
        %1398 = vmatmul.mubr.f32.gmra.mrb[0].mxu0 %v996
        %v1399 = vpop.f32.mrb[0].mxu0
        %v1400 = vadd.f32 0.0, %v1399
        %v1401 = vpop.f32.mrb[0].mxu0
        %1402 = vmatprep.mubr.f32.mxu0 0.0
        %1403 = vmatmul.mubr.f32.gmra.mrb[0].mxu0 %v997
        %v1404 = vpop.f32.mrb[0].mxu0
        %v1405 = vadd.f32 0.0, %v1404
        %v1406 = vpop.f32.mrb[0].mxu0
        %1407 = vmatprep.mubr.f32.mxu0 0.0
        %1408 = vmatmul.mubr.f32.gmra.mrb[0].mxu0 %v998
        %v1409 = vpop.f32.mrb[0].mxu0
        %v1410 = vadd.f32 0.0, %v1409
        %v1411 = vpop.f32.mrb[0].mxu0
        %1412 = vmatprep.mubr.f32.mxu0 0.0
        %1413 = vmatmul.mubr.f32.gmra.mrb[0].mxu0 %v999
        %v1414 = vpop.f32.mrb[0].mxu0
        %v1415 = vadd.f32 0.0, %v1414
        %v1416 = vpop.f32.mrb[0].mxu0
        %1417 = vmatprep.mubr.f32.mxu0 0.0
        %1418 = vmatmul.mubr.f32.gmra.mrb[0].mxu0 %v1000
        %v1419 = vpop.f32.mrb[0].mxu0
        %v1420 = vadd.f32 0.0, %v1419
        %v1421 = vpop.f32.mrb[0].mxu0
        %1422 = vmatprep.mubr.f32.mxu0 0.0
        %1423 = vmatmul.mubr.f32.gmra.mrb[0].mxu0 %v1001
        %v1424 = vpop.f32.mrb[0].mxu0
        %v1425 = vadd.f32 0.0, %v1424
        %v1426 = vpop.f32.mrb[0].mxu0
        %1427 = vmatprep.mubr.f32.mxu0 0.0
        %1428 = vmatmul.mubr.f32.gmra.mrb[0].mxu0 %v1002
        %v1429 = vpop.f32.mrb[0].mxu0
        %v1430 = vadd.f32 0.0, %v1429
        %v1431 = vpop.f32.mrb[0].mxu0
        %1432 = vmatprep.mubr.f32.mxu0 0.0
        %1433 = vmatmul.mubr.f32.gmra.mrb[0].mxu0 %v1003
        %v1434 = vpop.f32.mrb[0].mxu0
        %v1435 = vadd.f32 0.0, %v1434
        %v1436 = vpop.f32.mrb[0].mxu0
        %1437 = vmatprep.mubr.f32.mxu0 0.0
        %1438 = vmatmul.mubr.f32.gmra.mrb[0].mxu0 %v1004
        %v1439 = vpop.f32.mrb[0].mxu0
        %v1440 = vadd.f32 0.0, %v1439
        %v1441 = vpop.f32.mrb[0].mxu0
        %1442 = vmatprep.mubr.f32.mxu0 0.0
        %1443 = vmatmul.mubr.f32.gmra.mrb[0].mxu0 %v1005
        %v1444 = vpop.f32.mrb[0].mxu0
        %v1445 = vadd.f32 0.0, %v1444
        %v1446 = vpop.f32.mrb[0].mxu0
        %1447 = vmatprep.mubr.f32.mxu0 0.0
        %1448 = vmatmul.mubr.f32.gmra.mrb[0].mxu0 %v1006
        %v1449 = vpop.f32.mrb[0].mxu0
        %v1450 = vadd.f32 0.0, %v1449
        %v1451 = vpop.f32.mrb[0].mxu0
        %1452 = vmatprep.mubr.f32.mxu0 0.0
        %1453 = vmatmul.mubr.f32.gmra.mrb[0].mxu0 %v1007
        %v1454 = vpop.f32.mrb[0].mxu0
        %v1455 = vadd.f32 0.0, %v1454
        %v1456 = vpop.f32.mrb[0].mxu0
        %1457 = vmatprep.mubr.f32.mxu0 0.0
        %1458 = vmatmul.mubr.f32.gmra.mrb[0].mxu0 %v1008
        %v1459 = vpop.f32.mrb[0].mxu0
        %v1460 = vadd.f32 0.0, %v1459
        %v1461 = vpop.f32.mrb[0].mxu0
        %1462 = vmatprep.mubr.f32.mxu0 0.0
        %1463 = vmatmul.mubr.f32.gmra.mrb[0].mxu0 %v1009
        %v1464 = vpop.f32.mrb[0].mxu0
        %v1465 = vadd.f32 0.0, %v1464
        %v1466 = vpop.f32.mrb[0].mxu0
        %1467 = vmatprep.mubr.f32.mxu0 0.0
        %1468 = vmatmul.mubr.f32.gmra.mrb[0].mxu0 %v1010
        %v1469 = vpop.f32.mrb[0].mxu0
        %v1470 = vadd.f32 0.0, %v1469
        %v1471 = vpop.f32.mrb[0].mxu0
        %1472 = vmatprep.mubr.f32.mxu0 0.0
        %1473 = vmatmul.mubr.f32.gmra.mrb[0].mxu0 %v1011
        %v1474 = vpop.f32.mrb[0].mxu0
        %v1475 = vadd.f32 0.0, %v1474
        %v1476 = vpop.f32.mrb[0].mxu0
        %1477 = vdwg.mxu0
        %v1478 = vld [vmem:[%s5] sm:$0xff]
        %v1479 = vld [vmem:[%s5 + $0x8] sm:$0xff]
        %v1480 = vld [vmem:[%s5 + $0x10] sm:$0xff]
        %v1481 = vld [vmem:[%s5 + $0x18] sm:$0xff]
        %v1482 = vld [vmem:[%s7] sm:$0x1]
        %v1484 = vlaneseq
        %v1485 = vshrl.u32 %v1484, 7
        %v1486 = vsub.s32 0, %v1485
        %v1487 = vrot.slane %v1482, %v1486
        %vm1489 = vcmask 261120
        %v1491 = vsel %vm1489, %v1095, 0
        %v1494 = vsel %vm1489, %v1100, 0
        %v1497 = vsel %vm1489, %v1105, 0
        %v1500 = vsel %vm1489, %v1110, 0
        %v1503 = vsel %vm1489, %v1115, 0
        %v1506 = vsel %vm1489, %v1120, 0
        %v1509 = vsel %vm1489, %v1125, 0
        %v1512 = vsel %vm1489, %v1130, 0
        %v1515 = vsel %vm1489, %v1135, 0
        %v1518 = vsel %vm1489, %v1140, 0
        %v1521 = vsel %vm1489, %v1145, 0
        %v1524 = vsel %vm1489, %v1150, 0
        %v1527 = vsel %vm1489, %v1155, 0
        %v1530 = vsel %vm1489, %v1160, 0
        %v1533 = vsel %vm1489, %v1165, 0
        %v1536 = vsel %vm1489, %v1170, 0
        %v1539 = vsel %vm1489, %v1175, 0
        %v1542 = vsel %vm1489, %v1180, 0
        %v1545 = vsel %vm1489, %v1185, 0
        %v1548 = vsel %vm1489, %v1190, 0
        %v1551 = vsel %vm1489, %v1195, 0
        %v1554 = vsel %vm1489, %v1200, 0
        %v1557 = vsel %vm1489, %v1205, 0
        %v1560 = vsel %vm1489, %v1210, 0
        %v1563 = vsel %vm1489, %v1215, 0
        %v1566 = vsel %vm1489, %v1220, 0
        %v1569 = vsel %vm1489, %v1225, 0
        %v1572 = vsel %vm1489, %v1230, 0
        %v1575 = vsel %vm1489, %v1235, 0
        %v1578 = vsel %vm1489, %v1240, 0
        %v1581 = vsel %vm1489, %v1245, 0
        %v1584 = vsel %vm1489, %v1250, 0
        %1586 = vmatprep.subr.mxu0 0.0
        %1587 = vmatpush1.msra.mxu0 %v1478
        %1588 = vmatprep.subr.mxu0 0.0
        %1589 = vmatpush1.msra.mxu0 %v1479
        %1590 = vmatprep.subr.mxu0 0.0
        %1591 = vmatpush1.msra.mxu0 %v1480
        %1592 = vmatprep.subr.mxu0 0.0
        %1593 = vmatpush1.msra.mxu0 %v1481
        %1594 = vmatprep.subr.mxu0 0.0
        %1595 = vmatpush1.msra.mxu0 0.0
        %1596 = vmatprep.subr.mxu0 0.0
        %1597 = vmatpush1.msra.mxu0 0.0
        %1598 = vmatprep.subr.mxu0 0.0
        %1599 = vmatpush1.msra.mxu0 0.0
        %1600 = vmatprep.subr.mxu0 0.0
        %1601 = vmatpush1.msra.mxu0 0.0
        %1602 = vmatprep.subr.mxu0 0.0
        %1603 = vmatpush1.msra.mxu0 0.0
        %1604 = vmatprep.subr.mxu0 0.0
        %1605 = vmatpush1.msra.mxu0 0.0
        %1606 = vmatprep.subr.mxu0 0.0
        %1607 = vmatpush1.msra.mxu0 0.0
        %1608 = vmatprep.subr.mxu0 0.0
        %1609 = vmatpush1.msra.mxu0 0.0
        %1610 = vmatprep.subr.mxu0 0.0
        %1611 = vmatpush1.msra.mxu0 0.0
        %1612 = vmatprep.subr.mxu0 0.0
        %1613 = vmatpush1.msra.mxu0 0.0
        %1614 = vmatprep.subr.mxu0 0.0
        %1615 = vmatpush1.msra.mxu0 0.0
        %1616 = vmatprep.subr.mxu0 0.0
        %1617 = vmatpush1.msra.mxu0 0.0
        %1618 = vmatprep.subr.mxu0 0.0
        %1619 = vmatpush1.msra.mxu0 0.0
        %1620 = vmatprep.subr.mxu0 0.0
        %1621 = vmatpush1.msra.mxu0 0.0
        %1622 = vmatprep.subr.mxu0 0.0
        %1623 = vmatpush1.msra.mxu0 0.0
        %1624 = vmatprep.subr.mxu0 0.0
        %1625 = vmatpush1.msra.mxu0 0.0
        %1626 = vmatprep.subr.mxu0 0.0
        %1627 = vmatpush1.msra.mxu0 0.0
        %1628 = vmatprep.subr.mxu0 0.0
        %1629 = vmatpush1.msra.mxu0 0.0
        %1630 = vmatprep.subr.mxu0 0.0
        %1631 = vmatpush1.msra.mxu0 0.0
        %1632 = vmatprep.subr.mxu0 0.0
        %1633 = vmatpush1.msra.mxu0 0.0
        %1634 = vmatprep.subr.mxu0 0.0
        %1635 = vmatpush1.msra.mxu0 0.0
        %1636 = vmatprep.subr.mxu0 0.0
        %1637 = vmatpush1.msra.mxu0 0.0
        %1638 = vmatprep.subr.mxu0 0.0
        %1639 = vmatpush1.msra.mxu0 0.0
        %1640 = vmatprep.subr.mxu0 0.0
        %1641 = vmatpush1.msra.mxu0 0.0
        %1642 = vmatprep.subr.mxu0 0.0
        %1643 = vmatpush1.msra.mxu0 0.0
        %1644 = vmatprep.subr.mxu0 0.0
        %1645 = vmatpush1.msra.mxu0 0.0
        %1646 = vmatprep.subr.mxu0 0.0
        %1647 = vmatpush1.msra.mxu0 0.0
        %1648 = vmatprep.subr.mxu0 0.0
        %1649 = vmatpush1.msra.mxu0 0.0
        %1650 = vmatprep.mubr.f32.mxu0 0.0
        %1651 = vmatmul.mubr.f32.gmra.mrb[0].mxu0 %v1491
        %v1652 = vpop.f32.mrb[0].mxu0
        %v1653 = vadd.f32 %v1487, %v1652
        %v1654 = vpop.f32.mrb[0].mxu0
        %1655 = vmatprep.mubr.f32.mxu0 0.0
        %1656 = vmatmul.mubr.f32.gmra.mrb[0].mxu0 %v1494
        %v1657 = vpop.f32.mrb[0].mxu0
        %v1658 = vadd.f32 %v1487, %v1657
        %v1659 = vpop.f32.mrb[0].mxu0
        %1660 = vmatprep.mubr.f32.mxu0 0.0
        %1661 = vmatmul.mubr.f32.gmra.mrb[0].mxu0 %v1497
        %v1662 = vpop.f32.mrb[0].mxu0
        %v1663 = vadd.f32 %v1487, %v1662
        %v1664 = vpop.f32.mrb[0].mxu0
        %1665 = vmatprep.mubr.f32.mxu0 0.0
        %1666 = vmatmul.mubr.f32.gmra.mrb[0].mxu0 %v1500
        %v1667 = vpop.f32.mrb[0].mxu0
        %v1668 = vadd.f32 %v1487, %v1667
        %v1669 = vpop.f32.mrb[0].mxu0
        %1670 = vmatprep.mubr.f32.mxu0 0.0
        %1671 = vmatmul.mubr.f32.gmra.mrb[0].mxu0 %v1503
        %v1672 = vpop.f32.mrb[0].mxu0
        %v1673 = vadd.f32 %v1487, %v1672
        %v1674 = vpop.f32.mrb[0].mxu0
        %1675 = vmatprep.mubr.f32.mxu0 0.0
        %1676 = vmatmul.mubr.f32.gmra.mrb[0].mxu0 %v1506
        %v1677 = vpop.f32.mrb[0].mxu0
        %v1678 = vadd.f32 %v1487, %v1677
        %v1679 = vpop.f32.mrb[0].mxu0
        %1680 = vmatprep.mubr.f32.mxu0 0.0
        %1681 = vmatmul.mubr.f32.gmra.mrb[0].mxu0 %v1509
        %v1682 = vpop.f32.mrb[0].mxu0
        %v1683 = vadd.f32 %v1487, %v1682
        %v1684 = vpop.f32.mrb[0].mxu0
        %1685 = vmatprep.mubr.f32.mxu0 0.0
        %1686 = vmatmul.mubr.f32.gmra.mrb[0].mxu0 %v1512
        %v1687 = vpop.f32.mrb[0].mxu0
        %v1688 = vadd.f32 %v1487, %v1687
        %v1689 = vpop.f32.mrb[0].mxu0
        %1690 = vmatprep.mubr.f32.mxu0 0.0
        %1691 = vmatmul.mubr.f32.gmra.mrb[0].mxu0 %v1515
        %v1692 = vpop.f32.mrb[0].mxu0
        %v1693 = vadd.f32 %v1487, %v1692
        %v1694 = vpop.f32.mrb[0].mxu0
        %1695 = vmatprep.mubr.f32.mxu0 0.0
        %1696 = vmatmul.mubr.f32.gmra.mrb[0].mxu0 %v1518
        %v1697 = vpop.f32.mrb[0].mxu0
        %v1698 = vadd.f32 %v1487, %v1697
        %v1699 = vpop.f32.mrb[0].mxu0
        %1700 = vmatprep.mubr.f32.mxu0 0.0
        %1701 = vmatmul.mubr.f32.gmra.mrb[0].mxu0 %v1521
        %v1702 = vpop.f32.mrb[0].mxu0
        %v1703 = vadd.f32 %v1487, %v1702
        %v1704 = vpop.f32.mrb[0].mxu0
        %1705 = vmatprep.mubr.f32.mxu0 0.0
        %1706 = vmatmul.mubr.f32.gmra.mrb[0].mxu0 %v1524
        %v1707 = vpop.f32.mrb[0].mxu0
        %v1708 = vadd.f32 %v1487, %v1707
        %v1709 = vpop.f32.mrb[0].mxu0
        %1710 = vmatprep.mubr.f32.mxu0 0.0
        %1711 = vmatmul.mubr.f32.gmra.mrb[0].mxu0 %v1527
        %v1712 = vpop.f32.mrb[0].mxu0
        %v1713 = vadd.f32 %v1487, %v1712
        %v1714 = vpop.f32.mrb[0].mxu0
        %1715 = vmatprep.mubr.f32.mxu0 0.0
        %1716 = vmatmul.mubr.f32.gmra.mrb[0].mxu0 %v1530
        %v1717 = vpop.f32.mrb[0].mxu0
        %v1718 = vadd.f32 %v1487, %v1717
        %v1719 = vpop.f32.mrb[0].mxu0
        %1720 = vmatprep.mubr.f32.mxu0 0.0
        %1721 = vmatmul.mubr.f32.gmra.mrb[0].mxu0 %v1533
        %v1722 = vpop.f32.mrb[0].mxu0
        %v1723 = vadd.f32 %v1487, %v1722
        %v1724 = vpop.f32.mrb[0].mxu0
        %1725 = vmatprep.mubr.f32.mxu0 0.0
        %1726 = vmatmul.mubr.f32.gmra.mrb[0].mxu0 %v1536
        %v1727 = vpop.f32.mrb[0].mxu0
        %v1728 = vadd.f32 %v1487, %v1727
        %v1729 = vpop.f32.mrb[0].mxu0
        %1730 = vmatprep.mubr.f32.mxu0 0.0
        %1731 = vmatmul.mubr.f32.gmra.mrb[0].mxu0 %v1539
        %v1732 = vpop.f32.mrb[0].mxu0
        %v1733 = vadd.f32 %v1487, %v1732
        %v1734 = vpop.f32.mrb[0].mxu0
        %1735 = vmatprep.mubr.f32.mxu0 0.0
        %1736 = vmatmul.mubr.f32.gmra.mrb[0].mxu0 %v1542
        %v1737 = vpop.f32.mrb[0].mxu0
        %v1738 = vadd.f32 %v1487, %v1737
        %v1739 = vpop.f32.mrb[0].mxu0
        %1740 = vmatprep.mubr.f32.mxu0 0.0
        %1741 = vmatmul.mubr.f32.gmra.mrb[0].mxu0 %v1545
        %v1742 = vpop.f32.mrb[0].mxu0
        %v1743 = vadd.f32 %v1487, %v1742
        %v1744 = vpop.f32.mrb[0].mxu0
        %1745 = vmatprep.mubr.f32.mxu0 0.0
        %1746 = vmatmul.mubr.f32.gmra.mrb[0].mxu0 %v1548
        %v1747 = vpop.f32.mrb[0].mxu0
        %v1748 = vadd.f32 %v1487, %v1747
        %v1749 = vpop.f32.mrb[0].mxu0
        %1750 = vmatprep.mubr.f32.mxu0 0.0
        %1751 = vmatmul.mubr.f32.gmra.mrb[0].mxu0 %v1551
        %v1752 = vpop.f32.mrb[0].mxu0
        %v1753 = vadd.f32 %v1487, %v1752
        %v1754 = vpop.f32.mrb[0].mxu0
        %1755 = vmatprep.mubr.f32.mxu0 0.0
        %1756 = vmatmul.mubr.f32.gmra.mrb[0].mxu0 %v1554
        %v1757 = vpop.f32.mrb[0].mxu0
        %v1758 = vadd.f32 %v1487, %v1757
        %v1759 = vpop.f32.mrb[0].mxu0
        %1760 = vmatprep.mubr.f32.mxu0 0.0
        %1761 = vmatmul.mubr.f32.gmra.mrb[0].mxu0 %v1557
        %v1762 = vpop.f32.mrb[0].mxu0
        %v1763 = vadd.f32 %v1487, %v1762
        %v1764 = vpop.f32.mrb[0].mxu0
        %1765 = vmatprep.mubr.f32.mxu0 0.0
        %1766 = vmatmul.mubr.f32.gmra.mrb[0].mxu0 %v1560
        %v1767 = vpop.f32.mrb[0].mxu0
        %v1768 = vadd.f32 %v1487, %v1767
        %v1769 = vpop.f32.mrb[0].mxu0
        %1770 = vmatprep.mubr.f32.mxu0 0.0
        %1771 = vmatmul.mubr.f32.gmra.mrb[0].mxu0 %v1563
        %v1772 = vpop.f32.mrb[0].mxu0
        %v1773 = vadd.f32 %v1487, %v1772
        %v1774 = vpop.f32.mrb[0].mxu0
        %1775 = vmatprep.mubr.f32.mxu0 0.0
        %1776 = vmatmul.mubr.f32.gmra.mrb[0].mxu0 %v1566
        %v1777 = vpop.f32.mrb[0].mxu0
        %v1778 = vadd.f32 %v1487, %v1777
        %v1779 = vpop.f32.mrb[0].mxu0
        %1780 = vmatprep.mubr.f32.mxu0 0.0
        %1781 = vmatmul.mubr.f32.gmra.mrb[0].mxu0 %v1569
        %v1782 = vpop.f32.mrb[0].mxu0
        %v1783 = vadd.f32 %v1487, %v1782
        %v1784 = vpop.f32.mrb[0].mxu0
        %1785 = vmatprep.mubr.f32.mxu0 0.0
        %1786 = vmatmul.mubr.f32.gmra.mrb[0].mxu0 %v1572
        %v1787 = vpop.f32.mrb[0].mxu0
        %v1788 = vadd.f32 %v1487, %v1787
        %v1789 = vpop.f32.mrb[0].mxu0
        %1790 = vmatprep.mubr.f32.mxu0 0.0
        %1791 = vmatmul.mubr.f32.gmra.mrb[0].mxu0 %v1575
        %v1792 = vpop.f32.mrb[0].mxu0
        %v1793 = vadd.f32 %v1487, %v1792
        %v1794 = vpop.f32.mrb[0].mxu0
        %1795 = vmatprep.mubr.f32.mxu0 0.0
        %1796 = vmatmul.mubr.f32.gmra.mrb[0].mxu0 %v1578
        %v1797 = vpop.f32.mrb[0].mxu0
        %v1798 = vadd.f32 %v1487, %v1797
        %v1799 = vpop.f32.mrb[0].mxu0
        %1800 = vmatprep.mubr.f32.mxu0 0.0
        %1801 = vmatmul.mubr.f32.gmra.mrb[0].mxu0 %v1581
        %v1802 = vpop.f32.mrb[0].mxu0
        %v1803 = vadd.f32 %v1487, %v1802
        %v1804 = vpop.f32.mrb[0].mxu0
        %1805 = vmatprep.mubr.f32.mxu0 0.0
        %1806 = vmatmul.mubr.f32.gmra.mrb[0].mxu0 %v1584
        %v1807 = vpop.f32.mrb[0].mxu0
        %v1808 = vadd.f32 %v1487, %v1807
        %v1809 = vpop.f32.mrb[0].mxu0
        %1810 = vdwg.mxu0
        %v1811 = vld [vmem:[%s6] sm:$0xff]
        %v1812 = vld [vmem:[%s6 + $0x8] sm:$0xff]
        %v1813 = vld [vmem:[%s6 + $0x10] sm:$0xff]
        %v1814 = vld [vmem:[%s6 + $0x18] sm:$0xff]
        %v1815 = vld [vmem:[%s8] sm:$0x1]
        %v1817 = vlaneseq
        %v1818 = vshrl.u32 %v1817, 7
        %v1819 = vsub.s32 0, %v1818
        %v1820 = vrot.slane %v1815, %v1819
        %v1823 = vsel %vm1489, %v1320, 0
        %v1826 = vsel %vm1489, %v1325, 0
        %v1829 = vsel %vm1489, %v1330, 0
        %v1832 = vsel %vm1489, %v1335, 0
        %v1835 = vsel %vm1489, %v1340, 0
        %v1838 = vsel %vm1489, %v1345, 0
        %v1841 = vsel %vm1489, %v1350, 0
        %v1844 = vsel %vm1489, %v1355, 0
        %v1847 = vsel %vm1489, %v1360, 0
        %v1850 = vsel %vm1489, %v1365, 0
        %v1853 = vsel %vm1489, %v1370, 0
        %v1856 = vsel %vm1489, %v1375, 0
        %v1859 = vsel %vm1489, %v1380, 0
        %v1862 = vsel %vm1489, %v1385, 0
        %v1865 = vsel %vm1489, %v1390, 0
        %v1868 = vsel %vm1489, %v1395, 0
        %v1871 = vsel %vm1489, %v1400, 0
        %v1874 = vsel %vm1489, %v1405, 0
        %v1877 = vsel %vm1489, %v1410, 0
        %v1880 = vsel %vm1489, %v1415, 0
        %v1883 = vsel %vm1489, %v1420, 0
        %v1886 = vsel %vm1489, %v1425, 0
        %v1889 = vsel %vm1489, %v1430, 0
        %v1892 = vsel %vm1489, %v1435, 0
        %v1895 = vsel %vm1489, %v1440, 0
        %v1898 = vsel %vm1489, %v1445, 0
        %v1901 = vsel %vm1489, %v1450, 0
        %v1904 = vsel %vm1489, %v1455, 0
        %v1907 = vsel %vm1489, %v1460, 0
        %v1910 = vsel %vm1489, %v1465, 0
        %v1913 = vsel %vm1489, %v1470, 0
        %v1916 = vsel %vm1489, %v1475, 0
        %1918 = vmatprep.subr.mxu0 0.0
        %1919 = vmatpush1.msra.mxu0 %v1811
        %1920 = vmatprep.subr.mxu0 0.0
        %1921 = vmatpush1.msra.mxu0 %v1812
        %1922 = vmatprep.subr.mxu0 0.0
        %1923 = vmatpush1.msra.mxu0 %v1813
        %1924 = vmatprep.subr.mxu0 0.0
        %1925 = vmatpush1.msra.mxu0 %v1814
        %1926 = vmatprep.subr.mxu0 0.0
        %1927 = vmatpush1.msra.mxu0 0.0
        %1928 = vmatprep.subr.mxu0 0.0
        %1929 = vmatpush1.msra.mxu0 0.0
        %1930 = vmatprep.subr.mxu0 0.0
        %1931 = vmatpush1.msra.mxu0 0.0
        %1932 = vmatprep.subr.mxu0 0.0
        %1933 = vmatpush1.msra.mxu0 0.0
        %1934 = vmatprep.subr.mxu0 0.0
        %1935 = vmatpush1.msra.mxu0 0.0
        %1936 = vmatprep.subr.mxu0 0.0
        %1937 = vmatpush1.msra.mxu0 0.0
        %1938 = vmatprep.subr.mxu0 0.0
        %1939 = vmatpush1.msra.mxu0 0.0
        %1940 = vmatprep.subr.mxu0 0.0
        %1941 = vmatpush1.msra.mxu0 0.0
        %1942 = vmatprep.subr.mxu0 0.0
        %1943 = vmatpush1.msra.mxu0 0.0
        %1944 = vmatprep.subr.mxu0 0.0
        %1945 = vmatpush1.msra.mxu0 0.0
        %1946 = vmatprep.subr.mxu0 0.0
        %1947 = vmatpush1.msra.mxu0 0.0
        %1948 = vmatprep.subr.mxu0 0.0
        %1949 = vmatpush1.msra.mxu0 0.0
        %1950 = vmatprep.subr.mxu0 0.0
        %1951 = vmatpush1.msra.mxu0 0.0
        %1952 = vmatprep.subr.mxu0 0.0
        %1953 = vmatpush1.msra.mxu0 0.0
        %1954 = vmatprep.subr.mxu0 0.0
        %1955 = vmatpush1.msra.mxu0 0.0
        %1956 = vmatprep.subr.mxu0 0.0
        %1957 = vmatpush1.msra.mxu0 0.0
        %1958 = vmatprep.subr.mxu0 0.0
        %1959 = vmatpush1.msra.mxu0 0.0
        %1960 = vmatprep.subr.mxu0 0.0
        %1961 = vmatpush1.msra.mxu0 0.0
        %1962 = vmatprep.subr.mxu0 0.0
        %1963 = vmatpush1.msra.mxu0 0.0
        %1964 = vmatprep.subr.mxu0 0.0
        %1965 = vmatpush1.msra.mxu0 0.0
        %1966 = vmatprep.subr.mxu0 0.0
        %1967 = vmatpush1.msra.mxu0 0.0
        %1968 = vmatprep.subr.mxu0 0.0
        %1969 = vmatpush1.msra.mxu0 0.0
        %1970 = vmatprep.subr.mxu0 0.0
        %1971 = vmatpush1.msra.mxu0 0.0
        %1972 = vmatprep.subr.mxu0 0.0
        %1973 = vmatpush1.msra.mxu0 0.0
        %1974 = vmatprep.subr.mxu0 0.0
        %1975 = vmatpush1.msra.mxu0 0.0
        %1976 = vmatprep.subr.mxu0 0.0
        %1977 = vmatpush1.msra.mxu0 0.0
        %1978 = vmatprep.subr.mxu0 0.0
        %1979 = vmatpush1.msra.mxu0 0.0
        %1980 = vmatprep.subr.mxu0 0.0
        %1981 = vmatpush1.msra.mxu0 0.0
        %1982 = vmatprep.mubr.f32.mxu0 0.0
        %1983 = vmatmul.mubr.f32.gmra.mrb[0].mxu0 %v1823
        %v1984 = vpop.f32.mrb[0].mxu0
        %v1985 = vadd.f32 %v1820, %v1984
        %v1986 = vpop.f32.mrb[0].mxu0
        %1987 = vmatprep.mubr.f32.mxu0 0.0
        %1988 = vmatmul.mubr.f32.gmra.mrb[0].mxu0 %v1826
        %v1989 = vpop.f32.mrb[0].mxu0
        %v1990 = vadd.f32 %v1820, %v1989
        %v1991 = vpop.f32.mrb[0].mxu0
        %1992 = vmatprep.mubr.f32.mxu0 0.0
        %1993 = vmatmul.mubr.f32.gmra.mrb[0].mxu0 %v1829
        %v1994 = vpop.f32.mrb[0].mxu0
        %v1995 = vadd.f32 %v1820, %v1994
        %v1996 = vpop.f32.mrb[0].mxu0
        %1997 = vmatprep.mubr.f32.mxu0 0.0
        %1998 = vmatmul.mubr.f32.gmra.mrb[0].mxu0 %v1832
        %v1999 = vpop.f32.mrb[0].mxu0
        %v2000 = vadd.f32 %v1820, %v1999
        %v2001 = vpop.f32.mrb[0].mxu0
        %2002 = vmatprep.mubr.f32.mxu0 0.0
        %2003 = vmatmul.mubr.f32.gmra.mrb[0].mxu0 %v1835
        %v2004 = vpop.f32.mrb[0].mxu0
        %v2005 = vadd.f32 %v1820, %v2004
        %v2006 = vpop.f32.mrb[0].mxu0
        %2007 = vmatprep.mubr.f32.mxu0 0.0
        %2008 = vmatmul.mubr.f32.gmra.mrb[0].mxu0 %v1838
        %v2009 = vpop.f32.mrb[0].mxu0
        %v2010 = vadd.f32 %v1820, %v2009
        %v2011 = vpop.f32.mrb[0].mxu0
        %2012 = vmatprep.mubr.f32.mxu0 0.0
        %2013 = vmatmul.mubr.f32.gmra.mrb[0].mxu0 %v1841
        %v2014 = vpop.f32.mrb[0].mxu0
        %v2015 = vadd.f32 %v1820, %v2014
        %v2016 = vpop.f32.mrb[0].mxu0
        %2017 = vmatprep.mubr.f32.mxu0 0.0
        %2018 = vmatmul.mubr.f32.gmra.mrb[0].mxu0 %v1844
        %v2019 = vpop.f32.mrb[0].mxu0
        %v2020 = vadd.f32 %v1820, %v2019
        %v2021 = vpop.f32.mrb[0].mxu0
        %2022 = vmatprep.mubr.f32.mxu0 0.0
        %2023 = vmatmul.mubr.f32.gmra.mrb[0].mxu0 %v1847
        %v2024 = vpop.f32.mrb[0].mxu0
        %v2025 = vadd.f32 %v1820, %v2024
        %v2026 = vpop.f32.mrb[0].mxu0
        %2027 = vmatprep.mubr.f32.mxu0 0.0
        %2028 = vmatmul.mubr.f32.gmra.mrb[0].mxu0 %v1850
        %v2029 = vpop.f32.mrb[0].mxu0
        %v2030 = vadd.f32 %v1820, %v2029
        %v2031 = vpop.f32.mrb[0].mxu0
        %2032 = vmatprep.mubr.f32.mxu0 0.0
        %2033 = vmatmul.mubr.f32.gmra.mrb[0].mxu0 %v1853
        %v2034 = vpop.f32.mrb[0].mxu0
        %v2035 = vadd.f32 %v1820, %v2034
        %v2036 = vpop.f32.mrb[0].mxu0
        %2037 = vmatprep.mubr.f32.mxu0 0.0
        %2038 = vmatmul.mubr.f32.gmra.mrb[0].mxu0 %v1856
        %v2039 = vpop.f32.mrb[0].mxu0
        %v2040 = vadd.f32 %v1820, %v2039
        %v2041 = vpop.f32.mrb[0].mxu0
        %2042 = vmatprep.mubr.f32.mxu0 0.0
        %2043 = vmatmul.mubr.f32.gmra.mrb[0].mxu0 %v1859
        %v2044 = vpop.f32.mrb[0].mxu0
        %v2045 = vadd.f32 %v1820, %v2044
        %v2046 = vpop.f32.mrb[0].mxu0
        %2047 = vmatprep.mubr.f32.mxu0 0.0
        %2048 = vmatmul.mubr.f32.gmra.mrb[0].mxu0 %v1862
        %v2049 = vpop.f32.mrb[0].mxu0
        %v2050 = vadd.f32 %v1820, %v2049
        %v2051 = vpop.f32.mrb[0].mxu0
        %2052 = vmatprep.mubr.f32.mxu0 0.0
        %2053 = vmatmul.mubr.f32.gmra.mrb[0].mxu0 %v1865
        %v2054 = vpop.f32.mrb[0].mxu0
        %v2055 = vadd.f32 %v1820, %v2054
        %v2056 = vpop.f32.mrb[0].mxu0
        %2057 = vmatprep.mubr.f32.mxu0 0.0
        %2058 = vmatmul.mubr.f32.gmra.mrb[0].mxu0 %v1868
        %v2059 = vpop.f32.mrb[0].mxu0
        %v2060 = vadd.f32 %v1820, %v2059
        %v2061 = vpop.f32.mrb[0].mxu0
        %2062 = vmatprep.mubr.f32.mxu0 0.0
        %2063 = vmatmul.mubr.f32.gmra.mrb[0].mxu0 %v1871
        %v2064 = vpop.f32.mrb[0].mxu0
        %v2065 = vadd.f32 %v1820, %v2064
        %v2066 = vpop.f32.mrb[0].mxu0
        %2067 = vmatprep.mubr.f32.mxu0 0.0
        %2068 = vmatmul.mubr.f32.gmra.mrb[0].mxu0 %v1874
        %v2069 = vpop.f32.mrb[0].mxu0
        %v2070 = vadd.f32 %v1820, %v2069
        %v2071 = vpop.f32.mrb[0].mxu0
        %2072 = vmatprep.mubr.f32.mxu0 0.0
        %2073 = vmatmul.mubr.f32.gmra.mrb[0].mxu0 %v1877
        %v2074 = vpop.f32.mrb[0].mxu0
        %v2075 = vadd.f32 %v1820, %v2074
        %v2076 = vpop.f32.mrb[0].mxu0
        %2077 = vmatprep.mubr.f32.mxu0 0.0
        %2078 = vmatmul.mubr.f32.gmra.mrb[0].mxu0 %v1880
        %v2079 = vpop.f32.mrb[0].mxu0
        %v2080 = vadd.f32 %v1820, %v2079
        %v2081 = vpop.f32.mrb[0].mxu0
        %2082 = vmatprep.mubr.f32.mxu0 0.0
        %2083 = vmatmul.mubr.f32.gmra.mrb[0].mxu0 %v1883
        %v2084 = vpop.f32.mrb[0].mxu0
        %v2085 = vadd.f32 %v1820, %v2084
        %v2086 = vpop.f32.mrb[0].mxu0
        %2087 = vmatprep.mubr.f32.mxu0 0.0
        %2088 = vmatmul.mubr.f32.gmra.mrb[0].mxu0 %v1886
        %v2089 = vpop.f32.mrb[0].mxu0
        %v2090 = vadd.f32 %v1820, %v2089
        %v2091 = vpop.f32.mrb[0].mxu0
        %2092 = vmatprep.mubr.f32.mxu0 0.0
        %2093 = vmatmul.mubr.f32.gmra.mrb[0].mxu0 %v1889
        %v2094 = vpop.f32.mrb[0].mxu0
        %v2095 = vadd.f32 %v1820, %v2094
        %v2096 = vpop.f32.mrb[0].mxu0
        %2097 = vmatprep.mubr.f32.mxu0 0.0
        %2098 = vmatmul.mubr.f32.gmra.mrb[0].mxu0 %v1892
        %v2099 = vpop.f32.mrb[0].mxu0
        %v2100 = vadd.f32 %v1820, %v2099
        %v2101 = vpop.f32.mrb[0].mxu0
        %2102 = vmatprep.mubr.f32.mxu0 0.0
        %2103 = vmatmul.mubr.f32.gmra.mrb[0].mxu0 %v1895
        %v2104 = vpop.f32.mrb[0].mxu0
        %v2105 = vadd.f32 %v1820, %v2104
        %v2106 = vpop.f32.mrb[0].mxu0
        %2107 = vmatprep.mubr.f32.mxu0 0.0
        %2108 = vmatmul.mubr.f32.gmra.mrb[0].mxu0 %v1898
        %v2109 = vpop.f32.mrb[0].mxu0
        %v2110 = vadd.f32 %v1820, %v2109
        %v2111 = vpop.f32.mrb[0].mxu0
        %2112 = vmatprep.mubr.f32.mxu0 0.0
        %2113 = vmatmul.mubr.f32.gmra.mrb[0].mxu0 %v1901
        %v2114 = vpop.f32.mrb[0].mxu0
        %v2115 = vadd.f32 %v1820, %v2114
        %v2116 = vpop.f32.mrb[0].mxu0
        %2117 = vmatprep.mubr.f32.mxu0 0.0
        %2118 = vmatmul.mubr.f32.gmra.mrb[0].mxu0 %v1904
        %v2119 = vpop.f32.mrb[0].mxu0
        %v2120 = vadd.f32 %v1820, %v2119
        %v2121 = vpop.f32.mrb[0].mxu0
        %2122 = vmatprep.mubr.f32.mxu0 0.0
        %2123 = vmatmul.mubr.f32.gmra.mrb[0].mxu0 %v1907
        %v2124 = vpop.f32.mrb[0].mxu0
        %v2125 = vadd.f32 %v1820, %v2124
        %v2126 = vpop.f32.mrb[0].mxu0
        %2127 = vmatprep.mubr.f32.mxu0 0.0
        %2128 = vmatmul.mubr.f32.gmra.mrb[0].mxu0 %v1910
        %v2129 = vpop.f32.mrb[0].mxu0
        %v2130 = vadd.f32 %v1820, %v2129
        %v2131 = vpop.f32.mrb[0].mxu0
        %2132 = vmatprep.mubr.f32.mxu0 0.0
        %2133 = vmatmul.mubr.f32.gmra.mrb[0].mxu0 %v1913
        %v2134 = vpop.f32.mrb[0].mxu0
        %v2135 = vadd.f32 %v1820, %v2134
        %v2136 = vpop.f32.mrb[0].mxu0
        %2137 = vmatprep.mubr.f32.mxu0 0.0
        %2138 = vmatmul.mubr.f32.gmra.mrb[0].mxu0 %v1916
        %v2139 = vpop.f32.mrb[0].mxu0
        %v2140 = vadd.f32 %v1820, %v2139
        %v2141 = vpop.f32.mrb[0].mxu0
        %2142 = vdwg.mxu0
        %v2143 = vld [vmem:[%s9] sm:$0xff]
        %v2144 = vld [vmem:[%s9 + $0x8] sm:$0xff]
        %v2145 = vld [vmem:[%s9 + $0x10] sm:$0xff]
        %v2146 = vld [vmem:[%s9 + $0x18] sm:$0xff]
        %v2147 = vld [vmem:[%s10] sm:$0xff]
        %v2148 = vld [vmem:[%s10 + $0x8] sm:$0xff]
        %v2149 = vld [vmem:[%s10 + $0x10] sm:$0xff]
        %v2150 = vld [vmem:[%s10 + $0x18] sm:$0xff]
        %v2152 = vsel %vm1489, %v1985, 0
        %v2155 = vsel %vm1489, %v1990, 0
        %v2158 = vsel %vm1489, %v1995, 0
        %v2161 = vsel %vm1489, %v2000, 0
        %v2164 = vsel %vm1489, %v2005, 0
        %v2167 = vsel %vm1489, %v2010, 0
        %v2170 = vsel %vm1489, %v2015, 0
        %v2173 = vsel %vm1489, %v2020, 0
        %v2176 = vsel %vm1489, %v2025, 0
        %v2179 = vsel %vm1489, %v2030, 0
        %v2182 = vsel %vm1489, %v2035, 0
        %v2185 = vsel %vm1489, %v2040, 0
        %v2188 = vsel %vm1489, %v2045, 0
        %v2191 = vsel %vm1489, %v2050, 0
        %v2194 = vsel %vm1489, %v2055, 0
        %v2197 = vsel %vm1489, %v2060, 0
        %v2200 = vsel %vm1489, %v2065, 0
        %v2203 = vsel %vm1489, %v2070, 0
        %v2206 = vsel %vm1489, %v2075, 0
        %v2209 = vsel %vm1489, %v2080, 0
        %v2212 = vsel %vm1489, %v2085, 0
        %v2215 = vsel %vm1489, %v2090, 0
        %v2218 = vsel %vm1489, %v2095, 0
        %v2221 = vsel %vm1489, %v2100, 0
        %v2224 = vsel %vm1489, %v2105, 0
        %v2227 = vsel %vm1489, %v2110, 0
        %v2230 = vsel %vm1489, %v2115, 0
        %v2233 = vsel %vm1489, %v2120, 0
        %v2236 = vsel %vm1489, %v2125, 0
        %v2239 = vsel %vm1489, %v2130, 0
        %v2242 = vsel %vm1489, %v2135, 0
        %v2245 = vsel %vm1489, %v2140, 0
        %2247 = vmatprep.subr.mxu0 0.0
        %2248 = vmatpush1.msra.mxu0 %v2147
        %2249 = vmatprep.subr.mxu0 0.0
        %2250 = vmatpush1.msra.mxu0 %v2148
        %2251 = vmatprep.subr.mxu0 0.0
        %2252 = vmatpush1.msra.mxu0 %v2149
        %2253 = vmatprep.subr.mxu0 0.0
        %2254 = vmatpush1.msra.mxu0 %v2150
        %2255 = vmatprep.subr.mxu0 0.0
        %2256 = vmatpush1.msra.mxu0 0.0
        %2257 = vmatprep.subr.mxu0 0.0
        %2258 = vmatpush1.msra.mxu0 0.0
        %2259 = vmatprep.subr.mxu0 0.0
        %2260 = vmatpush1.msra.mxu0 0.0
        %2261 = vmatprep.subr.mxu0 0.0
        %2262 = vmatpush1.msra.mxu0 0.0
        %2263 = vmatprep.subr.mxu0 0.0
        %2264 = vmatpush1.msra.mxu0 0.0
        %2265 = vmatprep.subr.mxu0 0.0
        %2266 = vmatpush1.msra.mxu0 0.0
        %2267 = vmatprep.subr.mxu0 0.0
        %2268 = vmatpush1.msra.mxu0 0.0
        %2269 = vmatprep.subr.mxu0 0.0
        %2270 = vmatpush1.msra.mxu0 0.0
        %2271 = vmatprep.subr.mxu0 0.0
        %2272 = vmatpush1.msra.mxu0 0.0
        %2273 = vmatprep.subr.mxu0 0.0
        %2274 = vmatpush1.msra.mxu0 0.0
        %2275 = vmatprep.subr.mxu0 0.0
        %2276 = vmatpush1.msra.mxu0 0.0
        %2277 = vmatprep.subr.mxu0 0.0
        %2278 = vmatpush1.msra.mxu0 0.0
        %2279 = vmatprep.subr.mxu0 0.0
        %2280 = vmatpush1.msra.mxu0 0.0
        %2281 = vmatprep.subr.mxu0 0.0
        %2282 = vmatpush1.msra.mxu0 0.0
        %2283 = vmatprep.subr.mxu0 0.0
        %2284 = vmatpush1.msra.mxu0 0.0
        %2285 = vmatprep.subr.mxu0 0.0
        %2286 = vmatpush1.msra.mxu0 0.0
        %2287 = vmatprep.subr.mxu0 0.0
        %2288 = vmatpush1.msra.mxu0 0.0
        %2289 = vmatprep.subr.mxu0 0.0
        %2290 = vmatpush1.msra.mxu0 0.0
        %2291 = vmatprep.subr.mxu0 0.0
        %2292 = vmatpush1.msra.mxu0 0.0
        %2293 = vmatprep.subr.mxu0 0.0
        %2294 = vmatpush1.msra.mxu0 0.0
        %2295 = vmatprep.subr.mxu0 0.0
        %2296 = vmatpush1.msra.mxu0 0.0
        %2297 = vmatprep.subr.mxu0 0.0
        %2298 = vmatpush1.msra.mxu0 0.0
        %2299 = vmatprep.subr.mxu0 0.0
        %2300 = vmatpush1.msra.mxu0 0.0
        %2301 = vmatprep.subr.mxu0 0.0
        %2302 = vmatpush1.msra.mxu0 0.0
        %2303 = vmatprep.subr.mxu0 0.0
        %2304 = vmatpush1.msra.mxu0 0.0
        %2305 = vmatprep.subr.mxu0 0.0
        %2306 = vmatpush1.msra.mxu0 0.0
        %2307 = vmatprep.subr.mxu0 0.0
        %2308 = vmatpush1.msra.mxu0 0.0
        %2309 = vmatprep.subr.mxu0 0.0
        %2310 = vmatpush1.msra.mxu0 0.0
        %2311 = vmatprep.mubr.f32.mxu0 0.0
        %2312 = vmatmul.mubr.f32.gmra.mrb[0].mxu0 %v2152
        %v2313 = vpop.f32.mrb[0].mxu0
        %v2314 = vadd.f32 0.0, %v2313
        %v2315 = vpop.f32.mrb[0].mxu0
        %2316 = vmatprep.mubr.f32.mxu0 0.0
        %2317 = vmatmul.mubr.f32.gmra.mrb[0].mxu0 %v2155
        %v2318 = vpop.f32.mrb[0].mxu0
        %v2319 = vadd.f32 0.0, %v2318
        %v2320 = vpop.f32.mrb[0].mxu0
        %2321 = vmatprep.mubr.f32.mxu0 0.0
        %2322 = vmatmul.mubr.f32.gmra.mrb[0].mxu0 %v2158
        %v2323 = vpop.f32.mrb[0].mxu0
        %v2324 = vadd.f32 0.0, %v2323
        %v2325 = vpop.f32.mrb[0].mxu0
        %2326 = vmatprep.mubr.f32.mxu0 0.0
        %2327 = vmatmul.mubr.f32.gmra.mrb[0].mxu0 %v2161
        %v2328 = vpop.f32.mrb[0].mxu0
        %v2329 = vadd.f32 0.0, %v2328
        %v2330 = vpop.f32.mrb[0].mxu0
        %2331 = vmatprep.mubr.f32.mxu0 0.0
        %2332 = vmatmul.mubr.f32.gmra.mrb[0].mxu0 %v2164
        %v2333 = vpop.f32.mrb[0].mxu0
        %v2334 = vadd.f32 0.0, %v2333
        %v2335 = vpop.f32.mrb[0].mxu0
        %2336 = vmatprep.mubr.f32.mxu0 0.0
        %2337 = vmatmul.mubr.f32.gmra.mrb[0].mxu0 %v2167
        %v2338 = vpop.f32.mrb[0].mxu0
        %v2339 = vadd.f32 0.0, %v2338
        %v2340 = vpop.f32.mrb[0].mxu0
        %2341 = vmatprep.mubr.f32.mxu0 0.0
        %2342 = vmatmul.mubr.f32.gmra.mrb[0].mxu0 %v2170
        %v2343 = vpop.f32.mrb[0].mxu0
        %v2344 = vadd.f32 0.0, %v2343
        %v2345 = vpop.f32.mrb[0].mxu0
        %2346 = vmatprep.mubr.f32.mxu0 0.0
        %2347 = vmatmul.mubr.f32.gmra.mrb[0].mxu0 %v2173
        %v2348 = vpop.f32.mrb[0].mxu0
        %v2349 = vadd.f32 0.0, %v2348
        %v2350 = vpop.f32.mrb[0].mxu0
        %2351 = vmatprep.mubr.f32.mxu0 0.0
        %2352 = vmatmul.mubr.f32.gmra.mrb[0].mxu0 %v2176
        %v2353 = vpop.f32.mrb[0].mxu0
        %v2354 = vadd.f32 0.0, %v2353
        %v2355 = vpop.f32.mrb[0].mxu0
        %2356 = vmatprep.mubr.f32.mxu0 0.0
        %2357 = vmatmul.mubr.f32.gmra.mrb[0].mxu0 %v2179
        %v2358 = vpop.f32.mrb[0].mxu0
        %v2359 = vadd.f32 0.0, %v2358
        %v2360 = vpop.f32.mrb[0].mxu0
        %2361 = vmatprep.mubr.f32.mxu0 0.0
        %2362 = vmatmul.mubr.f32.gmra.mrb[0].mxu0 %v2182
        %v2363 = vpop.f32.mrb[0].mxu0
        %v2364 = vadd.f32 0.0, %v2363
        %v2365 = vpop.f32.mrb[0].mxu0
        %2366 = vmatprep.mubr.f32.mxu0 0.0
        %2367 = vmatmul.mubr.f32.gmra.mrb[0].mxu0 %v2185
        %v2368 = vpop.f32.mrb[0].mxu0
        %v2369 = vadd.f32 0.0, %v2368
        %v2370 = vpop.f32.mrb[0].mxu0
        %2371 = vmatprep.mubr.f32.mxu0 0.0
        %2372 = vmatmul.mubr.f32.gmra.mrb[0].mxu0 %v2188
        %v2373 = vpop.f32.mrb[0].mxu0
        %v2374 = vadd.f32 0.0, %v2373
        %v2375 = vpop.f32.mrb[0].mxu0
        %2376 = vmatprep.mubr.f32.mxu0 0.0
        %2377 = vmatmul.mubr.f32.gmra.mrb[0].mxu0 %v2191
        %v2378 = vpop.f32.mrb[0].mxu0
        %v2379 = vadd.f32 0.0, %v2378
        %v2380 = vpop.f32.mrb[0].mxu0
        %2381 = vmatprep.mubr.f32.mxu0 0.0
        %2382 = vmatmul.mubr.f32.gmra.mrb[0].mxu0 %v2194
        %v2383 = vpop.f32.mrb[0].mxu0
        %v2384 = vadd.f32 0.0, %v2383
        %v2385 = vpop.f32.mrb[0].mxu0
        %2386 = vmatprep.mubr.f32.mxu0 0.0
        %2387 = vmatmul.mubr.f32.gmra.mrb[0].mxu0 %v2197
        %v2388 = vpop.f32.mrb[0].mxu0
        %v2389 = vadd.f32 0.0, %v2388
        %v2390 = vpop.f32.mrb[0].mxu0
        %2391 = vmatprep.mubr.f32.mxu0 0.0
        %2392 = vmatmul.mubr.f32.gmra.mrb[0].mxu0 %v2200
        %v2393 = vpop.f32.mrb[0].mxu0
        %v2394 = vadd.f32 0.0, %v2393
        %v2395 = vpop.f32.mrb[0].mxu0
        %2396 = vmatprep.mubr.f32.mxu0 0.0
        %2397 = vmatmul.mubr.f32.gmra.mrb[0].mxu0 %v2203
        %v2398 = vpop.f32.mrb[0].mxu0
        %v2399 = vadd.f32 0.0, %v2398
        %v2400 = vpop.f32.mrb[0].mxu0
        %2401 = vmatprep.mubr.f32.mxu0 0.0
        %2402 = vmatmul.mubr.f32.gmra.mrb[0].mxu0 %v2206
        %v2403 = vpop.f32.mrb[0].mxu0
        %v2404 = vadd.f32 0.0, %v2403
        %v2405 = vpop.f32.mrb[0].mxu0
        %2406 = vmatprep.mubr.f32.mxu0 0.0
        %2407 = vmatmul.mubr.f32.gmra.mrb[0].mxu0 %v2209
        %v2408 = vpop.f32.mrb[0].mxu0
        %v2409 = vadd.f32 0.0, %v2408
        %v2410 = vpop.f32.mrb[0].mxu0
        %2411 = vmatprep.mubr.f32.mxu0 0.0
        %2412 = vmatmul.mubr.f32.gmra.mrb[0].mxu0 %v2212
        %v2413 = vpop.f32.mrb[0].mxu0
        %v2414 = vadd.f32 0.0, %v2413
        %v2415 = vpop.f32.mrb[0].mxu0
        %2416 = vmatprep.mubr.f32.mxu0 0.0
        %2417 = vmatmul.mubr.f32.gmra.mrb[0].mxu0 %v2215
        %v2418 = vpop.f32.mrb[0].mxu0
        %v2419 = vadd.f32 0.0, %v2418
        %v2420 = vpop.f32.mrb[0].mxu0
        %2421 = vmatprep.mubr.f32.mxu0 0.0
        %2422 = vmatmul.mubr.f32.gmra.mrb[0].mxu0 %v2218
        %v2423 = vpop.f32.mrb[0].mxu0
        %v2424 = vadd.f32 0.0, %v2423
        %v2425 = vpop.f32.mrb[0].mxu0
        %2426 = vmatprep.mubr.f32.mxu0 0.0
        %2427 = vmatmul.mubr.f32.gmra.mrb[0].mxu0 %v2221
        %v2428 = vpop.f32.mrb[0].mxu0
        %v2429 = vadd.f32 0.0, %v2428
        %v2430 = vpop.f32.mrb[0].mxu0
        %2431 = vmatprep.mubr.f32.mxu0 0.0
        %2432 = vmatmul.mubr.f32.gmra.mrb[0].mxu0 %v2224
        %v2433 = vpop.f32.mrb[0].mxu0
        %v2434 = vadd.f32 0.0, %v2433
        %v2435 = vpop.f32.mrb[0].mxu0
        %2436 = vmatprep.mubr.f32.mxu0 0.0
        %2437 = vmatmul.mubr.f32.gmra.mrb[0].mxu0 %v2227
        %v2438 = vpop.f32.mrb[0].mxu0
        %v2439 = vadd.f32 0.0, %v2438
        %v2440 = vpop.f32.mrb[0].mxu0
        %2441 = vmatprep.mubr.f32.mxu0 0.0
        %2442 = vmatmul.mubr.f32.gmra.mrb[0].mxu0 %v2230
        %v2443 = vpop.f32.mrb[0].mxu0
        %v2444 = vadd.f32 0.0, %v2443
        %v2445 = vpop.f32.mrb[0].mxu0
        %2446 = vmatprep.mubr.f32.mxu0 0.0
        %2447 = vmatmul.mubr.f32.gmra.mrb[0].mxu0 %v2233
        %v2448 = vpop.f32.mrb[0].mxu0
        %v2449 = vadd.f32 0.0, %v2448
        %v2450 = vpop.f32.mrb[0].mxu0
        %2451 = vmatprep.mubr.f32.mxu0 0.0
        %2452 = vmatmul.mubr.f32.gmra.mrb[0].mxu0 %v2236
        %v2453 = vpop.f32.mrb[0].mxu0
        %v2454 = vadd.f32 0.0, %v2453
        %v2455 = vpop.f32.mrb[0].mxu0
        %2456 = vmatprep.mubr.f32.mxu0 0.0
        %2457 = vmatmul.mubr.f32.gmra.mrb[0].mxu0 %v2239
        %v2458 = vpop.f32.mrb[0].mxu0
        %v2459 = vadd.f32 0.0, %v2458
        %v2460 = vpop.f32.mrb[0].mxu0
        %2461 = vmatprep.mubr.f32.mxu0 0.0
        %2462 = vmatmul.mubr.f32.gmra.mrb[0].mxu0 %v2242
        %v2463 = vpop.f32.mrb[0].mxu0
        %v2464 = vadd.f32 0.0, %v2463
        %v2465 = vpop.f32.mrb[0].mxu0
        %2466 = vmatprep.mubr.f32.mxu0 0.0
        %2467 = vmatmul.mubr.f32.gmra.mrb[0].mxu0 %v2245
        %v2468 = vpop.f32.mrb[0].mxu0
        %v2469 = vadd.f32 0.0, %v2468
        %v2470 = vpop.f32.mrb[0].mxu0
        %2471 = vdwg.mxu0
        %v2473 = vsel %vm1489, %v1653, 0
        %v2476 = vsel %vm1489, %v1658, 0
        %v2479 = vsel %vm1489, %v1663, 0
        %v2482 = vsel %vm1489, %v1668, 0
        %v2485 = vsel %vm1489, %v1673, 0
        %v2488 = vsel %vm1489, %v1678, 0
        %v2491 = vsel %vm1489, %v1683, 0
        %v2494 = vsel %vm1489, %v1688, 0
        %v2497 = vsel %vm1489, %v1693, 0
        %v2500 = vsel %vm1489, %v1698, 0
        %v2503 = vsel %vm1489, %v1703, 0
        %v2506 = vsel %vm1489, %v1708, 0
        %v2509 = vsel %vm1489, %v1713, 0
        %v2512 = vsel %vm1489, %v1718, 0
        %v2515 = vsel %vm1489, %v1723, 0
        %v2518 = vsel %vm1489, %v1728, 0
        %v2521 = vsel %vm1489, %v1733, 0
        %v2524 = vsel %vm1489, %v1738, 0
        %v2527 = vsel %vm1489, %v1743, 0
        %v2530 = vsel %vm1489, %v1748, 0
        %v2533 = vsel %vm1489, %v1753, 0
        %v2536 = vsel %vm1489, %v1758, 0
        %v2539 = vsel %vm1489, %v1763, 0
        %v2542 = vsel %vm1489, %v1768, 0
        %v2545 = vsel %vm1489, %v1773, 0
        %v2548 = vsel %vm1489, %v1778, 0
        %v2551 = vsel %vm1489, %v1783, 0
        %v2554 = vsel %vm1489, %v1788, 0
        %v2557 = vsel %vm1489, %v1793, 0
        %v2560 = vsel %vm1489, %v1798, 0
        %v2563 = vsel %vm1489, %v1803, 0
        %v2566 = vsel %vm1489, %v1808, 0
        %2568 = vmatprep.subr.mxu0 0.0
        %2569 = vmatpush1.msra.mxu0 %v2143
        %2570 = vmatprep.subr.mxu0 0.0
        %2571 = vmatpush1.msra.mxu0 %v2144
        %2572 = vmatprep.subr.mxu0 0.0
        %2573 = vmatpush1.msra.mxu0 %v2145
        %2574 = vmatprep.subr.mxu0 0.0
        %2575 = vmatpush1.msra.mxu0 %v2146
        %2576 = vmatprep.subr.mxu0 0.0
        %2577 = vmatpush1.msra.mxu0 0.0
        %2578 = vmatprep.subr.mxu0 0.0
        %2579 = vmatpush1.msra.mxu0 0.0
        %2580 = vmatprep.subr.mxu0 0.0
        %2581 = vmatpush1.msra.mxu0 0.0
        %2582 = vmatprep.subr.mxu0 0.0
        %2583 = vmatpush1.msra.mxu0 0.0
        %2584 = vmatprep.subr.mxu0 0.0
        %2585 = vmatpush1.msra.mxu0 0.0
        %2586 = vmatprep.subr.mxu0 0.0
        %2587 = vmatpush1.msra.mxu0 0.0
        %2588 = vmatprep.subr.mxu0 0.0
        %2589 = vmatpush1.msra.mxu0 0.0
        %2590 = vmatprep.subr.mxu0 0.0
        %2591 = vmatpush1.msra.mxu0 0.0
        %2592 = vmatprep.subr.mxu0 0.0
        %2593 = vmatpush1.msra.mxu0 0.0
        %2594 = vmatprep.subr.mxu0 0.0
        %2595 = vmatpush1.msra.mxu0 0.0
        %2596 = vmatprep.subr.mxu0 0.0
        %2597 = vmatpush1.msra.mxu0 0.0
        %2598 = vmatprep.subr.mxu0 0.0
        %2599 = vmatpush1.msra.mxu0 0.0
        %2600 = vmatprep.subr.mxu0 0.0
        %2601 = vmatpush1.msra.mxu0 0.0
        %2602 = vmatprep.subr.mxu0 0.0
        %2603 = vmatpush1.msra.mxu0 0.0
        %2604 = vmatprep.subr.mxu0 0.0
        %2605 = vmatpush1.msra.mxu0 0.0
        %2606 = vmatprep.subr.mxu0 0.0
        %2607 = vmatpush1.msra.mxu0 0.0
        %2608 = vmatprep.subr.mxu0 0.0
        %2609 = vmatpush1.msra.mxu0 0.0
        %2610 = vmatprep.subr.mxu0 0.0
        %2611 = vmatpush1.msra.mxu0 0.0
        %2612 = vmatprep.subr.mxu0 0.0
        %2613 = vmatpush1.msra.mxu0 0.0
        %2614 = vmatprep.subr.mxu0 0.0
        %2615 = vmatpush1.msra.mxu0 0.0
        %2616 = vmatprep.subr.mxu0 0.0
        %2617 = vmatpush1.msra.mxu0 0.0
        %2618 = vmatprep.subr.mxu0 0.0
        %2619 = vmatpush1.msra.mxu0 0.0
        %2620 = vmatprep.subr.mxu0 0.0
        %2621 = vmatpush1.msra.mxu0 0.0
        %2622 = vmatprep.subr.mxu0 0.0
        %2623 = vmatpush1.msra.mxu0 0.0
        %2624 = vmatprep.subr.mxu0 0.0
        %2625 = vmatpush1.msra.mxu0 0.0
        %2626 = vmatprep.subr.mxu0 0.0
        %2627 = vmatpush1.msra.mxu0 0.0
        %2628 = vmatprep.subr.mxu0 0.0
        %2629 = vmatpush1.msra.mxu0 0.0
        %2630 = vmatprep.subr.mxu0 0.0
        %2631 = vmatpush1.msra.mxu0 0.0
        %2632 = vmatprep.mubr.f32.mxu0 0.0
        %2633 = vmatmul.mubr.f32.gmra.mrb[0].mxu0 %v2473
        %v2634 = vpop.f32.mrb[0].mxu0
        %v2635 = vadd.f32 %v2314, %v2634
        %v2636 = vpop.f32.mrb[0].mxu0
        %2637 = vmatprep.mubr.f32.mxu0 0.0
        %2638 = vmatmul.mubr.f32.gmra.mrb[0].mxu0 %v2476
        %v2639 = vpop.f32.mrb[0].mxu0
        %v2640 = vadd.f32 %v2319, %v2639
        %v2641 = vpop.f32.mrb[0].mxu0
        %2642 = vmatprep.mubr.f32.mxu0 0.0
        %2643 = vmatmul.mubr.f32.gmra.mrb[0].mxu0 %v2479
        %v2644 = vpop.f32.mrb[0].mxu0
        %v2645 = vadd.f32 %v2324, %v2644
        %v2646 = vpop.f32.mrb[0].mxu0
        %2647 = vmatprep.mubr.f32.mxu0 0.0
        %2648 = vmatmul.mubr.f32.gmra.mrb[0].mxu0 %v2482
        %v2649 = vpop.f32.mrb[0].mxu0
        %v2650 = vadd.f32 %v2329, %v2649
        %v2651 = vpop.f32.mrb[0].mxu0
        %2652 = vmatprep.mubr.f32.mxu0 0.0
        %2653 = vmatmul.mubr.f32.gmra.mrb[0].mxu0 %v2485
        %v2654 = vpop.f32.mrb[0].mxu0
        %v2655 = vadd.f32 %v2334, %v2654
        %v2656 = vpop.f32.mrb[0].mxu0
        %2657 = vmatprep.mubr.f32.mxu0 0.0
        %2658 = vmatmul.mubr.f32.gmra.mrb[0].mxu0 %v2488
        %v2659 = vpop.f32.mrb[0].mxu0
        %v2660 = vadd.f32 %v2339, %v2659
        %v2661 = vpop.f32.mrb[0].mxu0
        %2662 = vmatprep.mubr.f32.mxu0 0.0
        %2663 = vmatmul.mubr.f32.gmra.mrb[0].mxu0 %v2491
        %v2664 = vpop.f32.mrb[0].mxu0
        %v2665 = vadd.f32 %v2344, %v2664
        %v2666 = vpop.f32.mrb[0].mxu0
        %2667 = vmatprep.mubr.f32.mxu0 0.0
        %2668 = vmatmul.mubr.f32.gmra.mrb[0].mxu0 %v2494
        %v2669 = vpop.f32.mrb[0].mxu0
        %v2670 = vadd.f32 %v2349, %v2669
        %v2671 = vpop.f32.mrb[0].mxu0
        %2672 = vmatprep.mubr.f32.mxu0 0.0
        %2673 = vmatmul.mubr.f32.gmra.mrb[0].mxu0 %v2497
        %v2674 = vpop.f32.mrb[0].mxu0
        %v2675 = vadd.f32 %v2354, %v2674
        %v2676 = vpop.f32.mrb[0].mxu0
        %2677 = vmatprep.mubr.f32.mxu0 0.0
        %2678 = vmatmul.mubr.f32.gmra.mrb[0].mxu0 %v2500
        %v2679 = vpop.f32.mrb[0].mxu0
        %v2680 = vadd.f32 %v2359, %v2679
        %v2681 = vpop.f32.mrb[0].mxu0
        %2682 = vmatprep.mubr.f32.mxu0 0.0
        %2683 = vmatmul.mubr.f32.gmra.mrb[0].mxu0 %v2503
        %v2684 = vpop.f32.mrb[0].mxu0
        %v2685 = vadd.f32 %v2364, %v2684
        %v2686 = vpop.f32.mrb[0].mxu0
        %2687 = vmatprep.mubr.f32.mxu0 0.0
        %2688 = vmatmul.mubr.f32.gmra.mrb[0].mxu0 %v2506
        %v2689 = vpop.f32.mrb[0].mxu0
        %v2690 = vadd.f32 %v2369, %v2689
        %v2691 = vpop.f32.mrb[0].mxu0
        %2692 = vmatprep.mubr.f32.mxu0 0.0
        %2693 = vmatmul.mubr.f32.gmra.mrb[0].mxu0 %v2509
        %v2694 = vpop.f32.mrb[0].mxu0
        %v2695 = vadd.f32 %v2374, %v2694
        %v2696 = vpop.f32.mrb[0].mxu0
        %2697 = vmatprep.mubr.f32.mxu0 0.0
        %2698 = vmatmul.mubr.f32.gmra.mrb[0].mxu0 %v2512
        %v2699 = vpop.f32.mrb[0].mxu0
        %v2700 = vadd.f32 %v2379, %v2699
        %v2701 = vpop.f32.mrb[0].mxu0
        %2702 = vmatprep.mubr.f32.mxu0 0.0
        %2703 = vmatmul.mubr.f32.gmra.mrb[0].mxu0 %v2515
        %v2704 = vpop.f32.mrb[0].mxu0
        %v2705 = vadd.f32 %v2384, %v2704
        %v2706 = vpop.f32.mrb[0].mxu0
        %2707 = vmatprep.mubr.f32.mxu0 0.0
        %2708 = vmatmul.mubr.f32.gmra.mrb[0].mxu0 %v2518
        %v2709 = vpop.f32.mrb[0].mxu0
        %v2710 = vadd.f32 %v2389, %v2709
        %v2711 = vpop.f32.mrb[0].mxu0
        %2712 = vmatprep.mubr.f32.mxu0 0.0
        %2713 = vmatmul.mubr.f32.gmra.mrb[0].mxu0 %v2521
        %v2714 = vpop.f32.mrb[0].mxu0
        %v2715 = vadd.f32 %v2394, %v2714
        %v2716 = vpop.f32.mrb[0].mxu0
        %2717 = vmatprep.mubr.f32.mxu0 0.0
        %2718 = vmatmul.mubr.f32.gmra.mrb[0].mxu0 %v2524
        %v2719 = vpop.f32.mrb[0].mxu0
        %v2720 = vadd.f32 %v2399, %v2719
        %v2721 = vpop.f32.mrb[0].mxu0
        %2722 = vmatprep.mubr.f32.mxu0 0.0
        %2723 = vmatmul.mubr.f32.gmra.mrb[0].mxu0 %v2527
        %v2724 = vpop.f32.mrb[0].mxu0
        %v2725 = vadd.f32 %v2404, %v2724
        %v2726 = vpop.f32.mrb[0].mxu0
        %2727 = vmatprep.mubr.f32.mxu0 0.0
        %2728 = vmatmul.mubr.f32.gmra.mrb[0].mxu0 %v2530
        %v2729 = vpop.f32.mrb[0].mxu0
        %v2730 = vadd.f32 %v2409, %v2729
        %v2731 = vpop.f32.mrb[0].mxu0
        %2732 = vmatprep.mubr.f32.mxu0 0.0
        %2733 = vmatmul.mubr.f32.gmra.mrb[0].mxu0 %v2533
        %v2734 = vpop.f32.mrb[0].mxu0
        %v2735 = vadd.f32 %v2414, %v2734
        %v2736 = vpop.f32.mrb[0].mxu0
        %2737 = vmatprep.mubr.f32.mxu0 0.0
        %2738 = vmatmul.mubr.f32.gmra.mrb[0].mxu0 %v2536
        %v2739 = vpop.f32.mrb[0].mxu0
        %v2740 = vadd.f32 %v2419, %v2739
        %v2741 = vpop.f32.mrb[0].mxu0
        %2742 = vmatprep.mubr.f32.mxu0 0.0
        %2743 = vmatmul.mubr.f32.gmra.mrb[0].mxu0 %v2539
        %v2744 = vpop.f32.mrb[0].mxu0
        %v2745 = vadd.f32 %v2424, %v2744
        %v2746 = vpop.f32.mrb[0].mxu0
        %2747 = vmatprep.mubr.f32.mxu0 0.0
        %2748 = vmatmul.mubr.f32.gmra.mrb[0].mxu0 %v2542
        %v2749 = vpop.f32.mrb[0].mxu0
        %v2750 = vadd.f32 %v2429, %v2749
        %v2751 = vpop.f32.mrb[0].mxu0
        %2752 = vmatprep.mubr.f32.mxu0 0.0
        %2753 = vmatmul.mubr.f32.gmra.mrb[0].mxu0 %v2545
        %v2754 = vpop.f32.mrb[0].mxu0
        %v2755 = vadd.f32 %v2434, %v2754
        %v2756 = vpop.f32.mrb[0].mxu0
        %2757 = vmatprep.mubr.f32.mxu0 0.0
        %2758 = vmatmul.mubr.f32.gmra.mrb[0].mxu0 %v2548
        %v2759 = vpop.f32.mrb[0].mxu0
        %v2760 = vadd.f32 %v2439, %v2759
        %v2761 = vpop.f32.mrb[0].mxu0
        %2762 = vmatprep.mubr.f32.mxu0 0.0
        %2763 = vmatmul.mubr.f32.gmra.mrb[0].mxu0 %v2551
        %v2764 = vpop.f32.mrb[0].mxu0
        %v2765 = vadd.f32 %v2444, %v2764
        %v2766 = vpop.f32.mrb[0].mxu0
        %2767 = vmatprep.mubr.f32.mxu0 0.0
        %2768 = vmatmul.mubr.f32.gmra.mrb[0].mxu0 %v2554
        %v2769 = vpop.f32.mrb[0].mxu0
        %v2770 = vadd.f32 %v2449, %v2769
        %v2771 = vpop.f32.mrb[0].mxu0
        %2772 = vmatprep.mubr.f32.mxu0 0.0
        %2773 = vmatmul.mubr.f32.gmra.mrb[0].mxu0 %v2557
        %v2774 = vpop.f32.mrb[0].mxu0
        %v2775 = vadd.f32 %v2454, %v2774
        %v2776 = vpop.f32.mrb[0].mxu0
        %2777 = vmatprep.mubr.f32.mxu0 0.0
        %2778 = vmatmul.mubr.f32.gmra.mrb[0].mxu0 %v2560
        %v2779 = vpop.f32.mrb[0].mxu0
        %v2780 = vadd.f32 %v2459, %v2779
        %v2781 = vpop.f32.mrb[0].mxu0
        %2782 = vmatprep.mubr.f32.mxu0 0.0
        %2783 = vmatmul.mubr.f32.gmra.mrb[0].mxu0 %v2563
        %v2784 = vpop.f32.mrb[0].mxu0
        %v2785 = vadd.f32 %v2464, %v2784
        %v2786 = vpop.f32.mrb[0].mxu0
        %2787 = vmatprep.mubr.f32.mxu0 0.0
        %2788 = vmatmul.mubr.f32.gmra.mrb[0].mxu0 %v2566
        %v2789 = vpop.f32.mrb[0].mxu0
        %v2790 = vadd.f32 %v2469, %v2789
        %v2791 = vpop.f32.mrb[0].mxu0
        %2792 = vdwg.mxu0
        %v2793 = vld [vmem:[%s11] sm:$0x1]
        %v2795 = vlaneseq
        %v2796 = vshrl.u32 %v2795, 7
        %v2797 = vsub.s32 0, %v2796
        %v2798 = vrot.slane %v2793, %v2797
        %v2800 = vadd.f32 %v2635, %v2798
        %v2801 = vadd.f32 %v2640, %v2798
        %v2802 = vadd.f32 %v2645, %v2798
        %v2803 = vadd.f32 %v2650, %v2798
        %v2804 = vadd.f32 %v2655, %v2798
        %v2805 = vadd.f32 %v2660, %v2798
        %v2806 = vadd.f32 %v2665, %v2798
        %v2807 = vadd.f32 %v2670, %v2798
        %v2808 = vadd.f32 %v2675, %v2798
        %v2809 = vadd.f32 %v2680, %v2798
        %v2810 = vadd.f32 %v2685, %v2798
        %v2811 = vadd.f32 %v2690, %v2798
        %v2812 = vadd.f32 %v2695, %v2798
        %v2813 = vadd.f32 %v2700, %v2798
        %v2814 = vadd.f32 %v2705, %v2798
        %v2815 = vadd.f32 %v2710, %v2798
        %v2816 = vadd.f32 %v2715, %v2798
        %v2817 = vadd.f32 %v2720, %v2798
        %v2818 = vadd.f32 %v2725, %v2798
        %v2819 = vadd.f32 %v2730, %v2798
        %v2820 = vadd.f32 %v2735, %v2798
        %v2821 = vadd.f32 %v2740, %v2798
        %v2822 = vadd.f32 %v2745, %v2798
        %v2823 = vadd.f32 %v2750, %v2798
        %v2824 = vadd.f32 %v2755, %v2798
        %v2825 = vadd.f32 %v2760, %v2798
        %v2826 = vadd.f32 %v2765, %v2798
        %v2827 = vadd.f32 %v2770, %v2798
        %v2828 = vadd.f32 %v2775, %v2798
        %v2829 = vadd.f32 %v2780, %v2798
        %v2830 = vadd.f32 %v2785, %v2798
        %v2831 = vadd.f32 %v2790, %v2798
        %v2832 = vld [vmem:[%s559] sm:$0xff]
        %v2833 = vld [vmem:[%s559 + $0x8] sm:$0xff]
        %v2834 = vld [vmem:[%s559 + $0x10] sm:$0xff]
        %v2835 = vld [vmem:[%s559 + $0x18] sm:$0xff]
        %v2836 = vld [vmem:[%s559 + $0x20] sm:$0xff]
        %v2837 = vld [vmem:[%s559 + $0x28] sm:$0xff]
        %v2838 = vld [vmem:[%s559 + $0x30] sm:$0xff]
        %v2839 = vld [vmem:[%s559 + $0x38] sm:$0xff]
        %v2840 = vld [vmem:[%s559 + $0x40] sm:$0xff]
        %v2841 = vld [vmem:[%s559 + $0x48] sm:$0xff]
        %v2842 = vld [vmem:[%s559 + $0x50] sm:$0xff]
        %v2843 = vld [vmem:[%s559 + $0x58] sm:$0xff]
        %v2844 = vld [vmem:[%s559 + $0x60] sm:$0xff]
        %v2845 = vld [vmem:[%s559 + $0x68] sm:$0xff]
        %v2846 = vld [vmem:[%s559 + $0x70] sm:$0xff]
        %v2847 = vld [vmem:[%s559 + $0x78] sm:$0xff]
        %v2848 = vld [vmem:[%s559 + $0x80] sm:$0xff]
        %v2849 = vld [vmem:[%s559 + $0x88] sm:$0xff]
        %v2850 = vld [vmem:[%s559 + $0x90] sm:$0xff]
        %v2851 = vld [vmem:[%s559 + $0x98] sm:$0xff]
        %v2852 = vld [vmem:[%s559 + $0xa0] sm:$0xff]
        %v2853 = vld [vmem:[%s559 + $0xa8] sm:$0xff]
        %v2854 = vld [vmem:[%s559 + $0xb0] sm:$0xff]
        %v2855 = vld [vmem:[%s559 + $0xb8] sm:$0xff]
        %v2856 = vld [vmem:[%s559 + $0xc0] sm:$0xff]
        %v2857 = vld [vmem:[%s559 + $0xc8] sm:$0xff]
        %v2858 = vld [vmem:[%s559 + $0xd0] sm:$0xff]
        %v2859 = vld [vmem:[%s559 + $0xd8] sm:$0xff]
        %v2860 = vld [vmem:[%s559 + $0xe0] sm:$0xff]
        %v2861 = vld [vmem:[%s559 + $0xe8] sm:$0xff]
        %v2862 = vld [vmem:[%s559 + $0xf0] sm:$0xff]
        %v2863 = vld [vmem:[%s559 + $0xf8] sm:$0xff]
        %v2864 = vmul.f32 %v2800, %v2832
        %v2865 = vmul.f32 %v2801, %v2833
        %v2866 = vmul.f32 %v2802, %v2834
        %v2867 = vmul.f32 %v2803, %v2835
        %v2868 = vmul.f32 %v2804, %v2836
        %v2869 = vmul.f32 %v2805, %v2837
        %v2870 = vmul.f32 %v2806, %v2838
        %v2871 = vmul.f32 %v2807, %v2839
        %v2872 = vmul.f32 %v2808, %v2840
        %v2873 = vmul.f32 %v2809, %v2841
        %v2874 = vmul.f32 %v2810, %v2842
        %v2875 = vmul.f32 %v2811, %v2843
        %v2876 = vmul.f32 %v2812, %v2844
        %v2877 = vmul.f32 %v2813, %v2845
        %v2878 = vmul.f32 %v2814, %v2846
        %v2879 = vmul.f32 %v2815, %v2847
        %v2880 = vmul.f32 %v2816, %v2848
        %v2881 = vmul.f32 %v2817, %v2849
        %v2882 = vmul.f32 %v2818, %v2850
        %v2883 = vmul.f32 %v2819, %v2851
        %v2884 = vmul.f32 %v2820, %v2852
        %v2885 = vmul.f32 %v2821, %v2853
        %v2886 = vmul.f32 %v2822, %v2854
        %v2887 = vmul.f32 %v2823, %v2855
        %v2888 = vmul.f32 %v2824, %v2856
        %v2889 = vmul.f32 %v2825, %v2857
        %v2890 = vmul.f32 %v2826, %v2858
        %v2891 = vmul.f32 %v2827, %v2859
        %v2892 = vmul.f32 %v2828, %v2860
        %v2893 = vmul.f32 %v2829, %v2861
        %v2894 = vmul.f32 %v2830, %v2862
        %v2895 = vmul.f32 %v2831, %v2863
        %v2896 = vld [vmem:[%s12] sm:$0xff]
        %v2897 = vld [vmem:[%s12 + $0x8] sm:$0xff]
        %v2898 = vld [vmem:[%s12 + $0x10] sm:$0xff]
        %v2899 = vld [vmem:[%s12 + $0x18] sm:$0xff]
        %v2900 = vld [vmem:[%s12 + $0x20] sm:$0xff]
        %v2901 = vld [vmem:[%s12 + $0x28] sm:$0xff]
        %v2902 = vld [vmem:[%s12 + $0x30] sm:$0xff]
        %v2903 = vld [vmem:[%s12 + $0x38] sm:$0xff]
        %v2904 = vld [vmem:[%s13] sm:$0x1]
        %v2906 = vlaneseq
        %v2907 = vshrl.u32 %v2906, 7
        %v2908 = vsub.s32 0, %v2907
        %v2909 = vrot.slane %v2904, %v2908
        %vm2911 = vcmask 523264
        %v2913 = vsel %vm2911, %v2864, 0
        %v2916 = vsel %vm2911, %v2865, 0
        %v2919 = vsel %vm2911, %v2866, 0
        %v2922 = vsel %vm2911, %v2867, 0
        %v2925 = vsel %vm2911, %v2868, 0
        %v2928 = vsel %vm2911, %v2869, 0
        %v2931 = vsel %vm2911, %v2870, 0
        %v2934 = vsel %vm2911, %v2871, 0
        %v2937 = vsel %vm2911, %v2872, 0
        %v2940 = vsel %vm2911, %v2873, 0
        %v2943 = vsel %vm2911, %v2874, 0
        %v2946 = vsel %vm2911, %v2875, 0
        %v2949 = vsel %vm2911, %v2876, 0
        %v2952 = vsel %vm2911, %v2877, 0
        %v2955 = vsel %vm2911, %v2878, 0
        %v2958 = vsel %vm2911, %v2879, 0
        %v2961 = vsel %vm2911, %v2880, 0
        %v2964 = vsel %vm2911, %v2881, 0
        %v2967 = vsel %vm2911, %v2882, 0
        %v2970 = vsel %vm2911, %v2883, 0
        %v2973 = vsel %vm2911, %v2884, 0
        %v2976 = vsel %vm2911, %v2885, 0
        %v2979 = vsel %vm2911, %v2886, 0
        %v2982 = vsel %vm2911, %v2887, 0
        %v2985 = vsel %vm2911, %v2888, 0
        %v2988 = vsel %vm2911, %v2889, 0
        %v2991 = vsel %vm2911, %v2890, 0
        %v2994 = vsel %vm2911, %v2891, 0
        %v2997 = vsel %vm2911, %v2892, 0
        %v3000 = vsel %vm2911, %v2893, 0
        %v3003 = vsel %vm2911, %v2894, 0
        %v3006 = vsel %vm2911, %v2895, 0
        %3008 = vmatprep.subr.mxu0 0.0
        %3009 = vmatpush1.msra.mxu0 %v2896
        %3010 = vmatprep.subr.mxu0 0.0
        %3011 = vmatpush1.msra.mxu0 %v2897
        %3012 = vmatprep.subr.mxu0 0.0
        %3013 = vmatpush1.msra.mxu0 %v2898
        %3014 = vmatprep.subr.mxu0 0.0
        %3015 = vmatpush1.msra.mxu0 %v2899
        %3016 = vmatprep.subr.mxu0 0.0
        %3017 = vmatpush1.msra.mxu0 %v2900
        %3018 = vmatprep.subr.mxu0 0.0
        %3019 = vmatpush1.msra.mxu0 %v2901
        %3020 = vmatprep.subr.mxu0 0.0
        %3021 = vmatpush1.msra.mxu0 %v2902
        %3022 = vmatprep.subr.mxu0 0.0
        %3023 = vmatpush1.msra.mxu0 %v2903
        %3024 = vmatprep.subr.mxu0 0.0
        %3025 = vmatpush1.msra.mxu0 0.0
        %3026 = vmatprep.subr.mxu0 0.0
        %3027 = vmatpush1.msra.mxu0 0.0
        %3028 = vmatprep.subr.mxu0 0.0
        %3029 = vmatpush1.msra.mxu0 0.0
        %3030 = vmatprep.subr.mxu0 0.0
        %3031 = vmatpush1.msra.mxu0 0.0
        %3032 = vmatprep.subr.mxu0 0.0
        %3033 = vmatpush1.msra.mxu0 0.0
        %3034 = vmatprep.subr.mxu0 0.0
        %3035 = vmatpush1.msra.mxu0 0.0
        %3036 = vmatprep.subr.mxu0 0.0
        %3037 = vmatpush1.msra.mxu0 0.0
        %3038 = vmatprep.subr.mxu0 0.0
        %3039 = vmatpush1.msra.mxu0 0.0
        %3040 = vmatprep.subr.mxu0 0.0
        %3041 = vmatpush1.msra.mxu0 0.0
        %3042 = vmatprep.subr.mxu0 0.0
        %3043 = vmatpush1.msra.mxu0 0.0
        %3044 = vmatprep.subr.mxu0 0.0
        %3045 = vmatpush1.msra.mxu0 0.0
        %3046 = vmatprep.subr.mxu0 0.0
        %3047 = vmatpush1.msra.mxu0 0.0
        %3048 = vmatprep.subr.mxu0 0.0
        %3049 = vmatpush1.msra.mxu0 0.0
        %3050 = vmatprep.subr.mxu0 0.0
        %3051 = vmatpush1.msra.mxu0 0.0
        %3052 = vmatprep.subr.mxu0 0.0
        %3053 = vmatpush1.msra.mxu0 0.0
        %3054 = vmatprep.subr.mxu0 0.0
        %3055 = vmatpush1.msra.mxu0 0.0
        %3056 = vmatprep.subr.mxu0 0.0
        %3057 = vmatpush1.msra.mxu0 0.0
        %3058 = vmatprep.subr.mxu0 0.0
        %3059 = vmatpush1.msra.mxu0 0.0
        %3060 = vmatprep.subr.mxu0 0.0
        %3061 = vmatpush1.msra.mxu0 0.0
        %3062 = vmatprep.subr.mxu0 0.0
        %3063 = vmatpush1.msra.mxu0 0.0
        %3064 = vmatprep.subr.mxu0 0.0
        %3065 = vmatpush1.msra.mxu0 0.0
        %3066 = vmatprep.subr.mxu0 0.0
        %3067 = vmatpush1.msra.mxu0 0.0
        %3068 = vmatprep.subr.mxu0 0.0
        %3069 = vmatpush1.msra.mxu0 0.0
        %3070 = vmatprep.subr.mxu0 0.0
        %3071 = vmatpush1.msra.mxu0 0.0
        %3072 = vmatprep.mubr.f32.mxu0 0.0
        %3073 = vmatmul.mubr.f32.gmra.mrb[0].mxu0 %v2913
        %v3074 = vpop.f32.mrb[0].mxu0
        %v3075 = vadd.f32 %v2909, %v3074
        %v3076 = vpop.f32.mrb[0].mxu0
        %3077 = vmatprep.mubr.f32.mxu0 0.0
        %3078 = vmatmul.mubr.f32.gmra.mrb[0].mxu0 %v2916
        %v3079 = vpop.f32.mrb[0].mxu0
        %v3080 = vadd.f32 %v2909, %v3079
        %v3081 = vpop.f32.mrb[0].mxu0
        %3082 = vmatprep.mubr.f32.mxu0 0.0
        %3083 = vmatmul.mubr.f32.gmra.mrb[0].mxu0 %v2919
        %v3084 = vpop.f32.mrb[0].mxu0
        %v3085 = vadd.f32 %v2909, %v3084
        %v3086 = vpop.f32.mrb[0].mxu0
        %3087 = vmatprep.mubr.f32.mxu0 0.0
        %3088 = vmatmul.mubr.f32.gmra.mrb[0].mxu0 %v2922
        %v3089 = vpop.f32.mrb[0].mxu0
        %v3090 = vadd.f32 %v2909, %v3089
        %v3091 = vpop.f32.mrb[0].mxu0
        %3092 = vmatprep.mubr.f32.mxu0 0.0
        %3093 = vmatmul.mubr.f32.gmra.mrb[0].mxu0 %v2925
        %v3094 = vpop.f32.mrb[0].mxu0
        %v3095 = vadd.f32 %v2909, %v3094
        %v3096 = vpop.f32.mrb[0].mxu0
        %3097 = vmatprep.mubr.f32.mxu0 0.0
        %3098 = vmatmul.mubr.f32.gmra.mrb[0].mxu0 %v2928
        %v3099 = vpop.f32.mrb[0].mxu0
        %v3100 = vadd.f32 %v2909, %v3099
        %v3101 = vpop.f32.mrb[0].mxu0
        %3102 = vmatprep.mubr.f32.mxu0 0.0
        %3103 = vmatmul.mubr.f32.gmra.mrb[0].mxu0 %v2931
        %v3104 = vpop.f32.mrb[0].mxu0
        %v3105 = vadd.f32 %v2909, %v3104
        %v3106 = vpop.f32.mrb[0].mxu0
        %3107 = vmatprep.mubr.f32.mxu0 0.0
        %3108 = vmatmul.mubr.f32.gmra.mrb[0].mxu0 %v2934
        %v3109 = vpop.f32.mrb[0].mxu0
        %v3110 = vadd.f32 %v2909, %v3109
        %v3111 = vpop.f32.mrb[0].mxu0
        %3112 = vmatprep.mubr.f32.mxu0 0.0
        %3113 = vmatmul.mubr.f32.gmra.mrb[0].mxu0 %v2937
        %v3114 = vpop.f32.mrb[0].mxu0
        %v3115 = vadd.f32 %v2909, %v3114
        %v3116 = vpop.f32.mrb[0].mxu0
        %3117 = vmatprep.mubr.f32.mxu0 0.0
        %3118 = vmatmul.mubr.f32.gmra.mrb[0].mxu0 %v2940
        %v3119 = vpop.f32.mrb[0].mxu0
        %v3120 = vadd.f32 %v2909, %v3119
        %v3121 = vpop.f32.mrb[0].mxu0
        %3122 = vmatprep.mubr.f32.mxu0 0.0
        %3123 = vmatmul.mubr.f32.gmra.mrb[0].mxu0 %v2943
        %v3124 = vpop.f32.mrb[0].mxu0
        %v3125 = vadd.f32 %v2909, %v3124
        %v3126 = vpop.f32.mrb[0].mxu0
        %3127 = vmatprep.mubr.f32.mxu0 0.0
        %3128 = vmatmul.mubr.f32.gmra.mrb[0].mxu0 %v2946
        %v3129 = vpop.f32.mrb[0].mxu0
        %v3130 = vadd.f32 %v2909, %v3129
        %v3131 = vpop.f32.mrb[0].mxu0
        %3132 = vmatprep.mubr.f32.mxu0 0.0
        %3133 = vmatmul.mubr.f32.gmra.mrb[0].mxu0 %v2949
        %v3134 = vpop.f32.mrb[0].mxu0
        %v3135 = vadd.f32 %v2909, %v3134
        %v3136 = vpop.f32.mrb[0].mxu0
        %3137 = vmatprep.mubr.f32.mxu0 0.0
        %3138 = vmatmul.mubr.f32.gmra.mrb[0].mxu0 %v2952
        %v3139 = vpop.f32.mrb[0].mxu0
        %v3140 = vadd.f32 %v2909, %v3139
        %v3141 = vpop.f32.mrb[0].mxu0
        %3142 = vmatprep.mubr.f32.mxu0 0.0
        %3143 = vmatmul.mubr.f32.gmra.mrb[0].mxu0 %v2955
        %v3144 = vpop.f32.mrb[0].mxu0
        %v3145 = vadd.f32 %v2909, %v3144
        %v3146 = vpop.f32.mrb[0].mxu0
        %3147 = vmatprep.mubr.f32.mxu0 0.0
        %3148 = vmatmul.mubr.f32.gmra.mrb[0].mxu0 %v2958
        %v3149 = vpop.f32.mrb[0].mxu0
        %v3150 = vadd.f32 %v2909, %v3149
        %v3151 = vpop.f32.mrb[0].mxu0
        %3152 = vmatprep.mubr.f32.mxu0 0.0
        %3153 = vmatmul.mubr.f32.gmra.mrb[0].mxu0 %v2961
        %v3154 = vpop.f32.mrb[0].mxu0
        %v3155 = vadd.f32 %v2909, %v3154
        %v3156 = vpop.f32.mrb[0].mxu0
        %3157 = vmatprep.mubr.f32.mxu0 0.0
        %3158 = vmatmul.mubr.f32.gmra.mrb[0].mxu0 %v2964
        %v3159 = vpop.f32.mrb[0].mxu0
        %v3160 = vadd.f32 %v2909, %v3159
        %v3161 = vpop.f32.mrb[0].mxu0
        %3162 = vmatprep.mubr.f32.mxu0 0.0
        %3163 = vmatmul.mubr.f32.gmra.mrb[0].mxu0 %v2967
        %v3164 = vpop.f32.mrb[0].mxu0
        %v3165 = vadd.f32 %v2909, %v3164
        %v3166 = vpop.f32.mrb[0].mxu0
        %3167 = vmatprep.mubr.f32.mxu0 0.0
        %3168 = vmatmul.mubr.f32.gmra.mrb[0].mxu0 %v2970
        %v3169 = vpop.f32.mrb[0].mxu0
        %v3170 = vadd.f32 %v2909, %v3169
        %v3171 = vpop.f32.mrb[0].mxu0
        %3172 = vmatprep.mubr.f32.mxu0 0.0
        %3173 = vmatmul.mubr.f32.gmra.mrb[0].mxu0 %v2973
        %v3174 = vpop.f32.mrb[0].mxu0
        %v3175 = vadd.f32 %v2909, %v3174
        %v3176 = vpop.f32.mrb[0].mxu0
        %3177 = vmatprep.mubr.f32.mxu0 0.0
        %3178 = vmatmul.mubr.f32.gmra.mrb[0].mxu0 %v2976
        %v3179 = vpop.f32.mrb[0].mxu0
        %v3180 = vadd.f32 %v2909, %v3179
        %v3181 = vpop.f32.mrb[0].mxu0
        %3182 = vmatprep.mubr.f32.mxu0 0.0
        %3183 = vmatmul.mubr.f32.gmra.mrb[0].mxu0 %v2979
        %v3184 = vpop.f32.mrb[0].mxu0
        %v3185 = vadd.f32 %v2909, %v3184
        %v3186 = vpop.f32.mrb[0].mxu0
        %3187 = vmatprep.mubr.f32.mxu0 0.0
        %3188 = vmatmul.mubr.f32.gmra.mrb[0].mxu0 %v2982
        %v3189 = vpop.f32.mrb[0].mxu0
        %v3190 = vadd.f32 %v2909, %v3189
        %v3191 = vpop.f32.mrb[0].mxu0
        %3192 = vmatprep.mubr.f32.mxu0 0.0
        %3193 = vmatmul.mubr.f32.gmra.mrb[0].mxu0 %v2985
        %v3194 = vpop.f32.mrb[0].mxu0
        %v3195 = vadd.f32 %v2909, %v3194
        %v3196 = vpop.f32.mrb[0].mxu0
        %3197 = vmatprep.mubr.f32.mxu0 0.0
        %3198 = vmatmul.mubr.f32.gmra.mrb[0].mxu0 %v2988
        %v3199 = vpop.f32.mrb[0].mxu0
        %v3200 = vadd.f32 %v2909, %v3199
        %v3201 = vpop.f32.mrb[0].mxu0
        %3202 = vmatprep.mubr.f32.mxu0 0.0
        %3203 = vmatmul.mubr.f32.gmra.mrb[0].mxu0 %v2991
        %v3204 = vpop.f32.mrb[0].mxu0
        %v3205 = vadd.f32 %v2909, %v3204
        %v3206 = vpop.f32.mrb[0].mxu0
        %3207 = vmatprep.mubr.f32.mxu0 0.0
        %3208 = vmatmul.mubr.f32.gmra.mrb[0].mxu0 %v2994
        %v3209 = vpop.f32.mrb[0].mxu0
        %v3210 = vadd.f32 %v2909, %v3209
        %v3211 = vpop.f32.mrb[0].mxu0
        %3212 = vmatprep.mubr.f32.mxu0 0.0
        %3213 = vmatmul.mubr.f32.gmra.mrb[0].mxu0 %v2997
        %v3214 = vpop.f32.mrb[0].mxu0
        %v3215 = vadd.f32 %v2909, %v3214
        %v3216 = vpop.f32.mrb[0].mxu0
        %3217 = vmatprep.mubr.f32.mxu0 0.0
        %3218 = vmatmul.mubr.f32.gmra.mrb[0].mxu0 %v3000
        %v3219 = vpop.f32.mrb[0].mxu0
        %v3220 = vadd.f32 %v2909, %v3219
        %v3221 = vpop.f32.mrb[0].mxu0
        %3222 = vmatprep.mubr.f32.mxu0 0.0
        %3223 = vmatmul.mubr.f32.gmra.mrb[0].mxu0 %v3003
        %v3224 = vpop.f32.mrb[0].mxu0
        %v3225 = vadd.f32 %v2909, %v3224
        %v3226 = vpop.f32.mrb[0].mxu0
        %3227 = vmatprep.mubr.f32.mxu0 0.0
        %3228 = vmatmul.mubr.f32.gmra.mrb[0].mxu0 %v3006
        %v3229 = vpop.f32.mrb[0].mxu0
        %v3230 = vadd.f32 %v2909, %v3229
        %v3231 = vpop.f32.mrb[0].mxu0
        %3232 = vdwg.mxu0
        %v3233 = vld [vmem:[%s553] sm:$0xff]
        %v3234 = vld [vmem:[%s553 + $0x8] sm:$0xff]
        %v3235 = vld [vmem:[%s553 + $0x10] sm:$0xff]
        %v3236 = vld [vmem:[%s553 + $0x18] sm:$0xff]
        %v3237 = vld [vmem:[%s553 + $0x20] sm:$0xff]
        %v3238 = vld [vmem:[%s553 + $0x28] sm:$0xff]
        %v3239 = vld [vmem:[%s553 + $0x30] sm:$0xff]
        %v3240 = vld [vmem:[%s553 + $0x38] sm:$0xff]
        %v3241 = vld [vmem:[%s553 + $0x40] sm:$0xff]
        %v3242 = vld [vmem:[%s553 + $0x48] sm:$0xff]
        %v3243 = vld [vmem:[%s553 + $0x50] sm:$0xff]
        %v3244 = vld [vmem:[%s553 + $0x58] sm:$0xff]
        %v3245 = vld [vmem:[%s553 + $0x60] sm:$0xff]
        %v3246 = vld [vmem:[%s553 + $0x68] sm:$0xff]
        %v3247 = vld [vmem:[%s553 + $0x70] sm:$0xff]
        %v3248 = vld [vmem:[%s553 + $0x78] sm:$0xff]
        %v3249 = vld [vmem:[%s553 + $0x80] sm:$0xff]
        %v3250 = vld [vmem:[%s553 + $0x88] sm:$0xff]
        %v3251 = vld [vmem:[%s553 + $0x90] sm:$0xff]
        %v3252 = vld [vmem:[%s553 + $0x98] sm:$0xff]
        %v3253 = vld [vmem:[%s553 + $0xa0] sm:$0xff]
        %v3254 = vld [vmem:[%s553 + $0xa8] sm:$0xff]
        %v3255 = vld [vmem:[%s553 + $0xb0] sm:$0xff]
        %v3256 = vld [vmem:[%s553 + $0xb8] sm:$0xff]
        %v3257 = vld [vmem:[%s553 + $0xc0] sm:$0xff]
        %v3258 = vld [vmem:[%s553 + $0xc8] sm:$0xff]
        %v3259 = vld [vmem:[%s553 + $0xd0] sm:$0xff]
        %v3260 = vld [vmem:[%s553 + $0xd8] sm:$0xff]
        %v3261 = vld [vmem:[%s553 + $0xe0] sm:$0xff]
        %v3262 = vld [vmem:[%s553 + $0xe8] sm:$0xff]
        %v3263 = vld [vmem:[%s553 + $0xf0] sm:$0xff]
        %v3264 = vld [vmem:[%s553 + $0xf8] sm:$0xff]
        %3265 = vset.pattern.permute.xlu0 0
        %3266 = vperm.xlu0 %3265, %v3233
        %v3267 = vpop.permute.xlu0 %3266
        %3268 = vset.pattern.permute.xlu0 0
        %3269 = vperm.xlu0 %3268, %v3234
        %v3270 = vpop.permute.xlu0 %3269
        %3271 = vset.pattern.permute.xlu0 0
        %3272 = vperm.xlu0 %3271, %v3235
        %v3273 = vpop.permute.xlu0 %3272
        %3274 = vset.pattern.permute.xlu0 0
        %3275 = vperm.xlu0 %3274, %v3236
        %v3276 = vpop.permute.xlu0 %3275
        %3277 = vset.pattern.permute.xlu0 0
        %3278 = vperm.xlu0 %3277, %v3237
        %v3279 = vpop.permute.xlu0 %3278
        %3280 = vset.pattern.permute.xlu0 0
        %3281 = vperm.xlu0 %3280, %v3238
        %v3282 = vpop.permute.xlu0 %3281
        %3283 = vset.pattern.permute.xlu0 0
        %3284 = vperm.xlu0 %3283, %v3239
        %v3285 = vpop.permute.xlu0 %3284
        %3286 = vset.pattern.permute.xlu0 0
        %3287 = vperm.xlu0 %3286, %v3240
        %v3288 = vpop.permute.xlu0 %3287
        %3289 = vset.pattern.permute.xlu0 0
        %3290 = vperm.xlu0 %3289, %v3241
        %v3291 = vpop.permute.xlu0 %3290
        %3292 = vset.pattern.permute.xlu0 0
        %3293 = vperm.xlu0 %3292, %v3242
        %v3294 = vpop.permute.xlu0 %3293
        %3295 = vset.pattern.permute.xlu0 0
        %3296 = vperm.xlu0 %3295, %v3243
        %v3297 = vpop.permute.xlu0 %3296
        %3298 = vset.pattern.permute.xlu0 0
        %3299 = vperm.xlu0 %3298, %v3244
        %v3300 = vpop.permute.xlu0 %3299
        %3301 = vset.pattern.permute.xlu0 0
        %3302 = vperm.xlu0 %3301, %v3245
        %v3303 = vpop.permute.xlu0 %3302
        %3304 = vset.pattern.permute.xlu0 0
        %3305 = vperm.xlu0 %3304, %v3246
        %v3306 = vpop.permute.xlu0 %3305
        %3307 = vset.pattern.permute.xlu0 0
        %3308 = vperm.xlu0 %3307, %v3247
        %v3309 = vpop.permute.xlu0 %3308
        %3310 = vset.pattern.permute.xlu0 0
        %3311 = vperm.xlu0 %3310, %v3248
        %v3312 = vpop.permute.xlu0 %3311
        %3313 = vset.pattern.permute.xlu0 0
        %3314 = vperm.xlu0 %3313, %v3249
        %v3315 = vpop.permute.xlu0 %3314
        %3316 = vset.pattern.permute.xlu0 0
        %3317 = vperm.xlu0 %3316, %v3250
        %v3318 = vpop.permute.xlu0 %3317
        %3319 = vset.pattern.permute.xlu0 0
        %3320 = vperm.xlu0 %3319, %v3251
        %v3321 = vpop.permute.xlu0 %3320
        %3322 = vset.pattern.permute.xlu0 0
        %3323 = vperm.xlu0 %3322, %v3252
        %v3324 = vpop.permute.xlu0 %3323
        %3325 = vset.pattern.permute.xlu0 0
        %3326 = vperm.xlu0 %3325, %v3253
        %v3327 = vpop.permute.xlu0 %3326
        %3328 = vset.pattern.permute.xlu0 0
        %3329 = vperm.xlu0 %3328, %v3254
        %v3330 = vpop.permute.xlu0 %3329
        %3331 = vset.pattern.permute.xlu0 0
        %3332 = vperm.xlu0 %3331, %v3255
        %v3333 = vpop.permute.xlu0 %3332
        %3334 = vset.pattern.permute.xlu0 0
        %3335 = vperm.xlu0 %3334, %v3256
        %v3336 = vpop.permute.xlu0 %3335
        %3337 = vset.pattern.permute.xlu0 0
        %3338 = vperm.xlu0 %3337, %v3257
        %v3339 = vpop.permute.xlu0 %3338
        %3340 = vset.pattern.permute.xlu0 0
        %3341 = vperm.xlu0 %3340, %v3258
        %v3342 = vpop.permute.xlu0 %3341
        %3343 = vset.pattern.permute.xlu0 0
        %3344 = vperm.xlu0 %3343, %v3259
        %v3345 = vpop.permute.xlu0 %3344
        %3346 = vset.pattern.permute.xlu0 0
        %3347 = vperm.xlu0 %3346, %v3260
        %v3348 = vpop.permute.xlu0 %3347
        %3349 = vset.pattern.permute.xlu0 0
        %3350 = vperm.xlu0 %3349, %v3261
        %v3351 = vpop.permute.xlu0 %3350
        %3352 = vset.pattern.permute.xlu0 0
        %3353 = vperm.xlu0 %3352, %v3262
        %v3354 = vpop.permute.xlu0 %3353
        %3355 = vset.pattern.permute.xlu0 0
        %3356 = vperm.xlu0 %3355, %v3263
        %v3357 = vpop.permute.xlu0 %3356
        %3358 = vset.pattern.permute.xlu0 0
        %3359 = vperm.xlu0 %3358, %v3264
        %v3360 = vpop.permute.xlu0 %3359
        %vm3361 = vcmp.eq.s32.totalorder %v563, %v3267
        %vm3362 = vcmp.eq.s32.totalorder %v563, %v3270
        %vm3363 = vcmp.eq.s32.totalorder %v563, %v3273
        %vm3364 = vcmp.eq.s32.totalorder %v563, %v3276
        %vm3365 = vcmp.eq.s32.totalorder %v563, %v3279
        %vm3366 = vcmp.eq.s32.totalorder %v563, %v3282
        %vm3367 = vcmp.eq.s32.totalorder %v563, %v3285
        %vm3368 = vcmp.eq.s32.totalorder %v563, %v3288
        %vm3369 = vcmp.eq.s32.totalorder %v563, %v3291
        %vm3370 = vcmp.eq.s32.totalorder %v563, %v3294
        %vm3371 = vcmp.eq.s32.totalorder %v563, %v3297
        %vm3372 = vcmp.eq.s32.totalorder %v563, %v3300
        %vm3373 = vcmp.eq.s32.totalorder %v563, %v3303
        %vm3374 = vcmp.eq.s32.totalorder %v563, %v3306
        %vm3375 = vcmp.eq.s32.totalorder %v563, %v3309
        %vm3376 = vcmp.eq.s32.totalorder %v563, %v3312
        %vm3377 = vcmp.eq.s32.totalorder %v563, %v3315
        %vm3378 = vcmp.eq.s32.totalorder %v563, %v3318
        %vm3379 = vcmp.eq.s32.totalorder %v563, %v3321
        %vm3380 = vcmp.eq.s32.totalorder %v563, %v3324
        %vm3381 = vcmp.eq.s32.totalorder %v563, %v3327
        %vm3382 = vcmp.eq.s32.totalorder %v563, %v3330
        %vm3383 = vcmp.eq.s32.totalorder %v563, %v3333
        %vm3384 = vcmp.eq.s32.totalorder %v563, %v3336
        %vm3385 = vcmp.eq.s32.totalorder %v563, %v3339
        %vm3386 = vcmp.eq.s32.totalorder %v563, %v3342
        %vm3387 = vcmp.eq.s32.totalorder %v563, %v3345
        %vm3388 = vcmp.eq.s32.totalorder %v563, %v3348
        %vm3389 = vcmp.eq.s32.totalorder %v563, %v3351
        %vm3390 = vcmp.eq.s32.totalorder %v563, %v3354
        %vm3391 = vcmp.eq.s32.totalorder %v563, %v3357
        %vm3392 = vcmp.eq.s32.totalorder %v563, %v3360
        %v3393 = vsel %vm3361, 1, 0
        %v3394 = vsel %vm3362, 1, 0
        %v3395 = vsel %vm3363, 1, 0
        %v3396 = vsel %vm3364, 1, 0
        %v3397 = vsel %vm3365, 1, 0
        %v3398 = vsel %vm3366, 1, 0
        %v3399 = vsel %vm3367, 1, 0
        %v3400 = vsel %vm3368, 1, 0
        %v3401 = vsel %vm3369, 1, 0
        %v3402 = vsel %vm3370, 1, 0
        %v3403 = vsel %vm3371, 1, 0
        %v3404 = vsel %vm3372, 1, 0
        %v3405 = vsel %vm3373, 1, 0
        %v3406 = vsel %vm3374, 1, 0
        %v3407 = vsel %vm3375, 1, 0
        %v3408 = vsel %vm3376, 1, 0
        %v3409 = vsel %vm3377, 1, 0
        %v3410 = vsel %vm3378, 1, 0
        %v3411 = vsel %vm3379, 1, 0
        %v3412 = vsel %vm3380, 1, 0
        %v3413 = vsel %vm3381, 1, 0
        %v3414 = vsel %vm3382, 1, 0
        %v3415 = vsel %vm3383, 1, 0
        %v3416 = vsel %vm3384, 1, 0
        %v3417 = vsel %vm3385, 1, 0
        %v3418 = vsel %vm3386, 1, 0
        %v3419 = vsel %vm3387, 1, 0
        %v3420 = vsel %vm3388, 1, 0
        %v3421 = vsel %vm3389, 1, 0
        %v3422 = vsel %vm3390, 1, 0
        %v3423 = vsel %vm3391, 1, 0
        %v3424 = vsel %vm3392, 1, 0
        %v3425 = vcvt.s32.f32 %v3393
        %v3426 = vcvt.s32.f32 %v3394
        %v3427 = vcvt.s32.f32 %v3395
        %v3428 = vcvt.s32.f32 %v3396
        %v3429 = vcvt.s32.f32 %v3397
        %v3430 = vcvt.s32.f32 %v3398
        %v3431 = vcvt.s32.f32 %v3399
        %v3432 = vcvt.s32.f32 %v3400
        %v3433 = vcvt.s32.f32 %v3401
        %v3434 = vcvt.s32.f32 %v3402
        %v3435 = vcvt.s32.f32 %v3403
        %v3436 = vcvt.s32.f32 %v3404
        %v3437 = vcvt.s32.f32 %v3405
        %v3438 = vcvt.s32.f32 %v3406
        %v3439 = vcvt.s32.f32 %v3407
        %v3440 = vcvt.s32.f32 %v3408
        %v3441 = vcvt.s32.f32 %v3409
        %v3442 = vcvt.s32.f32 %v3410
        %v3443 = vcvt.s32.f32 %v3411
        %v3444 = vcvt.s32.f32 %v3412
        %v3445 = vcvt.s32.f32 %v3413
        %v3446 = vcvt.s32.f32 %v3414
        %v3447 = vcvt.s32.f32 %v3415
        %v3448 = vcvt.s32.f32 %v3416
        %v3449 = vcvt.s32.f32 %v3417
        %v3450 = vcvt.s32.f32 %v3418
        %v3451 = vcvt.s32.f32 %v3419
        %v3452 = vcvt.s32.f32 %v3420
        %v3453 = vcvt.s32.f32 %v3421
        %v3454 = vcvt.s32.f32 %v3422
        %v3455 = vcvt.s32.f32 %v3423
        %v3456 = vcvt.s32.f32 %v3424
        %v3457 = vld [vmem:[%s14] sm:$0xff]
        %v3458 = vld [vmem:[%s14 + $0x8] sm:$0xff]
        %v3459 = vld [vmem:[%s14 + $0x10] sm:$0xff]
        %v3460 = vld [vmem:[%s14 + $0x18] sm:$0xff]
        %v3461 = vld [vmem:[%s14 + $0x20] sm:$0xff]
        %v3462 = vld [vmem:[%s14 + $0x28] sm:$0xff]
        %v3463 = vld [vmem:[%s14 + $0x30] sm:$0xff]
        %v3464 = vld [vmem:[%s14 + $0x38] sm:$0xff]
        %v3465 = vld [vmem:[%s14 + $0x40] sm:$0xff]
        %v3466 = vld [vmem:[%s14 + $0x48] sm:$0xff]
        %v3467 = vld [vmem:[%s14 + $0x50] sm:$0xff]
        %v3468 = vld [vmem:[%s14 + $0x58] sm:$0xff]
        %v3469 = vld [vmem:[%s14 + $0x60] sm:$0xff]
        %v3470 = vld [vmem:[%s14 + $0x68] sm:$0xff]
        %v3471 = vld [vmem:[%s14 + $0x70] sm:$0xff]
        %v3472 = vld [vmem:[%s14 + $0x78] sm:$0xff]
        %3473 = vmatprep.subr.mxu0 0.0
        %3474 = vmatpush1.msra.mxu0 %v3457
        %3475 = vmatprep.subr.mxu0 0.0
        %3476 = vmatpush1.msra.mxu0 %v3458
        %3477 = vmatprep.subr.mxu0 0.0
        %3478 = vmatpush1.msra.mxu0 %v3459
        %3479 = vmatprep.subr.mxu0 0.0
        %3480 = vmatpush1.msra.mxu0 %v3460
        %3481 = vmatprep.subr.mxu0 0.0
        %3482 = vmatpush1.msra.mxu0 %v3461
        %3483 = vmatprep.subr.mxu0 0.0
        %3484 = vmatpush1.msra.mxu0 %v3462
        %3485 = vmatprep.subr.mxu0 0.0
        %3486 = vmatpush1.msra.mxu0 %v3463
        %3487 = vmatprep.subr.mxu0 0.0
        %3488 = vmatpush1.msra.mxu0 %v3464
        %3489 = vmatprep.subr.mxu0 0.0
        %3490 = vmatpush1.msra.mxu0 %v3465
        %3491 = vmatprep.subr.mxu0 0.0
        %3492 = vmatpush1.msra.mxu0 %v3466
        %3493 = vmatprep.subr.mxu0 0.0
        %3494 = vmatpush1.msra.mxu0 %v3467
        %3495 = vmatprep.subr.mxu0 0.0
        %3496 = vmatpush1.msra.mxu0 %v3468
        %3497 = vmatprep.subr.mxu0 0.0
        %3498 = vmatpush1.msra.mxu0 %v3469
        %3499 = vmatprep.subr.mxu0 0.0
        %3500 = vmatpush1.msra.mxu0 %v3470
        %3501 = vmatprep.subr.mxu0 0.0
        %3502 = vmatpush1.msra.mxu0 %v3471
        %3503 = vmatprep.subr.mxu0 0.0
        %3504 = vmatpush1.msra.mxu0 %v3472
        %3505 = vmatprep.subr.mxu0 0.0
        %3506 = vmatpush1.msra.mxu0 0.0
        %3507 = vmatprep.subr.mxu0 0.0
        %3508 = vmatpush1.msra.mxu0 0.0
        %3509 = vmatprep.subr.mxu0 0.0
        %3510 = vmatpush1.msra.mxu0 0.0
        %3511 = vmatprep.subr.mxu0 0.0
        %3512 = vmatpush1.msra.mxu0 0.0
        %3513 = vmatprep.subr.mxu0 0.0
        %3514 = vmatpush1.msra.mxu0 0.0
        %3515 = vmatprep.subr.mxu0 0.0
        %3516 = vmatpush1.msra.mxu0 0.0
        %3517 = vmatprep.subr.mxu0 0.0
        %3518 = vmatpush1.msra.mxu0 0.0
        %3519 = vmatprep.subr.mxu0 0.0
        %3520 = vmatpush1.msra.mxu0 0.0
        %3521 = vmatprep.subr.mxu0 0.0
        %3522 = vmatpush1.msra.mxu0 0.0
        %3523 = vmatprep.subr.mxu0 0.0
        %3524 = vmatpush1.msra.mxu0 0.0
        %3525 = vmatprep.subr.mxu0 0.0
        %3526 = vmatpush1.msra.mxu0 0.0
        %3527 = vmatprep.subr.mxu0 0.0
        %3528 = vmatpush1.msra.mxu0 0.0
        %3529 = vmatprep.subr.mxu0 0.0
        %3530 = vmatpush1.msra.mxu0 0.0
        %3531 = vmatprep.subr.mxu0 0.0
        %3532 = vmatpush1.msra.mxu0 0.0
        %3533 = vmatprep.subr.mxu0 0.0
        %3534 = vmatpush1.msra.mxu0 0.0
        %3535 = vmatprep.subr.mxu0 0.0
        %3536 = vmatpush1.msra.mxu0 0.0
        %3537 = vmatprep.mubr.f32.mxu0 0.0
        %3538 = vmatmul.mubr.f32.gmra.mrb[0].mxu0 %v3425
        %v3539 = vpop.f32.mrb[0].mxu0
        %v3540 = vadd.f32 0.0, %v3539
        %v3541 = vpop.f32.mrb[0].mxu0
        %3542 = vmatprep.mubr.f32.mxu0 0.0
        %3543 = vmatmul.mubr.f32.gmra.mrb[0].mxu0 %v3426
        %v3544 = vpop.f32.mrb[0].mxu0
        %v3545 = vadd.f32 0.0, %v3544
        %v3546 = vpop.f32.mrb[0].mxu0
        %3547 = vmatprep.mubr.f32.mxu0 0.0
        %3548 = vmatmul.mubr.f32.gmra.mrb[0].mxu0 %v3427
        %v3549 = vpop.f32.mrb[0].mxu0
        %v3550 = vadd.f32 0.0, %v3549
        %v3551 = vpop.f32.mrb[0].mxu0
        %3552 = vmatprep.mubr.f32.mxu0 0.0
        %3553 = vmatmul.mubr.f32.gmra.mrb[0].mxu0 %v3428
        %v3554 = vpop.f32.mrb[0].mxu0
        %v3555 = vadd.f32 0.0, %v3554
        %v3556 = vpop.f32.mrb[0].mxu0
        %3557 = vmatprep.mubr.f32.mxu0 0.0
        %3558 = vmatmul.mubr.f32.gmra.mrb[0].mxu0 %v3429
        %v3559 = vpop.f32.mrb[0].mxu0
        %v3560 = vadd.f32 0.0, %v3559
        %v3561 = vpop.f32.mrb[0].mxu0
        %3562 = vmatprep.mubr.f32.mxu0 0.0
        %3563 = vmatmul.mubr.f32.gmra.mrb[0].mxu0 %v3430
        %v3564 = vpop.f32.mrb[0].mxu0
        %v3565 = vadd.f32 0.0, %v3564
        %v3566 = vpop.f32.mrb[0].mxu0
        %3567 = vmatprep.mubr.f32.mxu0 0.0
        %3568 = vmatmul.mubr.f32.gmra.mrb[0].mxu0 %v3431
        %v3569 = vpop.f32.mrb[0].mxu0
        %v3570 = vadd.f32 0.0, %v3569
        %v3571 = vpop.f32.mrb[0].mxu0
        %3572 = vmatprep.mubr.f32.mxu0 0.0
        %3573 = vmatmul.mubr.f32.gmra.mrb[0].mxu0 %v3432
        %v3574 = vpop.f32.mrb[0].mxu0
        %v3575 = vadd.f32 0.0, %v3574
        %v3576 = vpop.f32.mrb[0].mxu0
        %3577 = vmatprep.mubr.f32.mxu0 0.0
        %3578 = vmatmul.mubr.f32.gmra.mrb[0].mxu0 %v3433
        %v3579 = vpop.f32.mrb[0].mxu0
        %v3580 = vadd.f32 0.0, %v3579
        %v3581 = vpop.f32.mrb[0].mxu0
        %3582 = vmatprep.mubr.f32.mxu0 0.0
        %3583 = vmatmul.mubr.f32.gmra.mrb[0].mxu0 %v3434
        %v3584 = vpop.f32.mrb[0].mxu0
        %v3585 = vadd.f32 0.0, %v3584
        %v3586 = vpop.f32.mrb[0].mxu0
        %3587 = vmatprep.mubr.f32.mxu0 0.0
        %3588 = vmatmul.mubr.f32.gmra.mrb[0].mxu0 %v3435
        %v3589 = vpop.f32.mrb[0].mxu0
        %v3590 = vadd.f32 0.0, %v3589
        %v3591 = vpop.f32.mrb[0].mxu0
        %3592 = vmatprep.mubr.f32.mxu0 0.0
        %3593 = vmatmul.mubr.f32.gmra.mrb[0].mxu0 %v3436
        %v3594 = vpop.f32.mrb[0].mxu0
        %v3595 = vadd.f32 0.0, %v3594
        %v3596 = vpop.f32.mrb[0].mxu0
        %3597 = vmatprep.mubr.f32.mxu0 0.0
        %3598 = vmatmul.mubr.f32.gmra.mrb[0].mxu0 %v3437
        %v3599 = vpop.f32.mrb[0].mxu0
        %v3600 = vadd.f32 0.0, %v3599
        %v3601 = vpop.f32.mrb[0].mxu0
        %3602 = vmatprep.mubr.f32.mxu0 0.0
        %3603 = vmatmul.mubr.f32.gmra.mrb[0].mxu0 %v3438
        %v3604 = vpop.f32.mrb[0].mxu0
        %v3605 = vadd.f32 0.0, %v3604
        %v3606 = vpop.f32.mrb[0].mxu0
        %3607 = vmatprep.mubr.f32.mxu0 0.0
        %3608 = vmatmul.mubr.f32.gmra.mrb[0].mxu0 %v3439
        %v3609 = vpop.f32.mrb[0].mxu0
        %v3610 = vadd.f32 0.0, %v3609
        %v3611 = vpop.f32.mrb[0].mxu0
        %3612 = vmatprep.mubr.f32.mxu0 0.0
        %3613 = vmatmul.mubr.f32.gmra.mrb[0].mxu0 %v3440
        %v3614 = vpop.f32.mrb[0].mxu0
        %v3615 = vadd.f32 0.0, %v3614
        %v3616 = vpop.f32.mrb[0].mxu0
        %3617 = vmatprep.mubr.f32.mxu0 0.0
        %3618 = vmatmul.mubr.f32.gmra.mrb[0].mxu0 %v3441
        %v3619 = vpop.f32.mrb[0].mxu0
        %v3620 = vadd.f32 0.0, %v3619
        %v3621 = vpop.f32.mrb[0].mxu0
        %3622 = vmatprep.mubr.f32.mxu0 0.0
        %3623 = vmatmul.mubr.f32.gmra.mrb[0].mxu0 %v3442
        %v3624 = vpop.f32.mrb[0].mxu0
        %v3625 = vadd.f32 0.0, %v3624
        %v3626 = vpop.f32.mrb[0].mxu0
        %3627 = vmatprep.mubr.f32.mxu0 0.0
        %3628 = vmatmul.mubr.f32.gmra.mrb[0].mxu0 %v3443
        %v3629 = vpop.f32.mrb[0].mxu0
        %v3630 = vadd.f32 0.0, %v3629
        %v3631 = vpop.f32.mrb[0].mxu0
        %3632 = vmatprep.mubr.f32.mxu0 0.0
        %3633 = vmatmul.mubr.f32.gmra.mrb[0].mxu0 %v3444
        %v3634 = vpop.f32.mrb[0].mxu0
        %v3635 = vadd.f32 0.0, %v3634
        %v3636 = vpop.f32.mrb[0].mxu0
        %3637 = vmatprep.mubr.f32.mxu0 0.0
        %3638 = vmatmul.mubr.f32.gmra.mrb[0].mxu0 %v3445
        %v3639 = vpop.f32.mrb[0].mxu0
        %v3640 = vadd.f32 0.0, %v3639
        %v3641 = vpop.f32.mrb[0].mxu0
        %3642 = vmatprep.mubr.f32.mxu0 0.0
        %3643 = vmatmul.mubr.f32.gmra.mrb[0].mxu0 %v3446
        %v3644 = vpop.f32.mrb[0].mxu0
        %v3645 = vadd.f32 0.0, %v3644
        %v3646 = vpop.f32.mrb[0].mxu0
        %3647 = vmatprep.mubr.f32.mxu0 0.0
        %3648 = vmatmul.mubr.f32.gmra.mrb[0].mxu0 %v3447
        %v3649 = vpop.f32.mrb[0].mxu0
        %v3650 = vadd.f32 0.0, %v3649
        %v3651 = vpop.f32.mrb[0].mxu0
        %3652 = vmatprep.mubr.f32.mxu0 0.0
        %3653 = vmatmul.mubr.f32.gmra.mrb[0].mxu0 %v3448
        %v3654 = vpop.f32.mrb[0].mxu0
        %v3655 = vadd.f32 0.0, %v3654
        %v3656 = vpop.f32.mrb[0].mxu0
        %3657 = vmatprep.mubr.f32.mxu0 0.0
        %3658 = vmatmul.mubr.f32.gmra.mrb[0].mxu0 %v3449
        %v3659 = vpop.f32.mrb[0].mxu0
        %v3660 = vadd.f32 0.0, %v3659
        %v3661 = vpop.f32.mrb[0].mxu0
        %3662 = vmatprep.mubr.f32.mxu0 0.0
        %3663 = vmatmul.mubr.f32.gmra.mrb[0].mxu0 %v3450
        %v3664 = vpop.f32.mrb[0].mxu0
        %v3665 = vadd.f32 0.0, %v3664
        %v3666 = vpop.f32.mrb[0].mxu0
        %3667 = vmatprep.mubr.f32.mxu0 0.0
        %3668 = vmatmul.mubr.f32.gmra.mrb[0].mxu0 %v3451
        %v3669 = vpop.f32.mrb[0].mxu0
        %v3670 = vadd.f32 0.0, %v3669
        %v3671 = vpop.f32.mrb[0].mxu0
        %3672 = vmatprep.mubr.f32.mxu0 0.0
        %3673 = vmatmul.mubr.f32.gmra.mrb[0].mxu0 %v3452
        %v3674 = vpop.f32.mrb[0].mxu0
        %v3675 = vadd.f32 0.0, %v3674
        %v3676 = vpop.f32.mrb[0].mxu0
        %3677 = vmatprep.mubr.f32.mxu0 0.0
        %3678 = vmatmul.mubr.f32.gmra.mrb[0].mxu0 %v3453
        %v3679 = vpop.f32.mrb[0].mxu0
        %v3680 = vadd.f32 0.0, %v3679
        %v3681 = vpop.f32.mrb[0].mxu0
        %3682 = vmatprep.mubr.f32.mxu0 0.0
        %3683 = vmatmul.mubr.f32.gmra.mrb[0].mxu0 %v3454
        %v3684 = vpop.f32.mrb[0].mxu0
        %v3685 = vadd.f32 0.0, %v3684
        %v3686 = vpop.f32.mrb[0].mxu0
        %3687 = vmatprep.mubr.f32.mxu0 0.0
        %3688 = vmatmul.mubr.f32.gmra.mrb[0].mxu0 %v3455
        %v3689 = vpop.f32.mrb[0].mxu0
        %v3690 = vadd.f32 0.0, %v3689
        %v3691 = vpop.f32.mrb[0].mxu0
        %3692 = vmatprep.mubr.f32.mxu0 0.0
        %3693 = vmatmul.mubr.f32.gmra.mrb[0].mxu0 %v3456
        %v3694 = vpop.f32.mrb[0].mxu0
        %v3695 = vadd.f32 0.0, %v3694
        %v3696 = vpop.f32.mrb[0].mxu0
        %3697 = vdwg.mxu0
        %v3698 = vadd.f32 %v3075, %v3540
        %v3699 = vadd.f32 %v3080, %v3545
        %v3700 = vadd.f32 %v3085, %v3550
        %v3701 = vadd.f32 %v3090, %v3555
        %v3702 = vadd.f32 %v3095, %v3560
        %v3703 = vadd.f32 %v3100, %v3565
        %v3704 = vadd.f32 %v3105, %v3570
        %v3705 = vadd.f32 %v3110, %v3575
        %v3706 = vadd.f32 %v3115, %v3580
        %v3707 = vadd.f32 %v3120, %v3585
        %v3708 = vadd.f32 %v3125, %v3590
        %v3709 = vadd.f32 %v3130, %v3595
        %v3710 = vadd.f32 %v3135, %v3600
        %v3711 = vadd.f32 %v3140, %v3605
        %v3712 = vadd.f32 %v3145, %v3610
        %v3713 = vadd.f32 %v3150, %v3615
        %v3714 = vadd.f32 %v3155, %v3620
        %v3715 = vadd.f32 %v3160, %v3625
        %v3716 = vadd.f32 %v3165, %v3630
        %v3717 = vadd.f32 %v3170, %v3635
        %v3718 = vadd.f32 %v3175, %v3640
        %v3719 = vadd.f32 %v3180, %v3645
        %v3720 = vadd.f32 %v3185, %v3650
        %v3721 = vadd.f32 %v3190, %v3655
        %v3722 = vadd.f32 %v3195, %v3660
        %v3723 = vadd.f32 %v3200, %v3665
        %v3724 = vadd.f32 %v3205, %v3670
        %v3725 = vadd.f32 %v3210, %v3675
        %v3726 = vadd.f32 %v3215, %v3680
        %v3727 = vadd.f32 %v3220, %v3685
        %v3728 = vadd.f32 %v3225, %v3690
        %v3729 = vadd.f32 %v3230, %v3695
        %3730 = vst [vmem:[%s536] sm:$0xff] %v3698
        %3731 = vst [vmem:[%s536 + $0x8] sm:$0xff] %v3699
        %3732 = vst [vmem:[%s536 + $0x10] sm:$0xff] %v3700
        %3733 = vst [vmem:[%s536 + $0x18] sm:$0xff] %v3701
        %3734 = vst [vmem:[%s536 + $0x20] sm:$0xff] %v3702
        %3735 = vst [vmem:[%s536 + $0x28] sm:$0xff] %v3703
        %3736 = vst [vmem:[%s536 + $0x30] sm:$0xff] %v3704
        %3737 = vst [vmem:[%s536 + $0x38] sm:$0xff] %v3705
        %3738 = vst [vmem:[%s536 + $0x40] sm:$0xff] %v3706
        %3739 = vst [vmem:[%s536 + $0x48] sm:$0xff] %v3707
        %3740 = vst [vmem:[%s536 + $0x50] sm:$0xff] %v3708
        %3741 = vst [vmem:[%s536 + $0x58] sm:$0xff] %v3709
        %3742 = vst [vmem:[%s536 + $0x60] sm:$0xff] %v3710
        %3743 = vst [vmem:[%s536 + $0x68] sm:$0xff] %v3711
        %3744 = vst [vmem:[%s536 + $0x70] sm:$0xff] %v3712
        %3745 = vst [vmem:[%s536 + $0x78] sm:$0xff] %v3713
        %3746 = vst [vmem:[%s536 + $0x80] sm:$0xff] %v3714
        %3747 = vst [vmem:[%s536 + $0x88] sm:$0xff] %v3715
        %3748 = vst [vmem:[%s536 + $0x90] sm:$0xff] %v3716
        %3749 = vst [vmem:[%s536 + $0x98] sm:$0xff] %v3717
        %3750 = vst [vmem:[%s536 + $0xa0] sm:$0xff] %v3718
        %3751 = vst [vmem:[%s536 + $0xa8] sm:$0xff] %v3719
        %3752 = vst [vmem:[%s536 + $0xb0] sm:$0xff] %v3720
        %3753 = vst [vmem:[%s536 + $0xb8] sm:$0xff] %v3721
        %3754 = vst [vmem:[%s536 + $0xc0] sm:$0xff] %v3722
        %3755 = vst [vmem:[%s536 + $0xc8] sm:$0xff] %v3723
        %3756 = vst [vmem:[%s536 + $0xd0] sm:$0xff] %v3724
        %3757 = vst [vmem:[%s536 + $0xd8] sm:$0xff] %v3725
        %3758 = vst [vmem:[%s536 + $0xe0] sm:$0xff] %v3726
        %3759 = vst [vmem:[%s536 + $0xe8] sm:$0xff] %v3727
        %3760 = vst [vmem:[%s536 + $0xf0] sm:$0xff] %v3728
        %3761 = vst [vmem:[%s536 + $0xf8] sm:$0xff] %v3729
        %s3762 = sand.u32 %s372, 1
        %s3763 = scalar_lea.sflag [#allocation3], %s3762
        %s3764 = sand.u32 %s372, 1
        %s3765 = smul.addr %s3764, 256
        %s3766 = scalar_lea.vmem [#allocation2], %s3765
        // Predicated region
        $region81: #{tpu_custom_call.1} parent=79 // pred_check
          %p3767 = pneg %p382
        $region82: #{tpu_custom_call.1} parent=79 // pred_check_branch
          %3769 = sbr.rel (%p3767) target = $region84
        $region83: #{tpu_custom_call.1} parent=79 // pred_region
          %s3770 = smul.u32 32, %s29
          %s3772 = ssub.s32 4096, 4096
          %3773 = vsyncadd %s3763, %s3772
          %s3774 = smul.addr %s3770, 128
          %s3775 = scalar_lea.hbm %s15, %s3774
          %s3776 = sshll.u32 %s3766, 4
          %s3777 = int_to_ptr.vmem [resolvable:$true] %s3776
          %3782 = dma.vmem_to_hbm [thread:$0]  %s3777, 4096, %s3775, %s3763, 128, 128, 8
        $region84: #{tpu_custom_call.1} parent=79 // pred_fallthru
          _
      $region80: #{tpu_custom_call.1} parent=5 // pred_fallthru
        _
      %p3783 = scmp.le.s32.totalorder 2, %s24
      // Predicated region
      $region85: #{tpu_custom_call.1} parent=5 // pred_check
        %p3784 = pneg %p3783
      $region86: #{tpu_custom_call.1} parent=5 // pred_check_branch
        %3786 = sbr.rel (%p3784) target = $region88
      $region87: #{tpu_custom_call.1} parent=5 // pred_region
        %s3787 = ssub.s32 %s24, 2
        // Predicated region
        $region89: #{tpu_custom_call.1} parent=87 // pred_check
          %p3788 = pneg %p388
        $region90: #{tpu_custom_call.1} parent=87 // pred_check_branch
          %3790 = sbr.rel (%p3788) target = $region92
        $region91: #{tpu_custom_call.1} parent=87 // pred_region
          %s3791 = sand.u32 %s373, 1
          %s3792 = scalar_lea.sflag [#allocation3], %s3791
          %s3793 = sand.u32 %s373, 1
          %s3794 = smul.addr %s3793, 256
          %s3795 = scalar_lea.vmem [#allocation2], %s3794
          %3796 = dma.done %s3792, 4096
        $region92: #{tpu_custom_call.1} parent=87 // pred_fallthru
          _
      $region88: #{tpu_custom_call.1} parent=5 // pred_fallthru
        _
    $region6: #{tpu_custom_call.1} parent=1 // loop_footer
      %s28 = sadd.s32 1, %s24
    $region7: #{tpu_custom_call.1} parent=1 // loop_footer_branch
      %23 = sbr.rel target = $region3
    $region8: #{tpu_custom_call.1} parent=1 // loop_exit
      _
    %3797 = vsyncpa [#allocation3], 1
    %s3798 = scalar_lea.sflag [#allocation3], 1
    %3799 = vsyncpa %s3798, 1

</llo_original>
